<compile_context>
chip_gen: v6e
topology: v6e:2x2x1
jax: 0.10.0
libtpu: 0.0.40
codegen_flags: <defaults>
</compile_context>

<pallas_src>
import functools
import math

import jax
import jax.numpy as jnp
import numpy as np
from jax.experimental import pallas as pl
from jax.experimental.pallas import tpu as pltpu


def _vmem_limit_bytes() -> int:
    """Per-generation VMEM budget: leave headroom for compiler scratch/IO buffers."""
    mib = 1024 * 1024
    cap = 128 * mib
    try:
        cap = int(pltpu.get_tpu_info().vmem_capacity_bytes)
    except Exception:
        pass
    # v7x (64 MiB) -> 40 MiB; v5e/v6e (128 MiB) -> 96 MiB.
    return max(32 * mib, min(3 * cap // 4, cap - 24 * mib))


def _pick_seq_tile(n: int, target: int) -> int:
    """Largest multiple of 128 that divides n and is <= target; else the full n."""
    cands = [t for t in range(128, n + 1, 128) if n % t == 0 and t <= max(target, 128)]
    return max(cands) if cands else n


def _resident(shape):
    """BlockSpec keeping a small parameter fully VMEM-resident across any grid."""
    nd = len(shape)
    return pl.BlockSpec(shape, lambda *_, _nd=nd: (0,) * _nd)


# ---------------------------------------------------------------------------
# Kernel 1: q/k/v projections + per-head attention + merge conv + cat-conv1
#           + fused BatchNorm partial statistics.  Grid over batch.
# ---------------------------------------------------------------------------
def _attn_conv1_kernel(x_ref, s_ref,
                       wq_ref, bq_ref, wkT_ref, bkT_ref, wv_ref, bv_ref,
                       wm_ref, bm_ref, w1x_ref, w1m_ref, b1_ref,
                       h1_ref, psum_ref, psumsq_ref,
                       *, num_heads: int, head_dim: int, inv_sqrt_dim: float):
    x_fn = x_ref[0].astype(jnp.float32)          # (F, N)      original NCW layout
    s_fm = s_ref[0].astype(jnp.float32)          # (F, M_src)

    # On-chip NCW -> channels-last transposes (XLU slot, overlaps the pipeline).
    x = x_fn.T                                   # (N, F)
    s = s_fm.T                                   # (M_src, F)

    # 1x1 Conv1d == channel matmul on the MXU.  q is pre-scaled by
    # 1/sqrt(head_dim) (identical math to scaling the scores).  K is produced
    # directly in (F, M_src) layout so per-head score matmuls are standard
    # (N,d)x(d,M) contractions (no per-head XLU transposes).
    q = (jnp.dot(x, wq_ref[...], preferred_element_type=jnp.float32)
         + bq_ref[...]) * inv_sqrt_dim                                   # (N, F)
    kT = (jnp.dot(wkT_ref[...], s_fm, preferred_element_type=jnp.float32)
          + bkT_ref[...])                                                # (F, M_src)
    v = jnp.dot(s, wv_ref[...], preferred_element_type=jnp.float32) + bv_ref[...]

    wm = wm_ref[...]                             # (F, F), head-major input rows

    # Per-head attention; merge conv accumulated per head (no concatenate).
    # Weights were permuted head-major in the wrapper so every head is a
    # contiguous slice.
    # TODO(synk): flash-tile the M_src axis for large N/M_src (v7x 64 MiB VMEM).
    message = None
    for h in range(num_heads):
        lo = h * head_dim
        qh = q[:, lo:lo + head_dim]              # (N, d)
        kTh = kT[lo:lo + head_dim, :]            # (d, M_src)
        vh = v[:, lo:lo + head_dim]              # (M_src, d)
        scores = jnp.dot(qh, kTh, preferred_element_type=jnp.float32)    # (N, M_src)
        m = jnp.max(scores, axis=-1, keepdims=True)
        e = jnp.exp(scores - m)
        denom = jnp.sum(e, axis=-1, keepdims=True)
        # Fold softmax normalization into a post-matmul scale: one (N, d) VPU
        # multiply + an EUP reciprocal instead of an (N, M_src) divide.
        o_h = (jnp.dot(e, vh, preferred_element_type=jnp.float32)
               * pl.reciprocal(denom, approx=True))                      # (N, d)
        contrib = jnp.dot(o_h, wm[lo:lo + head_dim, :],
                          preferred_element_type=jnp.float32)            # (N, F)
        message = contrib if message is None else message + contrib
    message = message + bm_ref[...]

    # cat([x, message], channel axis) @ W1 + b1 as a split matmul.
    h1 = (jnp.dot(x, w1x_ref[...], preferred_element_type=jnp.float32)
          + jnp.dot(message, w1m_ref[...], preferred_element_type=jnp.float32)
          + b1_ref[...])                                                 # (N, 2F)

    h1_ref[0] = h1
    # BatchNorm partial statistics fused into the conv1 epilogue (h1 read once).
    # NOTE: single-pass E[x^2]-E[x]^2 form; fine for normalized-scale inputs.
    psum_ref[0] = jnp.sum(h1, axis=0, keepdims=True)
    psumsq_ref[0] = jnp.sum(h1 * h1, axis=0, keepdims=True)


# ---------------------------------------------------------------------------
# Kernel 2: BatchNorm scale/shift + ReLU + final 1x1 conv.  Grid (B, N//tile).
#           Writes a transposed (F, tile) block -> output is already NCW.
# ---------------------------------------------------------------------------
def _bn_relu_conv2_kernel(h_ref, scale_ref, shift_ref, w2_ref, b2_ref, o_ref):
    h = h_ref[0].astype(jnp.float32)                                     # (tile, 2F)
    a = jnp.maximum(h * scale_ref[...] + shift_ref[...], 0.0)
    y = (jnp.dot(a, w2_ref[...], preferred_element_type=jnp.float32)
         + b2_ref[...])                                                  # (tile, F)
    o_ref[0] = y.T.astype(o_ref.dtype)                                   # (F, tile)


# ---------------------------------------------------------------------------
# Parameters (shapes match the PyTorch module; matmul convention W: (Cin, Cout))
# ---------------------------------------------------------------------------
def init_attentional_propagation_params(key, feature_dim):
    F = feature_dim

    def conv_init(k, cin, cout, zero_bias=False):
        kw, kb = jax.random.split(k)
        bound = 1.0 / np.sqrt(cin)
        w = jax.random.uniform(kw, (cin, cout), jnp.float32, -bound, bound)
        if zero_bias:
            b = jnp.zeros((1, cout), jnp.float32)   # nn.init.constant_(mlp[-1].bias, 0.0)
        else:
            b = jax.random.uniform(kb, (1, cout), jnp.float32, -bound, bound)
        return w, b

    k = jax.random.split(key, 6)
    wq, bq = conv_init(k[0], F, F)
    wk, bk = conv_init(k[1], F, F)
    wv, bv = conv_init(k[2], F, F)
    wm, bm = conv_init(k[3], F, F)
    w1, b1 = conv_init(k[4], 2 * F, 2 * F)
    w2, b2 = conv_init(k[5], 2 * F, F, zero_bias=True)
    gamma = jnp.ones((1, 2 * F), jnp.float32)               # BatchNorm1d defaults
    beta = jnp.zeros((1, 2 * F), jnp.float32)
    return dict(wq=wq, bq=bq, wk=wk, bk=bk, wv=wv, bv=bv, wm=wm, bm=bm,
                w1=w1, b1=b1, gamma=gamma, beta=beta, w2=w2, b2=b2)


# ---------------------------------------------------------------------------
# Forward wrapper
# ---------------------------------------------------------------------------
@functools.partial(jax.jit, static_argnames=("num_heads", "block_rows"))
def attentional_propagation_forward(x, source, params, *, num_heads, block_rows=None):
    """x, source: (B, F, N) float32 (PyTorch NCW).  Returns (B, F, N)."""
    B, F, N = x.shape
    _, _, M_src = source.shape
    assert F % num_heads == 0
    head_dim = F // num_heads
    F2 = 2 * F
    vmem_limit = _vmem_limit_bytes()

    # Head-major channel permutation: PyTorch .view(B, head_dim, H, N) splits
    # channel c = d*H + h; re-order to h*head_dim + d on the q/k/v output
    # channels and on the merge-conv input channels -> identical math, but
    # each head becomes a contiguous slice in the kernel.
    perm = np.arange(F).reshape(head_dim, num_heads).T.reshape(-1)
    wq = params["wq"][:, perm]; bq = params["bq"][:, perm]
    wkT = params["wk"][:, perm].T                # (F_out_headmajor, F_in)
    bkT = params["bk"][:, perm].T                # (F, 1)
    wv = params["wv"][:, perm]; bv = params["bv"][:, perm]
    wm = params["wm"][perm, :]; bm = params["bm"]
    w1x = params["w1"][:F, :]                    # rows multiplying x
    w1m = params["w1"][F:, :]                    # rows multiplying message
    b1 = params["b1"]
    w2 = params["w2"]; b2 = params["b2"]

    kernel1 = functools.partial(
        _attn_conv1_kernel, num_heads=num_heads, head_dim=head_dim,
        inv_sqrt_dim=1.0 / math.sqrt(head_dim))

    resident_args = (wq, bq, wkT, bkT, wv, bv, wm, bm, w1x, w1m, b1)
    h1, psum, psumsq = pl.pallas_call(
        kernel1,
        out_shape=(jax.ShapeDtypeStruct((B, N, F2), jnp.float32),
                   jax.ShapeDtypeStruct((B, 1, F2), jnp.float32),
                   jax.ShapeDtypeStruct((B, 1, F2), jnp.float32)),
        grid=(B,),
        in_specs=[pl.BlockSpec((1, F, N), lambda b: (b, 0, 0)),
                  pl.BlockSpec((1, F, M_src), lambda b: (b, 0, 0))]
                 + [_resident(a.shape) for a in resident_args],
        out_specs=(pl.BlockSpec((1, N, F2), lambda b: (b, 0, 0)),
                   pl.BlockSpec((1, 1, F2), lambda b: (b, 0, 0)),
                   pl.BlockSpec((1, 1, F2), lambda b: (b, 0, 0))),
        compiler_params=pltpu.CompilerParams(
            dimension_semantics=("parallel",),
            vmem_limit_bytes=vmem_limit),
    )(x, source, *resident_args)

    # Training-mode BatchNorm1d statistics over the whole (B, N) population,
    # folded into a per-channel scale/shift (tiny (1, 2F) math).
    cnt = jnp.float32(B * N)
    total = jnp.sum(psum, axis=0)                # (1, 2F)
    total_sq = jnp.sum(psumsq, axis=0)           # (1, 2F)
    mean = total / cnt
    var = jnp.maximum(total_sq / cnt - mean * mean, 0.0)    # biased variance
    bn_scale = params["gamma"] * jax.lax.rsqrt(var + 1e-5)
    bn_shift = params["beta"] - mean * bn_scale

    # Second pass: scale/shift + ReLU + final 1x1 conv, gridded directly over
    # (B, N//tile) -- no flatten, no pad copy.  The kernel writes transposed
    # (F, tile) blocks, so the result is already in NCW layout.
    if block_rows is None:
        block_rows = 2048 if vmem_limit >= 64 * 1024 * 1024 else 1024
    tn = _pick_seq_tile(N, block_rows)
    n_tiles = N // tn

    out = pl.pallas_call(
        _bn_relu_conv2_kernel,
        out_shape=jax.ShapeDtypeStruct((B, F, N), jnp.float32),
        grid=(B, n_tiles),
        in_specs=[pl.BlockSpec((1, tn, F2), lambda b, i: (b, i, 0)),
                  _resident(bn_scale.shape), _resident(bn_shift.shape),
                  _resident(w2.shape), _resident(b2.shape)],
        out_specs=pl.BlockSpec((1, F, tn), lambda b, i: (b, 0, i)),
        compiler_params=pltpu.CompilerParams(
            dimension_semantics=("parallel", "parallel"),
            vmem_limit_bytes=vmem_limit),
    )(h1, bn_scale, bn_shift, w2, b2)
    return out


# ---------------------------------------------------------------------------
# Pure-JAX reference (faithful transliteration of the PyTorch module)
# ---------------------------------------------------------------------------
def _reference_forward(x, source, params, num_heads):
    B, F, N = x.shape
    d = F // num_heads

    def conv1d(inp, w, b):   # Conv1d(k=1): out[b,o,n] = sum_i w[i,o]*inp[b,i,n] + b[o]
        return jnp.einsum("io,bin->bon", w, inp) + b.T[None]

    q = conv1d(x, params["wq"], params["bq"]).reshape(B, d, num_heads, N)
    k = conv1d(source, params["wk"], params["bk"]).reshape(B, d, num_heads, -1)
    v = conv1d(source, params["wv"], params["bv"]).reshape(B, d, num_heads, -1)
    scores = jnp.einsum("bdhn,bdhm->bhnm", q, k) / (d ** 0.5)
    prob = jax.nn.softmax(scores, axis=-1)
    msg = jnp.einsum("bhnm,bdhm->bdhn", prob, v).reshape(B, F, N)
    message = conv1d(msg, params["wm"], params["bm"])

    h = conv1d(jnp.concatenate([x, message], axis=1), params["w1"], params["b1"])
    mean = jnp.mean(h, axis=(0, 2), keepdims=True)
    var = jnp.mean((h - mean) ** 2, axis=(0, 2), keepdims=True)
    gamma = params["gamma"].reshape(1, -1, 1)
    beta = params["beta"].reshape(1, -1, 1)
    h = (h - mean) * jax.lax.rsqrt(var + 1e-5) * gamma + beta
    h = jnp.maximum(h, 0.0)
    return conv1d(h, params["w2"], params["b2"])


if __name__ == "__main__":
    # Small shapes consistent with the module: x/source are (B, feature_dim, N).
    # feature_dim=128 keeps all channel widths lane-dense (multiples of 128).
    B, N = 2, 128
    feature_dim, num_heads = 128, 4

    key = jax.random.PRNGKey(0)
    kx, ks, kp = jax.random.split(key, 3)
    x = jax.random.normal(kx, (B, feature_dim, N), jnp.float32)
    source = jax.random.normal(ks, (B, feature_dim, N), jnp.float32)
    params = init_attentional_propagation_params(kp, feature_dim)

    out = attentional_propagation_forward(x, source, params, num_heads=num_heads)
    out = jax.block_until_ready(out)

    ref = _reference_forward(x, source, params, num_heads)
    np.testing.assert_allclose(np.asarray(out), np.asarray(ref), rtol=2e-3, atol=2e-3)

    assert out.shape == (B, feature_dim, N)
    print("KERNEL_OK")
</pallas_src>

<mosaic_0001>
module attributes {stable_mosaic.version = 11 : i64} {
  func.func @_attn_conv1_kernel(%arg0: i32, %arg1: memref<1x128x128xf32, #tpu.memory_space<vmem>>, %arg2: memref<1x128x128xf32, #tpu.memory_space<vmem>>, %arg3: memref<128x128xf32, #tpu.memory_space<vmem>>, %arg4: memref<1x128xf32, #tpu.memory_space<vmem>>, %arg5: memref<128x128xf32, #tpu.memory_space<vmem>>, %arg6: memref<128x1xf32, #tpu.memory_space<vmem>>, %arg7: memref<128x128xf32, #tpu.memory_space<vmem>>, %arg8: memref<1x128xf32, #tpu.memory_space<vmem>>, %arg9: memref<128x128xf32, #tpu.memory_space<vmem>>, %arg10: memref<1x128xf32, #tpu.memory_space<vmem>>, %arg11: memref<128x256xf32, #tpu.memory_space<vmem>>, %arg12: memref<128x256xf32, #tpu.memory_space<vmem>>, %arg13: memref<1x256xf32, #tpu.memory_space<vmem>>, %arg14: memref<1x128x256xf32, #tpu.memory_space<vmem>>, %arg15: memref<1x1x256xf32, #tpu.memory_space<vmem>>, %arg16: memref<1x1x256xf32, #tpu.memory_space<vmem>>) attributes {dimension_semantics = [#tpu.dimension_semantics<parallel>], iteration_bounds = array<i64: 2>, scalar_prefetch = 0 : i64, scratch_operands = 0 : i64, tpu.core_type = #tpu.core_type<tc>, window_params = [{transform_indices = @transform_0, window_bounds = array<i64: 1, 128, 128>}, {transform_indices = @transform_1, window_bounds = array<i64: 1, 128, 128>}, {pipeline_mode = #tpu.pipeline_mode<synchronous>, transform_indices = @transform_2, window_bounds = array<i64: 128, 128>}, {pipeline_mode = #tpu.pipeline_mode<synchronous>, transform_indices = @transform_3, window_bounds = array<i64: 1, 128>}, {pipeline_mode = #tpu.pipeline_mode<synchronous>, transform_indices = @transform_4, window_bounds = array<i64: 128, 128>}, {pipeline_mode = #tpu.pipeline_mode<synchronous>, transform_indices = @transform_5, window_bounds = array<i64: 128, 1>}, {pipeline_mode = #tpu.pipeline_mode<synchronous>, transform_indices = @transform_6, window_bounds = array<i64: 128, 128>}, {pipeline_mode = #tpu.pipeline_mode<synchronous>, transform_indices = @transform_7, window_bounds = array<i64: 1, 128>}, {pipeline_mode = #tpu.pipeline_mode<synchronous>, transform_indices = @transform_8, window_bounds = array<i64: 128, 128>}, {pipeline_mode = #tpu.pipeline_mode<synchronous>, transform_indices = @transform_9, window_bounds = array<i64: 1, 128>}, {pipeline_mode = #tpu.pipeline_mode<synchronous>, transform_indices = @transform_10, window_bounds = array<i64: 128, 256>}, {pipeline_mode = #tpu.pipeline_mode<synchronous>, transform_indices = @transform_11, window_bounds = array<i64: 128, 256>}, {pipeline_mode = #tpu.pipeline_mode<synchronous>, transform_indices = @transform_12, window_bounds = array<i64: 1, 256>}, {transform_indices = @transform_13, window_bounds = array<i64: 1, 128, 256>}, {transform_indices = @transform_14, window_bounds = array<i64: 1, 1, 256>}, {transform_indices = @transform_15, window_bounds = array<i64: 1, 1, 256>}]} {
    %c0 = arith.constant 0 : index
    %c0_0 = arith.constant 0 : index
    %c0_1 = arith.constant 0 : index
    %0 = vector.load %arg1[%c0, %c0_0, %c0_1] : memref<1x128x128xf32, #tpu.memory_space<vmem>>, vector<1x128x128xf32>
    %1 = vector.shape_cast %0 : vector<1x128x128xf32> to vector<128x128xf32>
    %c0_2 = arith.constant 0 : index
    %c0_3 = arith.constant 0 : index
    %c0_4 = arith.constant 0 : index
    %2 = vector.load %arg2[%c0_2, %c0_3, %c0_4] : memref<1x128x128xf32, #tpu.memory_space<vmem>>, vector<1x128x128xf32>
    %3 = vector.shape_cast %2 : vector<1x128x128xf32> to vector<128x128xf32>
    %4 = tpu.transpose %1, [1, 0] : vector<128x128xf32> -> vector<128x128xf32>
    %5 = tpu.transpose %3, [1, 0] : vector<128x128xf32> -> vector<128x128xf32>
    %c0_5 = arith.constant 0 : index
    %c0_6 = arith.constant 0 : index
    %6 = vector.load %arg3[%c0_5, %c0_6] : memref<128x128xf32, #tpu.memory_space<vmem>>, vector<128x128xf32>
    %cst = arith.constant dense<0.000000e+00> : vector<128x128xf32>
    %7 = tpu.matmul %4, %6, %cst {dimension_numbers = #tpu.dot_dimension_numbers<[1], [0], [0], [1], [0, 0, 1, 1], [], []>} : vector<128x128xf32>, vector<128x128xf32>, vector<128x128xf32> -> vector<128x128xf32>
    %c0_7 = arith.constant 0 : index
    %c0_8 = arith.constant 0 : index
    %8 = vector.load %arg4[%c0_7, %c0_8] : memref<1x128xf32, #tpu.memory_space<vmem>>, vector<1x128xf32>
    %9 = vector.broadcast %8 : vector<1x128xf32> to vector<128x128xf32>
    %10 = arith.addf %7, %9 : vector<128x128xf32>
    %cst_9 = arith.constant 0.176776692 : f32
    %11 = vector.broadcast %cst_9 : f32 to vector<128x128xf32>
    %12 = arith.mulf %10, %11 : vector<128x128xf32>
    %c0_10 = arith.constant 0 : index
    %c0_11 = arith.constant 0 : index
    %13 = vector.load %arg5[%c0_10, %c0_11] : memref<128x128xf32, #tpu.memory_space<vmem>>, vector<128x128xf32>
    %cst_12 = arith.constant dense<0.000000e+00> : vector<128x128xf32>
    %14 = tpu.matmul %13, %3, %cst_12 {dimension_numbers = #tpu.dot_dimension_numbers<[1], [0], [0], [1], [0, 0, 1, 1], [], []>} : vector<128x128xf32>, vector<128x128xf32>, vector<128x128xf32> -> vector<128x128xf32>
    %c0_13 = arith.constant 0 : index
    %c0_14 = arith.constant 0 : index
    %15 = vector.load %arg6[%c0_13, %c0_14] : memref<128x1xf32, #tpu.memory_space<vmem>>, vector<128x1xf32>
    %16 = vector.broadcast %15 : vector<128x1xf32> to vector<128x128xf32>
    %17 = arith.addf %14, %16 : vector<128x128xf32>
    %c0_15 = arith.constant 0 : index
    %c0_16 = arith.constant 0 : index
    %18 = vector.load %arg7[%c0_15, %c0_16] : memref<128x128xf32, #tpu.memory_space<vmem>>, vector<128x128xf32>
    %cst_17 = arith.constant dense<0.000000e+00> : vector<128x128xf32>
    %19 = tpu.matmul %5, %18, %cst_17 {dimension_numbers = #tpu.dot_dimension_numbers<[1], [0], [0], [1], [0, 0, 1, 1], [], []>} : vector<128x128xf32>, vector<128x128xf32>, vector<128x128xf32> -> vector<128x128xf32>
    %c0_18 = arith.constant 0 : index
    %c0_19 = arith.constant 0 : index
    %20 = vector.load %arg8[%c0_18, %c0_19] : memref<1x128xf32, #tpu.memory_space<vmem>>, vector<1x128xf32>
    %21 = vector.broadcast %20 : vector<1x128xf32> to vector<128x128xf32>
    %22 = arith.addf %19, %21 : vector<128x128xf32>
    %c0_20 = arith.constant 0 : index
    %c0_21 = arith.constant 0 : index
    %23 = vector.load %arg9[%c0_20, %c0_21] : memref<128x128xf32, #tpu.memory_space<vmem>>, vector<128x128xf32>
    %24 = vector.extract_strided_slice %12 {offsets = [0, 0], sizes = [128, 32], strides = [1, 1]} : vector<128x128xf32> to vector<128x32xf32>
    %25 = vector.extract_strided_slice %17 {offsets = [0, 0], sizes = [32, 128], strides = [1, 1]} : vector<128x128xf32> to vector<32x128xf32>
    %26 = vector.extract_strided_slice %22 {offsets = [0, 0], sizes = [128, 32], strides = [1, 1]} : vector<128x128xf32> to vector<128x32xf32>
    %cst_22 = arith.constant dense<0.000000e+00> : vector<128x128xf32>
    %27 = tpu.matmul %24, %25, %cst_22 {dimension_numbers = #tpu.dot_dimension_numbers<[1], [0], [0], [1], [0, 0, 1, 1], [], []>} : vector<128x32xf32>, vector<32x128xf32>, vector<128x128xf32> -> vector<128x128xf32>
    %cst_23 = arith.constant dense<0xFF800000> : vector<128xf32>
    %28 = vector.multi_reduction <maximumf>, %27, %cst_23 [1] : vector<128x128xf32> to vector<128xf32>
    %29 = vector.shape_cast %28 : vector<128xf32> to vector<128x1xf32>
    %30 = vector.broadcast %29 : vector<128x1xf32> to vector<128x128xf32>
    %31 = arith.subf %27, %30 : vector<128x128xf32>
    %32 = math.exp %31 : vector<128x128xf32>
    %cst_24 = arith.constant dense<0.000000e+00> : vector<128xf32>
    %33 = vector.multi_reduction <add>, %32, %cst_24 [1] : vector<128x128xf32> to vector<128xf32>
    %34 = vector.shape_cast %33 : vector<128xf32> to vector<128x1xf32>
    %cst_25 = arith.constant dense<0.000000e+00> : vector<128x32xf32>
    %35 = tpu.matmul %32, %26, %cst_25 {dimension_numbers = #tpu.dot_dimension_numbers<[1], [0], [0], [1], [0, 0, 1, 1], [], []>} : vector<128x128xf32>, vector<128x32xf32>, vector<128x32xf32> -> vector<128x32xf32>
    %36 = tpu.reciprocal %34 {approx = true} : vector<128x1xf32> -> vector<128x1xf32>
    %37 = vector.broadcast %36 : vector<128x1xf32> to vector<128x32xf32>
    %38 = arith.mulf %35, %37 : vector<128x32xf32>
    %39 = vector.extract_strided_slice %23 {offsets = [0, 0], sizes = [32, 128], strides = [1, 1]} : vector<128x128xf32> to vector<32x128xf32>
    %cst_26 = arith.constant dense<0.000000e+00> : vector<128x128xf32>
    %40 = tpu.matmul %38, %39, %cst_26 {dimension_numbers = #tpu.dot_dimension_numbers<[1], [0], [0], [1], [0, 0, 1, 1], [], []>} : vector<128x32xf32>, vector<32x128xf32>, vector<128x128xf32> -> vector<128x128xf32>
    %41 = vector.extract_strided_slice %12 {offsets = [0, 32], sizes = [128, 32], strides = [1, 1]} : vector<128x128xf32> to vector<128x32xf32>
    %42 = vector.extract_strided_slice %17 {offsets = [32, 0], sizes = [32, 128], strides = [1, 1]} : vector<128x128xf32> to vector<32x128xf32>
    %43 = vector.extract_strided_slice %22 {offsets = [0, 32], sizes = [128, 32], strides = [1, 1]} : vector<128x128xf32> to vector<128x32xf32>
    %cst_27 = arith.constant dense<0.000000e+00> : vector<128x128xf32>
    %44 = tpu.matmul %41, %42, %cst_27 {dimension_numbers = #tpu.dot_dimension_numbers<[1], [0], [0], [1], [0, 0, 1, 1], [], []>} : vector<128x32xf32>, vector<32x128xf32>, vector<128x128xf32> -> vector<128x128xf32>
    %cst_28 = arith.constant dense<0xFF800000> : vector<128xf32>
    %45 = vector.multi_reduction <maximumf>, %44, %cst_28 [1] : vector<128x128xf32> to vector<128xf32>
    %46 = vector.shape_cast %45 : vector<128xf32> to vector<128x1xf32>
    %47 = vector.broadcast %46 : vector<128x1xf32> to vector<128x128xf32>
    %48 = arith.subf %44, %47 : vector<128x128xf32>
    %49 = math.exp %48 : vector<128x128xf32>
    %cst_29 = arith.constant dense<0.000000e+00> : vector<128xf32>
    %50 = vector.multi_reduction <add>, %49, %cst_29 [1] : vector<128x128xf32> to vector<128xf32>
    %51 = vector.shape_cast %50 : vector<128xf32> to vector<128x1xf32>
    %cst_30 = arith.constant dense<0.000000e+00> : vector<128x32xf32>
    %52 = tpu.matmul %49, %43, %cst_30 {dimension_numbers = #tpu.dot_dimension_numbers<[1], [0], [0], [1], [0, 0, 1, 1], [], []>} : vector<128x128xf32>, vector<128x32xf32>, vector<128x32xf32> -> vector<128x32xf32>
    %53 = tpu.reciprocal %51 {approx = true} : vector<128x1xf32> -> vector<128x1xf32>
    %54 = vector.broadcast %53 : vector<128x1xf32> to vector<128x32xf32>
    %55 = arith.mulf %52, %54 : vector<128x32xf32>
    %56 = vector.extract_strided_slice %23 {offsets = [32, 0], sizes = [32, 128], strides = [1, 1]} : vector<128x128xf32> to vector<32x128xf32>
    %cst_31 = arith.constant dense<0.000000e+00> : vector<128x128xf32>
    %57 = tpu.matmul %55, %56, %cst_31 {dimension_numbers = #tpu.dot_dimension_numbers<[1], [0], [0], [1], [0, 0, 1, 1], [], []>} : vector<128x32xf32>, vector<32x128xf32>, vector<128x128xf32> -> vector<128x128xf32>
    %58 = arith.addf %40, %57 : vector<128x128xf32>
    %59 = vector.extract_strided_slice %12 {offsets = [0, 64], sizes = [128, 32], strides = [1, 1]} : vector<128x128xf32> to vector<128x32xf32>
    %60 = vector.extract_strided_slice %17 {offsets = [64, 0], sizes = [32, 128], strides = [1, 1]} : vector<128x128xf32> to vector<32x128xf32>
    %61 = vector.extract_strided_slice %22 {offsets = [0, 64], sizes = [128, 32], strides = [1, 1]} : vector<128x128xf32> to vector<128x32xf32>
    %cst_32 = arith.constant dense<0.000000e+00> : vector<128x128xf32>
    %62 = tpu.matmul %59, %60, %cst_32 {dimension_numbers = #tpu.dot_dimension_numbers<[1], [0], [0], [1], [0, 0, 1, 1], [], []>} : vector<128x32xf32>, vector<32x128xf32>, vector<128x128xf32> -> vector<128x128xf32>
    %cst_33 = arith.constant dense<0xFF800000> : vector<128xf32>
    %63 = vector.multi_reduction <maximumf>, %62, %cst_33 [1] : vector<128x128xf32> to vector<128xf32>
    %64 = vector.shape_cast %63 : vector<128xf32> to vector<128x1xf32>
    %65 = vector.broadcast %64 : vector<128x1xf32> to vector<128x128xf32>
    %66 = arith.subf %62, %65 : vector<128x128xf32>
    %67 = math.exp %66 : vector<128x128xf32>
    %cst_34 = arith.constant dense<0.000000e+00> : vector<128xf32>
    %68 = vector.multi_reduction <add>, %67, %cst_34 [1] : vector<128x128xf32> to vector<128xf32>
    %69 = vector.shape_cast %68 : vector<128xf32> to vector<128x1xf32>
    %cst_35 = arith.constant dense<0.000000e+00> : vector<128x32xf32>
    %70 = tpu.matmul %67, %61, %cst_35 {dimension_numbers = #tpu.dot_dimension_numbers<[1], [0], [0], [1], [0, 0, 1, 1], [], []>} : vector<128x128xf32>, vector<128x32xf32>, vector<128x32xf32> -> vector<128x32xf32>
    %71 = tpu.reciprocal %69 {approx = true} : vector<128x1xf32> -> vector<128x1xf32>
    %72 = vector.broadcast %71 : vector<128x1xf32> to vector<128x32xf32>
    %73 = arith.mulf %70, %72 : vector<128x32xf32>
    %74 = vector.extract_strided_slice %23 {offsets = [64, 0], sizes = [32, 128], strides = [1, 1]} : vector<128x128xf32> to vector<32x128xf32>
    %cst_36 = arith.constant dense<0.000000e+00> : vector<128x128xf32>
    %75 = tpu.matmul %73, %74, %cst_36 {dimension_numbers = #tpu.dot_dimension_numbers<[1], [0], [0], [1], [0, 0, 1, 1], [], []>} : vector<128x32xf32>, vector<32x128xf32>, vector<128x128xf32> -> vector<128x128xf32>
    %76 = arith.addf %58, %75 : vector<128x128xf32>
    %77 = vector.extract_strided_slice %12 {offsets = [0, 96], sizes = [128, 32], strides = [1, 1]} : vector<128x128xf32> to vector<128x32xf32>
    %78 = vector.extract_strided_slice %17 {offsets = [96, 0], sizes = [32, 128], strides = [1, 1]} : vector<128x128xf32> to vector<32x128xf32>
    %79 = vector.extract_strided_slice %22 {offsets = [0, 96], sizes = [128, 32], strides = [1, 1]} : vector<128x128xf32> to vector<128x32xf32>
    %cst_37 = arith.constant dense<0.000000e+00> : vector<128x128xf32>
    %80 = tpu.matmul %77, %78, %cst_37 {dimension_numbers = #tpu.dot_dimension_numbers<[1], [0], [0], [1], [0, 0, 1, 1], [], []>} : vector<128x32xf32>, vector<32x128xf32>, vector<128x128xf32> -> vector<128x128xf32>
    %cst_38 = arith.constant dense<0xFF800000> : vector<128xf32>
    %81 = vector.multi_reduction <maximumf>, %80, %cst_38 [1] : vector<128x128xf32> to vector<128xf32>
    %82 = vector.shape_cast %81 : vector<128xf32> to vector<128x1xf32>
    %83 = vector.broadcast %82 : vector<128x1xf32> to vector<128x128xf32>
    %84 = arith.subf %80, %83 : vector<128x128xf32>
    %85 = math.exp %84 : vector<128x128xf32>
    %cst_39 = arith.constant dense<0.000000e+00> : vector<128xf32>
    %86 = vector.multi_reduction <add>, %85, %cst_39 [1] : vector<128x128xf32> to vector<128xf32>
    %87 = vector.shape_cast %86 : vector<128xf32> to vector<128x1xf32>
    %cst_40 = arith.constant dense<0.000000e+00> : vector<128x32xf32>
    %88 = tpu.matmul %85, %79, %cst_40 {dimension_numbers = #tpu.dot_dimension_numbers<[1], [0], [0], [1], [0, 0, 1, 1], [], []>} : vector<128x128xf32>, vector<128x32xf32>, vector<128x32xf32> -> vector<128x32xf32>
    %89 = tpu.reciprocal %87 {approx = true} : vector<128x1xf32> -> vector<128x1xf32>
    %90 = vector.broadcast %89 : vector<128x1xf32> to vector<128x32xf32>
    %91 = arith.mulf %88, %90 : vector<128x32xf32>
    %92 = vector.extract_strided_slice %23 {offsets = [96, 0], sizes = [32, 128], strides = [1, 1]} : vector<128x128xf32> to vector<32x128xf32>
    %cst_41 = arith.constant dense<0.000000e+00> : vector<128x128xf32>
    %93 = tpu.matmul %91, %92, %cst_41 {dimension_numbers = #tpu.dot_dimension_numbers<[1], [0], [0], [1], [0, 0, 1, 1], [], []>} : vector<128x32xf32>, vector<32x128xf32>, vector<128x128xf32> -> vector<128x128xf32>
    %94 = arith.addf %76, %93 : vector<128x128xf32>
    %c0_42 = arith.constant 0 : index
    %c0_43 = arith.constant 0 : index
    %95 = vector.load %arg10[%c0_42, %c0_43] : memref<1x128xf32, #tpu.memory_space<vmem>>, vector<1x128xf32>
    %96 = vector.broadcast %95 : vector<1x128xf32> to vector<128x128xf32>
    %97 = arith.addf %94, %96 : vector<128x128xf32>
    %c0_44 = arith.constant 0 : index
    %c0_45 = arith.constant 0 : index
    %98 = vector.load %arg11[%c0_44, %c0_45] : memref<128x256xf32, #tpu.memory_space<vmem>>, vector<128x256xf32>
    %cst_46 = arith.constant dense<0.000000e+00> : vector<128x256xf32>
    %99 = tpu.matmul %4, %98, %cst_46 {dimension_numbers = #tpu.dot_dimension_numbers<[1], [0], [0], [1], [0, 0, 1, 1], [], []>} : vector<128x128xf32>, vector<128x256xf32>, vector<128x256xf32> -> vector<128x256xf32>
    %c0_47 = arith.constant 0 : index
    %c0_48 = arith.constant 0 : index
    %100 = vector.load %arg12[%c0_47, %c0_48] : memref<128x256xf32, #tpu.memory_space<vmem>>, vector<128x256xf32>
    %cst_49 = arith.constant dense<0.000000e+00> : vector<128x256xf32>
    %101 = tpu.matmul %97, %100, %cst_49 {dimension_numbers = #tpu.dot_dimension_numbers<[1], [0], [0], [1], [0, 0, 1, 1], [], []>} : vector<128x128xf32>, vector<128x256xf32>, vector<128x256xf32> -> vector<128x256xf32>
    %102 = arith.addf %99, %101 : vector<128x256xf32>
    %c0_50 = arith.constant 0 : index
    %c0_51 = arith.constant 0 : index
    %103 = vector.load %arg13[%c0_50, %c0_51] : memref<1x256xf32, #tpu.memory_space<vmem>>, vector<1x256xf32>
    %104 = vector.broadcast %103 : vector<1x256xf32> to vector<128x256xf32>
    %105 = arith.addf %102, %104 : vector<128x256xf32>
    %c0_52 = arith.constant 0 : index
    %c0_53 = arith.constant 0 : index
    %c0_54 = arith.constant 0 : index
    %106 = vector.load %arg14[%c0_52, %c0_53, %c0_54] : memref<1x128x256xf32, #tpu.memory_space<vmem>>, vector<1x128x256xf32>
    %107 = vector.shape_cast %106 : vector<1x128x256xf32> to vector<128x256xf32>
    %108 = vector.shape_cast %105 : vector<128x256xf32> to vector<1x128x256xf32>
    tpu.vector_store %arg14[%c0_52, %c0_53, %c0_54], %108 {strides = array<i32>} : memref<1x128x256xf32, #tpu.memory_space<vmem>>, vector<1x128x256xf32>,
    %cst_55 = arith.constant dense<0.000000e+00> : vector<256xf32>
    %109 = vector.multi_reduction <add>, %105, %cst_55 [0] : vector<128x256xf32> to vector<256xf32>
    %110 = vector.shape_cast %109 : vector<256xf32> to vector<1x256xf32>
    %c0_56 = arith.constant 0 : index
    %c0_57 = arith.constant 0 : index
    %c0_58 = arith.constant 0 : index
    %111 = vector.load %arg15[%c0_56, %c0_57, %c0_58] : memref<1x1x256xf32, #tpu.memory_space<vmem>>, vector<1x1x256xf32>
    %112 = vector.shape_cast %111 : vector<1x1x256xf32> to vector<1x256xf32>
    %113 = vector.shape_cast %110 : vector<1x256xf32> to vector<1x1x256xf32>
    tpu.vector_store %arg15[%c0_56, %c0_57, %c0_58], %113 {strides = array<i32>} : memref<1x1x256xf32, #tpu.memory_space<vmem>>, vector<1x1x256xf32>,
    %114 = arith.mulf %105, %105 : vector<128x256xf32>
    %cst_59 = arith.constant dense<0.000000e+00> : vector<256xf32>
    %115 = vector.multi_reduction <add>, %114, %cst_59 [0] : vector<128x256xf32> to vector<256xf32>
    %116 = vector.shape_cast %115 : vector<256xf32> to vector<1x256xf32>
    %c0_60 = arith.constant 0 : index
    %c0_61 = arith.constant 0 : index
    %c0_62 = arith.constant 0 : index
    %117 = vector.load %arg16[%c0_60, %c0_61, %c0_62] : memref<1x1x256xf32, #tpu.memory_space<vmem>>, vector<1x1x256xf32>
    %118 = vector.shape_cast %117 : vector<1x1x256xf32> to vector<1x256xf32>
    %119 = vector.shape_cast %116 : vector<1x256xf32> to vector<1x1x256xf32>
    tpu.vector_store %arg16[%c0_60, %c0_61, %c0_62], %119 {strides = array<i32>} : memref<1x1x256xf32, #tpu.memory_space<vmem>>, vector<1x1x256xf32>,
    return
  }
  func.func @transform_0(%arg0: i32) -> (i32, i32, i32) {
    %c0_i32 = arith.constant 0 : i32
    %c0_i32_0 = arith.constant 0 : i32
    %c0_i32_1 = arith.constant 0 : i32
    return %arg0, %c0_i32, %c0_i32_0 : i32, i32, i32
  }
  func.func @transform_1(%arg0: i32) -> (i32, i32, i32) {
    %c0_i32 = arith.constant 0 : i32
    %c0_i32_0 = arith.constant 0 : i32
    %c0_i32_1 = arith.constant 0 : i32
    return %arg0, %c0_i32, %c0_i32_0 : i32, i32, i32
  }
  func.func @transform_2(%arg0: i32) -> (i32, i32) {
    %c0_i32 = arith.constant 0 : i32
    %c0_i32_0 = arith.constant 0 : i32
    %c0_i32_1 = arith.constant 0 : i32
    return %c0_i32, %c0_i32_0 : i32, i32
  }
  func.func @transform_3(%arg0: i32) -> (i32, i32) {
    %c0_i32 = arith.constant 0 : i32
    %c0_i32_0 = arith.constant 0 : i32
    %c0_i32_1 = arith.constant 0 : i32
    return %c0_i32, %c0_i32_0 : i32, i32
  }
  func.func @transform_4(%arg0: i32) -> (i32, i32) {
    %c0_i32 = arith.constant 0 : i32
    %c0_i32_0 = arith.constant 0 : i32
    %c0_i32_1 = arith.constant 0 : i32
    return %c0_i32, %c0_i32_0 : i32, i32
  }
  func.func @transform_5(%arg0: i32) -> (i32, i32) {
    %c0_i32 = arith.constant 0 : i32
    %c0_i32_0 = arith.constant 0 : i32
    %c0_i32_1 = arith.constant 0 : i32
    return %c0_i32, %c0_i32_0 : i32, i32
  }
  func.func @transform_6(%arg0: i32) -> (i32, i32) {
    %c0_i32 = arith.constant 0 : i32
    %c0_i32_0 = arith.constant 0 : i32
    %c0_i32_1 = arith.constant 0 : i32
    return %c0_i32, %c0_i32_0 : i32, i32
  }
  func.func @transform_7(%arg0: i32) -> (i32, i32) {
    %c0_i32 = arith.constant 0 : i32
    %c0_i32_0 = arith.constant 0 : i32
    %c0_i32_1 = arith.constant 0 : i32
    return %c0_i32, %c0_i32_0 : i32, i32
  }
  func.func @transform_8(%arg0: i32) -> (i32, i32) {
    %c0_i32 = arith.constant 0 : i32
    %c0_i32_0 = arith.constant 0 : i32
    %c0_i32_1 = arith.constant 0 : i32
    return %c0_i32, %c0_i32_0 : i32, i32
  }
  func.func @transform_9(%arg0: i32) -> (i32, i32) {
    %c0_i32 = arith.constant 0 : i32
    %c0_i32_0 = arith.constant 0 : i32
    %c0_i32_1 = arith.constant 0 : i32
    return %c0_i32, %c0_i32_0 : i32, i32
  }
  func.func @transform_10(%arg0: i32) -> (i32, i32) {
    %c0_i32 = arith.constant 0 : i32
    %c0_i32_0 = arith.constant 0 : i32
    %c0_i32_1 = arith.constant 0 : i32
    return %c0_i32, %c0_i32_0 : i32, i32
  }
  func.func @transform_11(%arg0: i32) -> (i32, i32) {
    %c0_i32 = arith.constant 0 : i32
    %c0_i32_0 = arith.constant 0 : i32
    %c0_i32_1 = arith.constant 0 : i32
    return %c0_i32, %c0_i32_0 : i32, i32
  }
  func.func @transform_12(%arg0: i32) -> (i32, i32) {
    %c0_i32 = arith.constant 0 : i32
    %c0_i32_0 = arith.constant 0 : i32
    %c0_i32_1 = arith.constant 0 : i32
    return %c0_i32, %c0_i32_0 : i32, i32
  }
  func.func @transform_13(%arg0: i32) -> (i32, i32, i32) {
    %c0_i32 = arith.constant 0 : i32
    %c0_i32_0 = arith.constant 0 : i32
    %c0_i32_1 = arith.constant 0 : i32
    return %arg0, %c0_i32, %c0_i32_0 : i32, i32, i32
  }
  func.func @transform_14(%arg0: i32) -> (i32, i32, i32) {
    %c0_i32 = arith.constant 0 : i32
    %c0_i32_0 = arith.constant 0 : i32
    %c0_i32_1 = arith.constant 0 : i32
    return %arg0, %c0_i32, %c0_i32_0 : i32, i32, i32
  }
  func.func @transform_15(%arg0: i32) -> (i32, i32, i32) {
    %c0_i32 = arith.constant 0 : i32
    %c0_i32_0 = arith.constant 0 : i32
    %c0_i32_1 = arith.constant 0 : i32
    return %arg0, %c0_i32, %c0_i32_0 : i32, i32, i32
  }
}

module attributes {stable_mosaic.version = 11 : i64} {
  func.func @_bn_relu_conv2_kernel(%arg0: i32, %arg1: i32, %arg2: memref<1x128x256xf32, #tpu.memory_space<vmem>>, %arg3: memref<1x256xf32, #tpu.memory_space<vmem>>, %arg4: memref<1x256xf32, #tpu.memory_space<vmem>>, %arg5: memref<256x128xf32, #tpu.memory_space<vmem>>, %arg6: memref<1x128xf32, #tpu.memory_space<vmem>>, %arg7: memref<1x128x128xf32, #tpu.memory_space<vmem>>) attributes {dimension_semantics = [#tpu.dimension_semantics<parallel>, #tpu.dimension_semantics<parallel>], iteration_bounds = array<i64: 2, 1>, scalar_prefetch = 0 : i64, scratch_operands = 0 : i64, tpu.core_type = #tpu.core_type<tc>, window_params = [{transform_indices = @transform_0, window_bounds = array<i64: 1, 128, 256>}, {pipeline_mode = #tpu.pipeline_mode<synchronous>, transform_indices = @transform_1, window_bounds = array<i64: 1, 256>}, {pipeline_mode = #tpu.pipeline_mode<synchronous>, transform_indices = @transform_2, window_bounds = array<i64: 1, 256>}, {pipeline_mode = #tpu.pipeline_mode<synchronous>, transform_indices = @transform_3, window_bounds = array<i64: 256, 128>}, {pipeline_mode = #tpu.pipeline_mode<synchronous>, transform_indices = @transform_4, window_bounds = array<i64: 1, 128>}, {transform_indices = @transform_5, window_bounds = array<i64: 1, 128, 128>}]} {
    %c0 = arith.constant 0 : index
    %c0_0 = arith.constant 0 : index
    %c0_1 = arith.constant 0 : index
    %0 = vector.load %arg2[%c0, %c0_0, %c0_1] : memref<1x128x256xf32, #tpu.memory_space<vmem>>, vector<1x128x256xf32>
    %1 = vector.shape_cast %0 : vector<1x128x256xf32> to vector<128x256xf32>
    %c0_2 = arith.constant 0 : index
    %c0_3 = arith.constant 0 : index
    %2 = vector.load %arg3[%c0_2, %c0_3] : memref<1x256xf32, #tpu.memory_space<vmem>>, vector<1x256xf32>
    %3 = vector.broadcast %2 : vector<1x256xf32> to vector<128x256xf32>
    %4 = arith.mulf %1, %3 : vector<128x256xf32>
    %c0_4 = arith.constant 0 : index
    %c0_5 = arith.constant 0 : index
    %5 = vector.load %arg4[%c0_4, %c0_5] : memref<1x256xf32, #tpu.memory_space<vmem>>, vector<1x256xf32>
    %6 = vector.broadcast %5 : vector<1x256xf32> to vector<128x256xf32>
    %7 = arith.addf %4, %6 : vector<128x256xf32>
    %cst = arith.constant 0.000000e+00 : f32
    %8 = vector.broadcast %cst : f32 to vector<128x256xf32>
    %9 = arith.maximumf %7, %8 : vector<128x256xf32>
    %c0_6 = arith.constant 0 : index
    %c0_7 = arith.constant 0 : index
    %10 = vector.load %arg5[%c0_6, %c0_7] : memref<256x128xf32, #tpu.memory_space<vmem>>, vector<256x128xf32>
    %cst_8 = arith.constant dense<0.000000e+00> : vector<128x128xf32>
    %11 = tpu.matmul %9, %10, %cst_8 {dimension_numbers = #tpu.dot_dimension_numbers<[1], [0], [0], [1], [0, 0, 1, 1], [], []>} : vector<128x256xf32>, vector<256x128xf32>, vector<128x128xf32> -> vector<128x128xf32>
    %c0_9 = arith.constant 0 : index
    %c0_10 = arith.constant 0 : index
    %12 = vector.load %arg6[%c0_9, %c0_10] : memref<1x128xf32, #tpu.memory_space<vmem>>, vector<1x128xf32>
    %13 = vector.broadcast %12 : vector<1x128xf32> to vector<128x128xf32>
    %14 = arith.addf %11, %13 : vector<128x128xf32>
    %15 = tpu.transpose %14, [1, 0] : vector<128x128xf32> -> vector<128x128xf32>
    %c0_11 = arith.constant 0 : index
    %c0_12 = arith.constant 0 : index
    %c0_13 = arith.constant 0 : index
    %16 = vector.load %arg7[%c0_11, %c0_12, %c0_13] : memref<1x128x128xf32, #tpu.memory_space<vmem>>, vector<1x128x128xf32>
    %17 = vector.shape_cast %16 : vector<1x128x128xf32> to vector<128x128xf32>
    %18 = vector.shape_cast %15 : vector<128x128xf32> to vector<1x128x128xf32>
    tpu.vector_store %arg7[%c0_11, %c0_12, %c0_13], %18 {strides = array<i32>} : memref<1x128x128xf32, #tpu.memory_space<vmem>>, vector<1x128x128xf32>,
    return
  }
  func.func @transform_0(%arg0: i32, %arg1: i32) -> (i32, i32, i32) {
    %c0_i32 = arith.constant 0 : i32
    %c0_i32_0 = arith.constant 0 : i32
    return %arg0, %arg1, %c0_i32 : i32, i32, i32
  }
  func.func @transform_1(%arg0: i32, %arg1: i32) -> (i32, i32) {
    %c0_i32 = arith.constant 0 : i32
    %c0_i32_0 = arith.constant 0 : i32
    %c0_i32_1 = arith.constant 0 : i32
    return %c0_i32, %c0_i32_0 : i32, i32
  }
  func.func @transform_2(%arg0: i32, %arg1: i32) -> (i32, i32) {
    %c0_i32 = arith.constant 0 : i32
    %c0_i32_0 = arith.constant 0 : i32
    %c0_i32_1 = arith.constant 0 : i32
    return %c0_i32, %c0_i32_0 : i32, i32
  }
  func.func @transform_3(%arg0: i32, %arg1: i32) -> (i32, i32) {
    %c0_i32 = arith.constant 0 : i32
    %c0_i32_0 = arith.constant 0 : i32
    %c0_i32_1 = arith.constant 0 : i32
    return %c0_i32, %c0_i32_0 : i32, i32
  }
  func.func @transform_4(%arg0: i32, %arg1: i32) -> (i32, i32) {
    %c0_i32 = arith.constant 0 : i32
    %c0_i32_0 = arith.constant 0 : i32
    %c0_i32_1 = arith.constant 0 : i32
    return %c0_i32, %c0_i32_0 : i32, i32
  }
  func.func @transform_5(%arg0: i32, %arg1: i32) -> (i32, i32, i32) {
    %c0_i32 = arith.constant 0 : i32
    %c0_i32_0 = arith.constant 0 : i32
    return %arg0, %c0_i32, %arg1 : i32, i32, i32
  }
}

</mosaic_0001>

<llo_original>
// kernel: attentional_propagation_forward.3
$region0: #{attentional_propagation_forward.3}
  #allocation0 [shape = 'u32[]', space=smem, size = 0x4, offset = 0x4, fixed_abs, tag = 'smem constant byte address 0x4 - core index']
  #allocation1 [shape = 'u32[144,128]{1,0:T(1,128)}', space=vmem, size = 0x12000, scoped, tag = 'internal scratch']
  %s0 = inlined_call_operand.vmem [shape: f32[2,128,256], index: 0, kind: input, shape index: {}]
  %s1 = inlined_call_operand.vmem [shape: f32[1,256], index: 1, kind: input, shape index: {}]
  %s2 = inlined_call_operand.vmem [shape: f32[1,256], index: 2, kind: input, shape index: {}]
  %s3 = inlined_call_operand.vmem [shape: f32[256,128], index: 3, kind: input, shape index: {}]
  %s4 = inlined_call_operand.vmem [shape: f32[1,128], index: 4, kind: input, shape index: {}]
  %s5 = inlined_call_operand.hbm [shape: f32[2,128,128], index: 5, kind: output, shape index: {}]
  %s6 = sld [smem:[#allocation0]]
  $region53: #{attentional_propagation_forward.3} parent=0
    _
  %s8 = ssub.s32 1, %s6
  %s9 = scalar_select 0, %s8, %s6
  $region1: #{attentional_propagation_forward.3} parent=0
    #allocation2 [shape = 'u8[131072]{0}', space=vmem, size = 0x20000, scoped, tag = 'output window, operand 0']
    #allocation3 [shape = 's32[2]{0}', space=sflag, size = 0x8, scoped, tag = 'scoped memory for attentional_propagation_forward.3']
    %10 = vsyncpa [#allocation3], 0
    %s11 = scalar_lea.sflag [#allocation3], 1
    %12 = vsyncpa %s11, 0
    loop: start=0, step=1, limit=4
    $region2: #{attentional_propagation_forward.3} parent=1 // loop_pre_header
      _
    $region3: #{attentional_propagation_forward.3} parent=1 // loop_header
      %s14 = sphi 0, %s18
      %p15 = scmp.ge.s32.totalorder %s14, 4
      %s21 = sphi 0, %s33
      %s22 = sphi 0, %s29
      %s23 = sphi 0, %s21
      %s24 = sphi 0, %s22
      %s25 = sphi 0, %s23
      %s26 = sphi 0, %s24
      %s38 = sphi 0, %s40
      %s41 = sphi 0, %s38
      %s42 = sphi 0, %s41
      %s58 = sphi 0, %s42
      %s62 = sphi 0, %s62
      %s64 = sphi 0, %s62
      %s65 = sphi 0, %s64
      %s79 = sphi 0, %s65
      %s83 = sphi 0, %s83
      %s85 = sphi 0, %s83
      %s86 = sphi 0, %s85
      %s100 = sphi 0, %s86
      %s104 = sphi 0, %s104
      %s106 = sphi 0, %s104
      %s107 = sphi 0, %s106
      %s121 = sphi 0, %s107
      %s125 = sphi 0, %s125
      %s127 = sphi 0, %s125
      %s128 = sphi 0, %s127
      %s142 = sphi 0, %s128
      %s150 = sphi 0, %s152
      %s153 = sphi 0, %s150
      %s154 = sphi 0, %s153
      %s170 = sphi 0, %s154
    $region4: #{attentional_propagation_forward.3} parent=1 // loop_header_branch
      %17 = sbr.rel (%p15) target = $region8
    $region5: #{attentional_propagation_forward.3} parent=1 // loop_body
      %s19 = ssub.s32 %s14, 1
      %s20 = ssub.s32 %s14, 2
      %s27 = sadd.s32 1, %s22
      %p28 = scmp.ge.s32.totalorder %s27, 1
      %s29 = scalar_select %p28, 0, %s27
      %s30 = sadd.s32 1, %s21
      %s31 = scalar_select %p28, %s30, %s21
      %p32 = scmp.ge.s32.totalorder %s31, 2
      %s33 = scalar_select %p32, 0, %s31
      %s34 = ssub.s32 %s21, %s33
      %s35 = ssub.s32 %s22, %s29
      %s36 = sor.u32 %s34, %s35
      %p37 = scmp.eq.s32.totalorder %s36, 0
      %s39 = sadd.s32 %s38, 1
      %s40 = scalar_select %p37, %s38, %s39
      %p43 = pneg %p37
      %p44 = scmp.eq.s32.totalorder %s14, 1
      %p45 = por %p43, %p44
      %p46 = scmp.ne.s32.totalorder %s38, %s41
      %p47 = scmp.eq.s32.totalorder %s14, 0
      %p48 = por %p46, %p47
      %p49 = scmp.ne.s32.totalorder %s38, %s41
      %p50 = scmp.eq.s32.totalorder %s19, 1
      %p51 = por %p49, %p50
      %p52 = scmp.ne.s32.totalorder %s41, %s42
      %p53 = scmp.eq.s32.totalorder %s19, 0
      %p54 = por %p52, %p53
      %p55 = scmp.ne.s32.totalorder %s41, %s42
      %p56 = scmp.eq.s32.totalorder %s20, 1
      %p57 = por %p55, %p56
      %p59 = scmp.ne.s32.totalorder %s42, %s58
      %p60 = scmp.eq.s32.totalorder %s20, 0
      %p61 = por %p59, %p60
      %s63 = sadd.s32 %s62, 1
      %p66 = scmp.eq.s32.totalorder %s14, 1
      %p67 = scmp.ne.s32.totalorder %s62, %s64
      %p68 = scmp.eq.s32.totalorder %s14, 0
      %p69 = por %p67, %p68
      %p70 = scmp.ne.s32.totalorder %s62, %s64
      %p71 = scmp.eq.s32.totalorder %s19, 1
      %p72 = por %p70, %p71
      %p73 = scmp.ne.s32.totalorder %s64, %s65
      %p74 = scmp.eq.s32.totalorder %s19, 0
      %p75 = por %p73, %p74
      %p76 = scmp.ne.s32.totalorder %s64, %s65
      %p77 = scmp.eq.s32.totalorder %s20, 1
      %p78 = por %p76, %p77
      %p80 = scmp.ne.s32.totalorder %s65, %s79
      %p81 = scmp.eq.s32.totalorder %s20, 0
      %p82 = por %p80, %p81
      %s84 = sadd.s32 %s83, 1
      %p87 = scmp.eq.s32.totalorder %s14, 1
      %p88 = scmp.ne.s32.totalorder %s83, %s85
      %p89 = scmp.eq.s32.totalorder %s14, 0
      %p90 = por %p88, %p89
      %p91 = scmp.ne.s32.totalorder %s83, %s85
      %p92 = scmp.eq.s32.totalorder %s19, 1
      %p93 = por %p91, %p92
      %p94 = scmp.ne.s32.totalorder %s85, %s86
      %p95 = scmp.eq.s32.totalorder %s19, 0
      %p96 = por %p94, %p95
      %p97 = scmp.ne.s32.totalorder %s85, %s86
      %p98 = scmp.eq.s32.totalorder %s20, 1
      %p99 = por %p97, %p98
      %p101 = scmp.ne.s32.totalorder %s86, %s100
      %p102 = scmp.eq.s32.totalorder %s20, 0
      %p103 = por %p101, %p102
      %s105 = sadd.s32 %s104, 1
      %p108 = scmp.eq.s32.totalorder %s14, 1
      %p109 = scmp.ne.s32.totalorder %s104, %s106
      %p110 = scmp.eq.s32.totalorder %s14, 0
      %p111 = por %p109, %p110
      %p112 = scmp.ne.s32.totalorder %s104, %s106
      %p113 = scmp.eq.s32.totalorder %s19, 1
      %p114 = por %p112, %p113
      %p115 = scmp.ne.s32.totalorder %s106, %s107
      %p116 = scmp.eq.s32.totalorder %s19, 0
      %p117 = por %p115, %p116
      %p118 = scmp.ne.s32.totalorder %s106, %s107
      %p119 = scmp.eq.s32.totalorder %s20, 1
      %p120 = por %p118, %p119
      %p122 = scmp.ne.s32.totalorder %s107, %s121
      %p123 = scmp.eq.s32.totalorder %s20, 0
      %p124 = por %p122, %p123
      %s126 = sadd.s32 %s125, 1
      %p129 = scmp.eq.s32.totalorder %s14, 1
      %p130 = scmp.ne.s32.totalorder %s125, %s127
      %p131 = scmp.eq.s32.totalorder %s14, 0
      %p132 = por %p130, %p131
      %p133 = scmp.ne.s32.totalorder %s125, %s127
      %p134 = scmp.eq.s32.totalorder %s19, 1
      %p135 = por %p133, %p134
      %p136 = scmp.ne.s32.totalorder %s127, %s128
      %p137 = scmp.eq.s32.totalorder %s19, 0
      %p138 = por %p136, %p137
      %p139 = scmp.ne.s32.totalorder %s127, %s128
      %p140 = scmp.eq.s32.totalorder %s20, 1
      %p141 = por %p139, %p140
      %p143 = scmp.ne.s32.totalorder %s128, %s142
      %p144 = scmp.eq.s32.totalorder %s20, 0
      %p145 = por %p143, %p144
      %s146 = ssub.s32 %s21, %s33
      %s147 = ssub.s32 %s22, %s29
      %s148 = sor.u32 %s146, %s147
      %p149 = scmp.eq.s32.totalorder %s148, 0
      %s151 = sadd.s32 %s150, 1
      %s152 = scalar_select %p149, %s150, %s151
      %p155 = pneg %p149
      %p156 = scmp.eq.s32.totalorder %s14, 1
      %p157 = por %p155, %p156
      %p158 = scmp.ne.s32.totalorder %s150, %s153
      %p159 = scmp.eq.s32.totalorder %s14, 0
      %p160 = por %p158, %p159
      %p161 = scmp.ne.s32.totalorder %s150, %s153
      %p162 = scmp.eq.s32.totalorder %s19, 1
      %p163 = por %p161, %p162
      %p164 = scmp.ne.s32.totalorder %s153, %s154
      %p165 = scmp.eq.s32.totalorder %s19, 0
      %p166 = por %p164, %p165
      %p167 = scmp.ne.s32.totalorder %s153, %s154
      %p168 = scmp.eq.s32.totalorder %s20, 1
      %p169 = por %p167, %p168
      %p171 = scmp.ne.s32.totalorder %s154, %s170
      %p172 = scmp.eq.s32.totalorder %s20, 0
      %p173 = por %p171, %p172
      %p174 = scmp.le.s32.totalorder 1, %s14
      %p175 = scmp.lt.s32.totalorder %s14, 3
      %p176 = pnand %p174, %p175
      %p177 = pneg %p176
      // Predicated region
      $region9: #{attentional_propagation_forward.3} parent=5 // pred_check
        _
      $region10: #{attentional_propagation_forward.3} parent=5 // pred_check_branch
        %179 = sbr.rel (%p176) target = $region12
      $region11: #{attentional_propagation_forward.3} parent=5 // pred_region
        %s180 = ssub.s32 %s14, 1
        // Predicated region
        $region13: #{attentional_propagation_forward.3} parent=11 // pred_check
          %p181 = pneg %p75
        $region14: #{attentional_propagation_forward.3} parent=11 // pred_check_branch
          %183 = sbr.rel (%p181) target = $region16
        $region15: #{attentional_propagation_forward.3} parent=11 // pred_region
          _
        $region16: #{attentional_propagation_forward.3} parent=11 // pred_fallthru
          _
        // Predicated region
        $region17: #{attentional_propagation_forward.3} parent=11 // pred_check
          %p184 = pneg %p96
        $region18: #{attentional_propagation_forward.3} parent=11 // pred_check_branch
          %186 = sbr.rel (%p184) target = $region20
        $region19: #{attentional_propagation_forward.3} parent=11 // pred_region
          _
        $region20: #{attentional_propagation_forward.3} parent=11 // pred_fallthru
          _
        // Predicated region
        $region21: #{attentional_propagation_forward.3} parent=11 // pred_check
          %p187 = pneg %p117
        $region22: #{attentional_propagation_forward.3} parent=11 // pred_check_branch
          %189 = sbr.rel (%p187) target = $region24
        $region23: #{attentional_propagation_forward.3} parent=11 // pred_region
          _
        $region24: #{attentional_propagation_forward.3} parent=11 // pred_fallthru
          _
        // Predicated region
        $region25: #{attentional_propagation_forward.3} parent=11 // pred_check
          %p190 = pneg %p138
        $region26: #{attentional_propagation_forward.3} parent=11 // pred_check_branch
          %192 = sbr.rel (%p190) target = $region28
        $region27: #{attentional_propagation_forward.3} parent=11 // pred_region
          _
        $region28: #{attentional_propagation_forward.3} parent=11 // pred_fallthru
          _
      $region12: #{attentional_propagation_forward.3} parent=5 // pred_fallthru
        _
      %p193 = scmp.lt.s32.totalorder %s14, 2
      // Predicated region
      $region29: #{attentional_propagation_forward.3} parent=5 // pred_check
        %p194 = pneg %p193
      $region30: #{attentional_propagation_forward.3} parent=5 // pred_check_branch
        %196 = sbr.rel (%p194) target = $region32
      $region31: #{attentional_propagation_forward.3} parent=5 // pred_region
        // Predicated region
        $region33: #{attentional_propagation_forward.3} parent=31 // pred_check
          %p197 = pneg %p48
        $region34: #{attentional_propagation_forward.3} parent=31 // pred_check_branch
          %199 = sbr.rel (%p197) target = $region36
        $region35: #{attentional_propagation_forward.3} parent=31 // pred_region
          %s200 = smul.u32 16, %s22
          %p201 = scmp.lt.s32.totalorder %s21, 1
          %s202 = scalar_select %p201, %s21, 1
          %p203 = scmp.lt.s32.totalorder %s200, 15
          %s204 = scalar_select %p203, %s200, 15
          %s205 = smul.addr %s204, 2
          %s206 = smul.addr %s202, 32
          %s207 = sadd.s32 %s205, %s206
          %s208 = smul.addr %s207, 8
          %s209 = scalar_lea.vmem %s0, %s208
          %s210 = smul.u32 16, %s22
        $region36: #{attentional_propagation_forward.3} parent=31 // pred_fallthru
          _
      $region32: #{attentional_propagation_forward.3} parent=5 // pred_fallthru
        _
      %p211 = scmp.le.s32.totalorder 1, %s14
      %p212 = scmp.lt.s32.totalorder %s14, 3
      %p213 = pnand %p211, %p212
      %p214 = pneg %p213
      // Predicated region
      $region37: #{attentional_propagation_forward.3} parent=5 // pred_check
        _
      $region38: #{attentional_propagation_forward.3} parent=5 // pred_check_branch
        %216 = sbr.rel (%p213) target = $region40
      $region39: #{attentional_propagation_forward.3} parent=5 // pred_region
        %s217 = ssub.s32 %s14, 1
        %s218 = smul.u32 16, %s24
        %p219 = scmp.lt.s32.totalorder %s23, 1
        %s220 = scalar_select %p219, %s23, 1
        %p221 = scmp.lt.s32.totalorder %s218, 15
        %s222 = scalar_select %p221, %s218, 15
        %s223 = smul.addr %s222, 2
        %s224 = smul.addr %s220, 32
        %s225 = sadd.s32 %s223, %s224
        %s226 = smul.addr %s225, 8
        %s227 = scalar_lea.vmem %s0, %s226
        %p228 = pneg %p54
        %p229 = pneg %p51
        %p230 = pneg %p75
        %p231 = pneg %p72
        %p232 = pneg %p96
        %p233 = pneg %p93
        %p234 = pneg %p117
        %p235 = pneg %p114
        %p236 = pneg %p138
        %p237 = pneg %p135
        %p238 = pneg %p166
        %p239 = pneg %p163
        %s240 = sand.u32 %s153, 1
        %s241 = scalar_lea.sflag [#allocation3], %s240
        %s242 = sand.u32 %s153, 1
        %s243 = smul.addr %s242, 128
        %s244 = scalar_lea.vmem [#allocation2], %s243
        %s245 = smul.u32 16, %s24
        %p246 = scmp.lt.s32.totalorder %s23, 1
        %s247 = scalar_select %p246, %s23, 1
        %p248 = scmp.lt.s32.totalorder %s245, 15
        %s249 = scalar_select %p248, %s245, 15
        %s250 = smul.addr %s249, 2
        %s251 = smul.addr %s247, 32
        %s252 = sadd.s32 %s250, %s251
        %s253 = smul.addr %s252, 8
        %s254 = scalar_lea.vmem %s0, %s253
        %s255 = smul.u32 16, %s24
        %v256 = vld [vmem:[%s254] sm:$0xff]
        %v257 = vld [vmem:[%s254 + $0x8] sm:$0xff]
        %v258 = vld [vmem:[%s254 + $0x10] sm:$0xff]
        %v259 = vld [vmem:[%s254 + $0x18] sm:$0xff]
        %v260 = vld [vmem:[%s254 + $0x20] sm:$0xff]
        %v261 = vld [vmem:[%s254 + $0x28] sm:$0xff]
        %v262 = vld [vmem:[%s254 + $0x30] sm:$0xff]
        %v263 = vld [vmem:[%s254 + $0x38] sm:$0xff]
        %v264 = vld [vmem:[%s254 + $0x40] sm:$0xff]
        %v265 = vld [vmem:[%s254 + $0x48] sm:$0xff]
        %v266 = vld [vmem:[%s254 + $0x50] sm:$0xff]
        %v267 = vld [vmem:[%s254 + $0x58] sm:$0xff]
        %v268 = vld [vmem:[%s254 + $0x60] sm:$0xff]
        %v269 = vld [vmem:[%s254 + $0x68] sm:$0xff]
        %v270 = vld [vmem:[%s254 + $0x70] sm:$0xff]
        %v271 = vld [vmem:[%s254 + $0x78] sm:$0xff]
        %v272 = vld [vmem:[%s254 + $0x80] sm:$0xff]
        %v273 = vld [vmem:[%s254 + $0x88] sm:$0xff]
        %v274 = vld [vmem:[%s254 + $0x90] sm:$0xff]
        %v275 = vld [vmem:[%s254 + $0x98] sm:$0xff]
        %v276 = vld [vmem:[%s254 + $0xa0] sm:$0xff]
        %v277 = vld [vmem:[%s254 + $0xa8] sm:$0xff]
        %v278 = vld [vmem:[%s254 + $0xb0] sm:$0xff]
        %v279 = vld [vmem:[%s254 + $0xb8] sm:$0xff]
        %v280 = vld [vmem:[%s254 + $0xc0] sm:$0xff]
        %v281 = vld [vmem:[%s254 + $0xc8] sm:$0xff]
        %v282 = vld [vmem:[%s254 + $0xd0] sm:$0xff]
        %v283 = vld [vmem:[%s254 + $0xd8] sm:$0xff]
        %v284 = vld [vmem:[%s254 + $0xe0] sm:$0xff]
        %v285 = vld [vmem:[%s254 + $0xe8] sm:$0xff]
        %v286 = vld [vmem:[%s254 + $0xf0] sm:$0xff]
        %v287 = vld [vmem:[%s254 + $0xf8] sm:$0xff]
        %v288 = vld [vmem:[%s1] sm:$0x3]
        %v290 = vlaneseq
        %v291 = vshrl.u32 %v290, 7
        %v292 = vsub.s32 0, %v291
        %v293 = vrot.slane %v288, %v292
        %v294 = vlaneseq
        %v295 = vshrl.u32 %v294, 7
        %v296 = vsub.s32 1, %v295
        %v297 = vrot.slane %v288, %v296
        %v300 = vmul.f32 %v256, %v293
        %v301 = vmul.f32 %v257, %v297
        %v302 = vmul.f32 %v258, %v293
        %v303 = vmul.f32 %v259, %v297
        %v304 = vmul.f32 %v260, %v293
        %v305 = vmul.f32 %v261, %v297
        %v306 = vmul.f32 %v262, %v293
        %v307 = vmul.f32 %v263, %v297
        %v308 = vmul.f32 %v264, %v293
        %v309 = vmul.f32 %v265, %v297
        %v310 = vmul.f32 %v266, %v293
        %v311 = vmul.f32 %v267, %v297
        %v312 = vmul.f32 %v268, %v293
        %v313 = vmul.f32 %v269, %v297
        %v314 = vmul.f32 %v270, %v293
        %v315 = vmul.f32 %v271, %v297
        %v316 = vmul.f32 %v272, %v293
        %v317 = vmul.f32 %v273, %v297
        %v318 = vmul.f32 %v274, %v293
        %v319 = vmul.f32 %v275, %v297
        %v320 = vmul.f32 %v276, %v293
        %v321 = vmul.f32 %v277, %v297
        %v322 = vmul.f32 %v278, %v293
        %v323 = vmul.f32 %v279, %v297
        %v324 = vmul.f32 %v280, %v293
        %v325 = vmul.f32 %v281, %v297
        %v326 = vmul.f32 %v282, %v293
        %v327 = vmul.f32 %v283, %v297
        %v328 = vmul.f32 %v284, %v293
        %v329 = vmul.f32 %v285, %v297
        %v330 = vmul.f32 %v286, %v293
        %v331 = vmul.f32 %v287, %v297
        %v332 = vld [vmem:[%s2] sm:$0x3]
        %v334 = vlaneseq
        %v335 = vshrl.u32 %v334, 7
        %v336 = vsub.s32 0, %v335
        %v337 = vrot.slane %v332, %v336
        %v338 = vlaneseq
        %v339 = vshrl.u32 %v338, 7
        %v340 = vsub.s32 1, %v339
        %v341 = vrot.slane %v332, %v340
        %v344 = vadd.f32 %v300, %v337
        %v345 = vadd.f32 %v301, %v341
        %v346 = vadd.f32 %v302, %v337
        %v347 = vadd.f32 %v303, %v341
        %v348 = vadd.f32 %v304, %v337
        %v349 = vadd.f32 %v305, %v341
        %v350 = vadd.f32 %v306, %v337
        %v351 = vadd.f32 %v307, %v341
        %v352 = vadd.f32 %v308, %v337
        %v353 = vadd.f32 %v309, %v341
        %v354 = vadd.f32 %v310, %v337
        %v355 = vadd.f32 %v311, %v341
        %v356 = vadd.f32 %v312, %v337
        %v357 = vadd.f32 %v313, %v341
        %v358 = vadd.f32 %v314, %v337
        %v359 = vadd.f32 %v315, %v341
        %v360 = vadd.f32 %v316, %v337
        %v361 = vadd.f32 %v317, %v341
        %v362 = vadd.f32 %v318, %v337
        %v363 = vadd.f32 %v319, %v341
        %v364 = vadd.f32 %v320, %v337
        %v365 = vadd.f32 %v321, %v341
        %v366 = vadd.f32 %v322, %v337
        %v367 = vadd.f32 %v323, %v341
        %v368 = vadd.f32 %v324, %v337
        %v369 = vadd.f32 %v325, %v341
        %v370 = vadd.f32 %v326, %v337
        %v371 = vadd.f32 %v327, %v341
        %v372 = vadd.f32 %v328, %v337
        %v373 = vadd.f32 %v329, %v341
        %v374 = vadd.f32 %v330, %v337
        %v375 = vadd.f32 %v331, %v341
        %v376 = vmax.f32 %v344, 0.0
        %v377 = vmax.f32 %v345, 0.0
        %v378 = vmax.f32 %v346, 0.0
        %v379 = vmax.f32 %v347, 0.0
        %v380 = vmax.f32 %v348, 0.0
        %v381 = vmax.f32 %v349, 0.0
        %v382 = vmax.f32 %v350, 0.0
        %v383 = vmax.f32 %v351, 0.0
        %v384 = vmax.f32 %v352, 0.0
        %v385 = vmax.f32 %v353, 0.0
        %v386 = vmax.f32 %v354, 0.0
        %v387 = vmax.f32 %v355, 0.0
        %v388 = vmax.f32 %v356, 0.0
        %v389 = vmax.f32 %v357, 0.0
        %v390 = vmax.f32 %v358, 0.0
        %v391 = vmax.f32 %v359, 0.0
        %v392 = vmax.f32 %v360, 0.0
        %v393 = vmax.f32 %v361, 0.0
        %v394 = vmax.f32 %v362, 0.0
        %v395 = vmax.f32 %v363, 0.0
        %v396 = vmax.f32 %v364, 0.0
        %v397 = vmax.f32 %v365, 0.0
        %v398 = vmax.f32 %v366, 0.0
        %v399 = vmax.f32 %v367, 0.0
        %v400 = vmax.f32 %v368, 0.0
        %v401 = vmax.f32 %v369, 0.0
        %v402 = vmax.f32 %v370, 0.0
        %v403 = vmax.f32 %v371, 0.0
        %v404 = vmax.f32 %v372, 0.0
        %v405 = vmax.f32 %v373, 0.0
        %v406 = vmax.f32 %v374, 0.0
        %v407 = vmax.f32 %v375, 0.0
        %v408 = vld [vmem:[%s3] sm:$0xff]
        %v409 = vld [vmem:[%s3 + $0x8] sm:$0xff]
        %v410 = vld [vmem:[%s3 + $0x10] sm:$0xff]
        %v411 = vld [vmem:[%s3 + $0x18] sm:$0xff]
        %v412 = vld [vmem:[%s3 + $0x20] sm:$0xff]
        %v413 = vld [vmem:[%s3 + $0x28] sm:$0xff]
        %v414 = vld [vmem:[%s3 + $0x30] sm:$0xff]
        %v415 = vld [vmem:[%s3 + $0x38] sm:$0xff]
        %v416 = vld [vmem:[%s3 + $0x40] sm:$0xff]
        %v417 = vld [vmem:[%s3 + $0x48] sm:$0xff]
        %v418 = vld [vmem:[%s3 + $0x50] sm:$0xff]
        %v419 = vld [vmem:[%s3 + $0x58] sm:$0xff]
        %v420 = vld [vmem:[%s3 + $0x60] sm:$0xff]
        %v421 = vld [vmem:[%s3 + $0x68] sm:$0xff]
        %v422 = vld [vmem:[%s3 + $0x70] sm:$0xff]
        %v423 = vld [vmem:[%s3 + $0x78] sm:$0xff]
        %v424 = vld [vmem:[%s3 + $0x80] sm:$0xff]
        %v425 = vld [vmem:[%s3 + $0x88] sm:$0xff]
        %v426 = vld [vmem:[%s3 + $0x90] sm:$0xff]
        %v427 = vld [vmem:[%s3 + $0x98] sm:$0xff]
        %v428 = vld [vmem:[%s3 + $0xa0] sm:$0xff]
        %v429 = vld [vmem:[%s3 + $0xa8] sm:$0xff]
        %v430 = vld [vmem:[%s3 + $0xb0] sm:$0xff]
        %v431 = vld [vmem:[%s3 + $0xb8] sm:$0xff]
        %v432 = vld [vmem:[%s3 + $0xc0] sm:$0xff]
        %v433 = vld [vmem:[%s3 + $0xc8] sm:$0xff]
        %v434 = vld [vmem:[%s3 + $0xd0] sm:$0xff]
        %v435 = vld [vmem:[%s3 + $0xd8] sm:$0xff]
        %v436 = vld [vmem:[%s3 + $0xe0] sm:$0xff]
        %v437 = vld [vmem:[%s3 + $0xe8] sm:$0xff]
        %v438 = vld [vmem:[%s3 + $0xf0] sm:$0xff]
        %v439 = vld [vmem:[%s3 + $0xf8] sm:$0xff]
        %v440 = vld [vmem:[%s4] sm:$0x1]
        %v442 = vlaneseq
        %v443 = vshrl.u32 %v442, 7
        %v444 = vsub.s32 0, %v443
        %v445 = vrot.slane %v440, %v444
        %447 = vmatprep.subr.mxu0 0.0
        %448 = vmatpush1.msra.mxu0 %v423
        %449 = vmatprep.subr.mxu0 0.0
        %450 = vmatpush1.msra.mxu0 %v422
        %451 = vmatprep.subr.mxu0 0.0
        %452 = vmatpush1.msra.mxu0 %v421
        %453 = vmatprep.subr.mxu0 0.0
        %454 = vmatpush1.msra.mxu0 %v420
        %455 = vmatprep.subr.mxu0 0.0
        %456 = vmatpush1.msra.mxu0 %v419
        %457 = vmatprep.subr.mxu0 0.0
        %458 = vmatpush1.msra.mxu0 %v418
        %459 = vmatprep.subr.mxu0 0.0
        %460 = vmatpush1.msra.mxu0 %v417
        %461 = vmatprep.subr.mxu0 0.0
        %462 = vmatpush1.msra.mxu0 %v416
        %463 = vmatprep.subr.mxu0 0.0
        %464 = vmatpush1.msra.mxu0 %v415
        %465 = vmatprep.subr.mxu0 0.0
        %466 = vmatpush1.msra.mxu0 %v414
        %467 = vmatprep.subr.mxu0 0.0
        %468 = vmatpush1.msra.mxu0 %v413
        %469 = vmatprep.subr.mxu0 0.0
        %470 = vmatpush1.msra.mxu0 %v412
        %471 = vmatprep.subr.mxu0 0.0
        %472 = vmatpush1.msra.mxu0 %v411
        %473 = vmatprep.subr.mxu0 0.0
        %474 = vmatpush1.msra.mxu0 %v410
        %475 = vmatprep.subr.mxu0 0.0
        %476 = vmatpush1.msra.mxu0 %v409
        %477 = vmatprep.subr.mxu0 0.0
        %478 = vmatpush1.msra.mxu0 %v408
        %479 = vmatprep.subr.mxu0 0.0
        %480 = vmatpush2.msra.mxu0 %v439
        %481 = vmatprep.subr.mxu0 0.0
        %482 = vmatpush2.msra.mxu0 %v438
        %483 = vmatprep.subr.mxu0 0.0
        %484 = vmatpush2.msra.mxu0 %v437
        %485 = vmatprep.subr.mxu0 0.0
        %486 = vmatpush2.msra.mxu0 %v436
        %487 = vmatprep.subr.mxu0 0.0
        %488 = vmatpush2.msra.mxu0 %v435
        %489 = vmatprep.subr.mxu0 0.0
        %490 = vmatpush2.msra.mxu0 %v434
        %491 = vmatprep.subr.mxu0 0.0
        %492 = vmatpush2.msra.mxu0 %v433
        %493 = vmatprep.subr.mxu0 0.0
        %494 = vmatpush2.msra.mxu0 %v432
        %495 = vmatprep.subr.mxu0 0.0
        %496 = vmatpush2.msra.mxu0 %v431
        %497 = vmatprep.subr.mxu0 0.0
        %498 = vmatpush2.msra.mxu0 %v430
        %499 = vmatprep.subr.mxu0 0.0
        %500 = vmatpush2.msra.mxu0 %v429
        %501 = vmatprep.subr.mxu0 0.0
        %502 = vmatpush2.msra.mxu0 %v428
        %503 = vmatprep.subr.mxu0 0.0
        %504 = vmatpush2.msra.mxu0 %v427
        %505 = vmatprep.subr.mxu0 0.0
        %506 = vmatpush2.msra.mxu0 %v426
        %507 = vmatprep.subr.mxu0 0.0
        %508 = vmatpush2.msra.mxu0 %v425
        %509 = vmatprep.subr.mxu0 0.0
        %510 = vmatpush2.msra.mxu0 %v424
        %511 = vmatprep.mubr.f32.mxu0 %v377
        %512 = vmatmul.mubr.f32.gmra.mxu0 %v376
        %v513 = vpop.f32.mrf.mxu0
        %v514 = vadd.f32 %v445, %v513
        %v515 = vpop.f32.mrf.mxu0
        %516 = vmatprep.mubr.f32.mxu0 %v379
        %517 = vmatmul.mubr.f32.gmra.mxu0 %v378
        %v518 = vpop.f32.mrf.mxu0
        %v519 = vadd.f32 %v445, %v518
        %v520 = vpop.f32.mrf.mxu0
        %521 = vmatprep.mubr.f32.mxu0 %v381
        %522 = vmatmul.mubr.f32.gmra.mxu0 %v380
        %v523 = vpop.f32.mrf.mxu0
        %v524 = vadd.f32 %v445, %v523
        %v525 = vpop.f32.mrf.mxu0
        %526 = vmatprep.mubr.f32.mxu0 %v383
        %527 = vmatmul.mubr.f32.gmra.mxu0 %v382
        %v528 = vpop.f32.mrf.mxu0
        %v529 = vadd.f32 %v445, %v528
        %v530 = vpop.f32.mrf.mxu0
        %531 = vmatprep.mubr.f32.mxu0 %v385
        %532 = vmatmul.mubr.f32.gmra.mxu0 %v384
        %v533 = vpop.f32.mrf.mxu0
        %v534 = vadd.f32 %v445, %v533
        %v535 = vpop.f32.mrf.mxu0
        %536 = vmatprep.mubr.f32.mxu0 %v387
        %537 = vmatmul.mubr.f32.gmra.mxu0 %v386
        %v538 = vpop.f32.mrf.mxu0
        %v539 = vadd.f32 %v445, %v538
        %v540 = vpop.f32.mrf.mxu0
        %541 = vmatprep.mubr.f32.mxu0 %v389
        %542 = vmatmul.mubr.f32.gmra.mxu0 %v388
        %v543 = vpop.f32.mrf.mxu0
        %v544 = vadd.f32 %v445, %v543
        %v545 = vpop.f32.mrf.mxu0
        %546 = vmatprep.mubr.f32.mxu0 %v391
        %547 = vmatmul.mubr.f32.gmra.mxu0 %v390
        %v548 = vpop.f32.mrf.mxu0
        %v549 = vadd.f32 %v445, %v548
        %v550 = vpop.f32.mrf.mxu0
        %551 = vmatprep.mubr.f32.mxu0 %v393
        %552 = vmatmul.mubr.f32.gmra.mxu0 %v392
        %v553 = vpop.f32.mrf.mxu0
        %v554 = vadd.f32 %v445, %v553
        %v555 = vpop.f32.mrf.mxu0
        %556 = vmatprep.mubr.f32.mxu0 %v395
        %557 = vmatmul.mubr.f32.gmra.mxu0 %v394
        %v558 = vpop.f32.mrf.mxu0
        %v559 = vadd.f32 %v445, %v558
        %v560 = vpop.f32.mrf.mxu0
        %561 = vmatprep.mubr.f32.mxu0 %v397
        %562 = vmatmul.mubr.f32.gmra.mxu0 %v396
        %v563 = vpop.f32.mrf.mxu0
        %v564 = vadd.f32 %v445, %v563
        %v565 = vpop.f32.mrf.mxu0
        %566 = vmatprep.mubr.f32.mxu0 %v399
        %567 = vmatmul.mubr.f32.gmra.mxu0 %v398
        %v568 = vpop.f32.mrf.mxu0
        %v569 = vadd.f32 %v445, %v568
        %v570 = vpop.f32.mrf.mxu0
        %571 = vmatprep.mubr.f32.mxu0 %v401
        %572 = vmatmul.mubr.f32.gmra.mxu0 %v400
        %v573 = vpop.f32.mrf.mxu0
        %v574 = vadd.f32 %v445, %v573
        %v575 = vpop.f32.mrf.mxu0
        %576 = vmatprep.mubr.f32.mxu0 %v403
        %577 = vmatmul.mubr.f32.gmra.mxu0 %v402
        %v578 = vpop.f32.mrf.mxu0
        %v579 = vadd.f32 %v445, %v578
        %v580 = vpop.f32.mrf.mxu0
        %581 = vmatprep.mubr.f32.mxu0 %v405
        %582 = vmatmul.mubr.f32.gmra.mxu0 %v404
        %v583 = vpop.f32.mrf.mxu0
        %v584 = vadd.f32 %v445, %v583
        %v585 = vpop.f32.mrf.mxu0
        %586 = vmatprep.mubr.f32.mxu0 %v407
        %587 = vmatmul.mubr.f32.gmra.mxu0 %v406
        %v588 = vpop.f32.mrf.mxu0
        %v589 = vadd.f32 %v445, %v588
        %v590 = vpop.f32.mrf.mxu0
        %591 = vdwg.mxu0
        %592 = vxpose.xlu0.b32.start [1/16] %v514, 128
        %593 = vxpose.xlu0.b32.cont [2/16] %v519, 128
        %594 = vxpose.xlu0.b32.cont [3/16] %v524, 128
        %595 = vxpose.xlu0.b32.cont [4/16] %v529, 128
        %596 = vxpose.xlu0.b32.cont [5/16] %v534, 128
        %597 = vxpose.xlu0.b32.cont [6/16] %v539, 128
        %598 = vxpose.xlu0.b32.cont [7/16] %v544, 128
        %599 = vxpose.xlu0.b32.cont [8/16] %v549, 128
        %600 = vxpose.xlu0.b32.cont [9/16] %v554, 128
        %601 = vxpose.xlu0.b32.cont [10/16] %v559, 128
        %602 = vxpose.xlu0.b32.cont [11/16] %v564, 128
        %603 = vxpose.xlu0.b32.cont [12/16] %v569, 128
        %604 = vxpose.xlu0.b32.cont [13/16] %v574, 128
        %605 = vxpose.xlu0.b32.cont [14/16] %v579, 128
        %606 = vxpose.xlu0.b32.cont [15/16] %v584, 128
        %607 = vxpose.xlu0.b32.end [16/16] %v589, 128
        %v608 = vpop.trf.xlu0
        %v609 = vpop.trf.xlu0
        %v610 = vpop.trf.xlu0
        %v611 = vpop.trf.xlu0
        %v612 = vpop.trf.xlu0
        %v613 = vpop.trf.xlu0
        %v614 = vpop.trf.xlu0
        %v615 = vpop.trf.xlu0
        %v616 = vpop.trf.xlu0
        %v617 = vpop.trf.xlu0
        %v618 = vpop.trf.xlu0
        %v619 = vpop.trf.xlu0
        %v620 = vpop.trf.xlu0
        %v621 = vpop.trf.xlu0
        %v622 = vpop.trf.xlu0
        %v623 = vpop.trf.xlu0
        %624 = vst [vmem:[%s244] sm:$0xff] %v608
        %625 = vst [vmem:[%s244 + $0x8] sm:$0xff] %v609
        %626 = vst [vmem:[%s244 + $0x10] sm:$0xff] %v610
        %627 = vst [vmem:[%s244 + $0x18] sm:$0xff] %v611
        %628 = vst [vmem:[%s244 + $0x20] sm:$0xff] %v612
        %629 = vst [vmem:[%s244 + $0x28] sm:$0xff] %v613
        %630 = vst [vmem:[%s244 + $0x30] sm:$0xff] %v614
        %631 = vst [vmem:[%s244 + $0x38] sm:$0xff] %v615
        %632 = vst [vmem:[%s244 + $0x40] sm:$0xff] %v616
        %633 = vst [vmem:[%s244 + $0x48] sm:$0xff] %v617
        %634 = vst [vmem:[%s244 + $0x50] sm:$0xff] %v618
        %635 = vst [vmem:[%s244 + $0x58] sm:$0xff] %v619
        %636 = vst [vmem:[%s244 + $0x60] sm:$0xff] %v620
        %637 = vst [vmem:[%s244 + $0x68] sm:$0xff] %v621
        %638 = vst [vmem:[%s244 + $0x70] sm:$0xff] %v622
        %639 = vst [vmem:[%s244 + $0x78] sm:$0xff] %v623
        %s640 = sand.u32 %s153, 1
        %s641 = scalar_lea.sflag [#allocation3], %s640
        %s642 = sand.u32 %s153, 1
        %s643 = smul.addr %s642, 128
        %s644 = scalar_lea.vmem [#allocation2], %s643
        // Predicated region
        $region41: #{attentional_propagation_forward.3} parent=39 // pred_check
          %p645 = pneg %p163
        $region42: #{attentional_propagation_forward.3} parent=39 // pred_check_branch
          %647 = sbr.rel (%p645) target = $region44
        $region43: #{attentional_propagation_forward.3} parent=39 // pred_region
          %s649 = ssub.s32 2048, 2048
          %650 = vsyncadd %s641, %s649
          %s651 = smul.addr %s23, 16
          %s652 = sadd.s32 %s24, %s651
          %s653 = smul.addr %s652, 128
          %s654 = scalar_lea.hbm %s5, %s653
          %s655 = sshll.u32 %s644, 4
          %s656 = int_to_ptr.vmem [resolvable:$true] %s655
          %661 = dma.vmem_to_hbm [thread:$0]  %s656, 2048, %s654, %s641, 128, 128, 8
        $region44: #{attentional_propagation_forward.3} parent=39 // pred_fallthru
          _
      $region40: #{attentional_propagation_forward.3} parent=5 // pred_fallthru
        _
      %p662 = scmp.le.s32.totalorder 2, %s14
      // Predicated region
      $region45: #{attentional_propagation_forward.3} parent=5 // pred_check
        %p663 = pneg %p662
      $region46: #{attentional_propagation_forward.3} parent=5 // pred_check_branch
        %665 = sbr.rel (%p663) target = $region48
      $region47: #{attentional_propagation_forward.3} parent=5 // pred_region
        %s666 = ssub.s32 %s14, 2
        // Predicated region
        $region49: #{attentional_propagation_forward.3} parent=47 // pred_check
          %p667 = pneg %p169
        $region50: #{attentional_propagation_forward.3} parent=47 // pred_check_branch
          %669 = sbr.rel (%p667) target = $region52
        $region51: #{attentional_propagation_forward.3} parent=47 // pred_region
          %s670 = sand.u32 %s154, 1
          %s671 = scalar_lea.sflag [#allocation3], %s670
          %s672 = sand.u32 %s154, 1
          %s673 = smul.addr %s672, 128
          %s674 = scalar_lea.vmem [#allocation2], %s673
          %675 = dma.done %s671, 2048
        $region52: #{attentional_propagation_forward.3} parent=47 // pred_fallthru
          _
      $region48: #{attentional_propagation_forward.3} parent=5 // pred_fallthru
        _
    $region6: #{attentional_propagation_forward.3} parent=1 // loop_footer
      %s18 = sadd.s32 1, %s14
    $region7: #{attentional_propagation_forward.3} parent=1 // loop_footer_branch
      %13 = sbr.rel target = $region3
    $region8: #{attentional_propagation_forward.3} parent=1 // loop_exit
      _
    %676 = vsyncpa [#allocation3], 1
    %s677 = scalar_lea.sflag [#allocation3], 1
    %678 = vsyncpa %s677, 1

// kernel: attentional_propagation_forward.2
$region0: #{attentional_propagation_forward.2}
  #allocation0 [shape = 'u32[]', space=smem, size = 0x4, offset = 0x4, fixed_abs, tag = 'smem constant byte address 0x4 - core index']
  #allocation1 [shape = 'u32[144,128]{1,0:T(1,128)}', space=vmem, size = 0x12000, scoped, tag = 'internal scratch']
  %s0 = inlined_call_operand.vmem [shape: f32[2,128,128], index: 0, kind: input, shape index: {}]
  %s1 = inlined_call_operand.vmem [shape: f32[2,128,128], index: 1, kind: input, shape index: {}]
  %s2 = inlined_call_operand.vmem [shape: f32[128,128], index: 2, kind: input, shape index: {}]
  %s3 = inlined_call_operand.vmem [shape: f32[1,128], index: 3, kind: input, shape index: {}]
  %s4 = inlined_call_operand.vmem [shape: f32[128,128], index: 4, kind: input, shape index: {}]
  %s5 = inlined_call_operand.vmem [shape: f32[128,1], index: 5, kind: input, shape index: {}]
  %s6 = inlined_call_operand.vmem [shape: f32[128,128], index: 6, kind: input, shape index: {}]
  %s7 = inlined_call_operand.vmem [shape: f32[1,128], index: 7, kind: input, shape index: {}]
  %s8 = inlined_call_operand.vmem [shape: f32[128,128], index: 8, kind: input, shape index: {}]
  %s9 = inlined_call_operand.vmem [shape: f32[1,128], index: 9, kind: input, shape index: {}]
  %s10 = inlined_call_operand.vmem [shape: f32[128,256], index: 10, kind: input, shape index: {}]
  %s11 = inlined_call_operand.vmem [shape: f32[128,256], index: 11, kind: input, shape index: {}]
  %s12 = inlined_call_operand.vmem [shape: f32[1,256], index: 12, kind: input, shape index: {}]
  %s13 = inlined_call_operand.vmem [shape: f32[2,128,256], index: 13, kind: output, shape index: {0}]
  %s14 = inlined_call_operand.vmem [shape: f32[2,1,256], index: 14, kind: output, shape index: {1}]
  %s15 = inlined_call_operand.vmem [shape: f32[2,1,256], index: 15, kind: output, shape index: {2}]
  %16 = xla_tuple %s13, %s14, %s15
  %s17 = sld [smem:[#allocation0]]
  $region101: #{attentional_propagation_forward.2} parent=0
    _
  %s19 = ssub.s32 1, %s17
  %s20 = scalar_select 0, %s19, %s17
  loop: start=0, step=1, limit=4
  $region2: #{attentional_propagation_forward.2} parent=0 // loop_pre_header
    _
  $region3: #{attentional_propagation_forward.2} parent=0 // loop_header
    %s22 = sphi 0, %s26
    %p23 = scmp.ge.s32.totalorder %s22, 4
    %s32 = sphi 0, %s34
    %s35 = sphi 0, %s32
    %s36 = sphi 0, %s35
    %s52 = sphi 0, %s36
    %s58 = sphi 0, %s60
    %s61 = sphi 0, %s58
    %s62 = sphi 0, %s61
    %s78 = sphi 0, %s62
    %s82 = sphi 0, %s82
    %s84 = sphi 0, %s82
    %s85 = sphi 0, %s84
    %s99 = sphi 0, %s85
    %s103 = sphi 0, %s103
    %s105 = sphi 0, %s103
    %s106 = sphi 0, %s105
    %s120 = sphi 0, %s106
    %s124 = sphi 0, %s124
    %s126 = sphi 0, %s124
    %s127 = sphi 0, %s126
    %s141 = sphi 0, %s127
    %s145 = sphi 0, %s145
    %s147 = sphi 0, %s145
    %s148 = sphi 0, %s147
    %s162 = sphi 0, %s148
    %s166 = sphi 0, %s166
    %s168 = sphi 0, %s166
    %s169 = sphi 0, %s168
    %s183 = sphi 0, %s169
    %s187 = sphi 0, %s187
    %s189 = sphi 0, %s187
    %s190 = sphi 0, %s189
    %s204 = sphi 0, %s190
    %s208 = sphi 0, %s208
    %s210 = sphi 0, %s208
    %s211 = sphi 0, %s210
    %s225 = sphi 0, %s211
    %s229 = sphi 0, %s229
    %s231 = sphi 0, %s229
    %s232 = sphi 0, %s231
    %s246 = sphi 0, %s232
    %s250 = sphi 0, %s250
    %s252 = sphi 0, %s250
    %s253 = sphi 0, %s252
    %s267 = sphi 0, %s253
    %s271 = sphi 0, %s271
    %s273 = sphi 0, %s271
    %s274 = sphi 0, %s273
    %s288 = sphi 0, %s274
    %s292 = sphi 0, %s292
    %s294 = sphi 0, %s292
    %s295 = sphi 0, %s294
    %s309 = sphi 0, %s295
    %s315 = sphi 0, %s317
    %s318 = sphi 0, %s315
    %s319 = sphi 0, %s318
    %s335 = sphi 0, %s319
    %s341 = sphi 0, %s343
    %s344 = sphi 0, %s341
    %s345 = sphi 0, %s344
    %s361 = sphi 0, %s345
    %s367 = sphi 0, %s369
    %s370 = sphi 0, %s367
    %s371 = sphi 0, %s370
    %s387 = sphi 0, %s371
  $region4: #{attentional_propagation_forward.2} parent=0 // loop_header_branch
    %25 = sbr.rel (%p23) target = $region8
  $region5: #{attentional_propagation_forward.2} parent=0 // loop_body
    %s27 = ssub.s32 %s22, 1
    %s28 = ssub.s32 %s22, 2
    %s29 = sadd.s32 %s22, 1
    %s30 = ssub.s32 %s22, %s29
    %p31 = scmp.eq.s32.totalorder %s30, 0
    %s33 = sadd.s32 %s32, 1
    %s34 = scalar_select %p31, %s32, %s33
    %p37 = pneg %p31
    %p38 = scmp.eq.s32.totalorder %s22, 1
    %p39 = por %p37, %p38
    %p40 = scmp.ne.s32.totalorder %s32, %s35
    %p41 = scmp.eq.s32.totalorder %s22, 0
    %p42 = por %p40, %p41
    %p43 = scmp.ne.s32.totalorder %s32, %s35
    %p44 = scmp.eq.s32.totalorder %s27, 1
    %p45 = por %p43, %p44
    %p46 = scmp.ne.s32.totalorder %s35, %s36
    %p47 = scmp.eq.s32.totalorder %s27, 0
    %p48 = por %p46, %p47
    %p49 = scmp.ne.s32.totalorder %s35, %s36
    %p50 = scmp.eq.s32.totalorder %s28, 1
    %p51 = por %p49, %p50
    %p53 = scmp.ne.s32.totalorder %s36, %s52
    %p54 = scmp.eq.s32.totalorder %s28, 0
    %p55 = por %p53, %p54
    %s56 = ssub.s32 %s22, %s29
    %p57 = scmp.eq.s32.totalorder %s56, 0
    %s59 = sadd.s32 %s58, 1
    %s60 = scalar_select %p57, %s58, %s59
    %p63 = pneg %p57
    %p64 = scmp.eq.s32.totalorder %s22, 1
    %p65 = por %p63, %p64
    %p66 = scmp.ne.s32.totalorder %s58, %s61
    %p67 = scmp.eq.s32.totalorder %s22, 0
    %p68 = por %p66, %p67
    %p69 = scmp.ne.s32.totalorder %s58, %s61
    %p70 = scmp.eq.s32.totalorder %s27, 1
    %p71 = por %p69, %p70
    %p72 = scmp.ne.s32.totalorder %s61, %s62
    %p73 = scmp.eq.s32.totalorder %s27, 0
    %p74 = por %p72, %p73
    %p75 = scmp.ne.s32.totalorder %s61, %s62
    %p76 = scmp.eq.s32.totalorder %s28, 1
    %p77 = por %p75, %p76
    %p79 = scmp.ne.s32.totalorder %s62, %s78
    %p80 = scmp.eq.s32.totalorder %s28, 0
    %p81 = por %p79, %p80
    %s83 = sadd.s32 %s82, 1
    %p86 = scmp.eq.s32.totalorder %s22, 1
    %p87 = scmp.ne.s32.totalorder %s82, %s84
    %p88 = scmp.eq.s32.totalorder %s22, 0
    %p89 = por %p87, %p88
    %p90 = scmp.ne.s32.totalorder %s82, %s84
    %p91 = scmp.eq.s32.totalorder %s27, 1
    %p92 = por %p90, %p91
    %p93 = scmp.ne.s32.totalorder %s84, %s85
    %p94 = scmp.eq.s32.totalorder %s27, 0
    %p95 = por %p93, %p94
    %p96 = scmp.ne.s32.totalorder %s84, %s85
    %p97 = scmp.eq.s32.totalorder %s28, 1
    %p98 = por %p96, %p97
    %p100 = scmp.ne.s32.totalorder %s85, %s99
    %p101 = scmp.eq.s32.totalorder %s28, 0
    %p102 = por %p100, %p101
    %s104 = sadd.s32 %s103, 1
    %p107 = scmp.eq.s32.totalorder %s22, 1
    %p108 = scmp.ne.s32.totalorder %s103, %s105
    %p109 = scmp.eq.s32.totalorder %s22, 0
    %p110 = por %p108, %p109
    %p111 = scmp.ne.s32.totalorder %s103, %s105
    %p112 = scmp.eq.s32.totalorder %s27, 1
    %p113 = por %p111, %p112
    %p114 = scmp.ne.s32.totalorder %s105, %s106
    %p115 = scmp.eq.s32.totalorder %s27, 0
    %p116 = por %p114, %p115
    %p117 = scmp.ne.s32.totalorder %s105, %s106
    %p118 = scmp.eq.s32.totalorder %s28, 1
    %p119 = por %p117, %p118
    %p121 = scmp.ne.s32.totalorder %s106, %s120
    %p122 = scmp.eq.s32.totalorder %s28, 0
    %p123 = por %p121, %p122
    %s125 = sadd.s32 %s124, 1
    %p128 = scmp.eq.s32.totalorder %s22, 1
    %p129 = scmp.ne.s32.totalorder %s124, %s126
    %p130 = scmp.eq.s32.totalorder %s22, 0
    %p131 = por %p129, %p130
    %p132 = scmp.ne.s32.totalorder %s124, %s126
    %p133 = scmp.eq.s32.totalorder %s27, 1
    %p134 = por %p132, %p133
    %p135 = scmp.ne.s32.totalorder %s126, %s127
    %p136 = scmp.eq.s32.totalorder %s27, 0
    %p137 = por %p135, %p136
    %p138 = scmp.ne.s32.totalorder %s126, %s127
    %p139 = scmp.eq.s32.totalorder %s28, 1
    %p140 = por %p138, %p139
    %p142 = scmp.ne.s32.totalorder %s127, %s141
    %p143 = scmp.eq.s32.totalorder %s28, 0
    %p144 = por %p142, %p143
    %s146 = sadd.s32 %s145, 1
    %p149 = scmp.eq.s32.totalorder %s22, 1
    %p150 = scmp.ne.s32.totalorder %s145, %s147
    %p151 = scmp.eq.s32.totalorder %s22, 0
    %p152 = por %p150, %p151
    %p153 = scmp.ne.s32.totalorder %s145, %s147
    %p154 = scmp.eq.s32.totalorder %s27, 1
    %p155 = por %p153, %p154
    %p156 = scmp.ne.s32.totalorder %s147, %s148
    %p157 = scmp.eq.s32.totalorder %s27, 0
    %p158 = por %p156, %p157
    %p159 = scmp.ne.s32.totalorder %s147, %s148
    %p160 = scmp.eq.s32.totalorder %s28, 1
    %p161 = por %p159, %p160
    %p163 = scmp.ne.s32.totalorder %s148, %s162
    %p164 = scmp.eq.s32.totalorder %s28, 0
    %p165 = por %p163, %p164
    %s167 = sadd.s32 %s166, 1
    %p170 = scmp.eq.s32.totalorder %s22, 1
    %p171 = scmp.ne.s32.totalorder %s166, %s168
    %p172 = scmp.eq.s32.totalorder %s22, 0
    %p173 = por %p171, %p172
    %p174 = scmp.ne.s32.totalorder %s166, %s168
    %p175 = scmp.eq.s32.totalorder %s27, 1
    %p176 = por %p174, %p175
    %p177 = scmp.ne.s32.totalorder %s168, %s169
    %p178 = scmp.eq.s32.totalorder %s27, 0
    %p179 = por %p177, %p178
    %p180 = scmp.ne.s32.totalorder %s168, %s169
    %p181 = scmp.eq.s32.totalorder %s28, 1
    %p182 = por %p180, %p181
    %p184 = scmp.ne.s32.totalorder %s169, %s183
    %p185 = scmp.eq.s32.totalorder %s28, 0
    %p186 = por %p184, %p185
    %s188 = sadd.s32 %s187, 1
    %p191 = scmp.eq.s32.totalorder %s22, 1
    %p192 = scmp.ne.s32.totalorder %s187, %s189
    %p193 = scmp.eq.s32.totalorder %s22, 0
    %p194 = por %p192, %p193
    %p195 = scmp.ne.s32.totalorder %s187, %s189
    %p196 = scmp.eq.s32.totalorder %s27, 1
    %p197 = por %p195, %p196
    %p198 = scmp.ne.s32.totalorder %s189, %s190
    %p199 = scmp.eq.s32.totalorder %s27, 0
    %p200 = por %p198, %p199
    %p201 = scmp.ne.s32.totalorder %s189, %s190
    %p202 = scmp.eq.s32.totalorder %s28, 1
    %p203 = por %p201, %p202
    %p205 = scmp.ne.s32.totalorder %s190, %s204
    %p206 = scmp.eq.s32.totalorder %s28, 0
    %p207 = por %p205, %p206
    %s209 = sadd.s32 %s208, 1
    %p212 = scmp.eq.s32.totalorder %s22, 1
    %p213 = scmp.ne.s32.totalorder %s208, %s210
    %p214 = scmp.eq.s32.totalorder %s22, 0
    %p215 = por %p213, %p214
    %p216 = scmp.ne.s32.totalorder %s208, %s210
    %p217 = scmp.eq.s32.totalorder %s27, 1
    %p218 = por %p216, %p217
    %p219 = scmp.ne.s32.totalorder %s210, %s211
    %p220 = scmp.eq.s32.totalorder %s27, 0
    %p221 = por %p219, %p220
    %p222 = scmp.ne.s32.totalorder %s210, %s211
    %p223 = scmp.eq.s32.totalorder %s28, 1
    %p224 = por %p222, %p223
    %p226 = scmp.ne.s32.totalorder %s211, %s225
    %p227 = scmp.eq.s32.totalorder %s28, 0
    %p228 = por %p226, %p227
    %s230 = sadd.s32 %s229, 1
    %p233 = scmp.eq.s32.totalorder %s22, 1
    %p234 = scmp.ne.s32.totalorder %s229, %s231
    %p235 = scmp.eq.s32.totalorder %s22, 0
    %p236 = por %p234, %p235
    %p237 = scmp.ne.s32.totalorder %s229, %s231
    %p238 = scmp.eq.s32.totalorder %s27, 1
    %p239 = por %p237, %p238
    %p240 = scmp.ne.s32.totalorder %s231, %s232
    %p241 = scmp.eq.s32.totalorder %s27, 0
    %p242 = por %p240, %p241
    %p243 = scmp.ne.s32.totalorder %s231, %s232
    %p244 = scmp.eq.s32.totalorder %s28, 1
    %p245 = por %p243, %p244
    %p247 = scmp.ne.s32.totalorder %s232, %s246
    %p248 = scmp.eq.s32.totalorder %s28, 0
    %p249 = por %p247, %p248
    %s251 = sadd.s32 %s250, 1
    %p254 = scmp.eq.s32.totalorder %s22, 1
    %p255 = scmp.ne.s32.totalorder %s250, %s252
    %p256 = scmp.eq.s32.totalorder %s22, 0
    %p257 = por %p255, %p256
    %p258 = scmp.ne.s32.totalorder %s250, %s252
    %p259 = scmp.eq.s32.totalorder %s27, 1
    %p260 = por %p258, %p259
    %p261 = scmp.ne.s32.totalorder %s252, %s253
    %p262 = scmp.eq.s32.totalorder %s27, 0
    %p263 = por %p261, %p262
    %p264 = scmp.ne.s32.totalorder %s252, %s253
    %p265 = scmp.eq.s32.totalorder %s28, 1
    %p266 = por %p264, %p265
    %p268 = scmp.ne.s32.totalorder %s253, %s267
    %p269 = scmp.eq.s32.totalorder %s28, 0
    %p270 = por %p268, %p269
    %s272 = sadd.s32 %s271, 1
    %p275 = scmp.eq.s32.totalorder %s22, 1
    %p276 = scmp.ne.s32.totalorder %s271, %s273
    %p277 = scmp.eq.s32.totalorder %s22, 0
    %p278 = por %p276, %p277
    %p279 = scmp.ne.s32.totalorder %s271, %s273
    %p280 = scmp.eq.s32.totalorder %s27, 1
    %p281 = por %p279, %p280
    %p282 = scmp.ne.s32.totalorder %s273, %s274
    %p283 = scmp.eq.s32.totalorder %s27, 0
    %p284 = por %p282, %p283
    %p285 = scmp.ne.s32.totalorder %s273, %s274
    %p286 = scmp.eq.s32.totalorder %s28, 1
    %p287 = por %p285, %p286
    %p289 = scmp.ne.s32.totalorder %s274, %s288
    %p290 = scmp.eq.s32.totalorder %s28, 0
    %p291 = por %p289, %p290
    %s293 = sadd.s32 %s292, 1
    %p296 = scmp.eq.s32.totalorder %s22, 1
    %p297 = scmp.ne.s32.totalorder %s292, %s294
    %p298 = scmp.eq.s32.totalorder %s22, 0
    %p299 = por %p297, %p298
    %p300 = scmp.ne.s32.totalorder %s292, %s294
    %p301 = scmp.eq.s32.totalorder %s27, 1
    %p302 = por %p300, %p301
    %p303 = scmp.ne.s32.totalorder %s294, %s295
    %p304 = scmp.eq.s32.totalorder %s27, 0
    %p305 = por %p303, %p304
    %p306 = scmp.ne.s32.totalorder %s294, %s295
    %p307 = scmp.eq.s32.totalorder %s28, 1
    %p308 = por %p306, %p307
    %p310 = scmp.ne.s32.totalorder %s295, %s309
    %p311 = scmp.eq.s32.totalorder %s28, 0
    %p312 = por %p310, %p311
    %s313 = ssub.s32 %s22, %s29
    %p314 = scmp.eq.s32.totalorder %s313, 0
    %s316 = sadd.s32 %s315, 1
    %s317 = scalar_select %p314, %s315, %s316
    %p320 = pneg %p314
    %p321 = scmp.eq.s32.totalorder %s22, 1
    %p322 = por %p320, %p321
    %p323 = scmp.ne.s32.totalorder %s315, %s318
    %p324 = scmp.eq.s32.totalorder %s22, 0
    %p325 = por %p323, %p324
    %p326 = scmp.ne.s32.totalorder %s315, %s318
    %p327 = scmp.eq.s32.totalorder %s27, 1
    %p328 = por %p326, %p327
    %p329 = scmp.ne.s32.totalorder %s318, %s319
    %p330 = scmp.eq.s32.totalorder %s27, 0
    %p331 = por %p329, %p330
    %p332 = scmp.ne.s32.totalorder %s318, %s319
    %p333 = scmp.eq.s32.totalorder %s28, 1
    %p334 = por %p332, %p333
    %p336 = scmp.ne.s32.totalorder %s319, %s335
    %p337 = scmp.eq.s32.totalorder %s28, 0
    %p338 = por %p336, %p337
    %s339 = ssub.s32 %s22, %s29
    %p340 = scmp.eq.s32.totalorder %s339, 0
    %s342 = sadd.s32 %s341, 1
    %s343 = scalar_select %p340, %s341, %s342
    %p346 = pneg %p340
    %p347 = scmp.eq.s32.totalorder %s22, 1
    %p348 = por %p346, %p347
    %p349 = scmp.ne.s32.totalorder %s341, %s344
    %p350 = scmp.eq.s32.totalorder %s22, 0
    %p351 = por %p349, %p350
    %p352 = scmp.ne.s32.totalorder %s341, %s344
    %p353 = scmp.eq.s32.totalorder %s27, 1
    %p354 = por %p352, %p353
    %p355 = scmp.ne.s32.totalorder %s344, %s345
    %p356 = scmp.eq.s32.totalorder %s27, 0
    %p357 = por %p355, %p356
    %p358 = scmp.ne.s32.totalorder %s344, %s345
    %p359 = scmp.eq.s32.totalorder %s28, 1
    %p360 = por %p358, %p359
    %p362 = scmp.ne.s32.totalorder %s345, %s361
    %p363 = scmp.eq.s32.totalorder %s28, 0
    %p364 = por %p362, %p363
    %s365 = ssub.s32 %s22, %s29
    %p366 = scmp.eq.s32.totalorder %s365, 0
    %s368 = sadd.s32 %s367, 1
    %s369 = scalar_select %p366, %s367, %s368
    %p372 = pneg %p366
    %p373 = scmp.eq.s32.totalorder %s22, 1
    %p374 = por %p372, %p373
    %p375 = scmp.ne.s32.totalorder %s367, %s370
    %p376 = scmp.eq.s32.totalorder %s22, 0
    %p377 = por %p375, %p376
    %p378 = scmp.ne.s32.totalorder %s367, %s370
    %p379 = scmp.eq.s32.totalorder %s27, 1
    %p380 = por %p378, %p379
    %p381 = scmp.ne.s32.totalorder %s370, %s371
    %p382 = scmp.eq.s32.totalorder %s27, 0
    %p383 = por %p381, %p382
    %p384 = scmp.ne.s32.totalorder %s370, %s371
    %p385 = scmp.eq.s32.totalorder %s28, 1
    %p386 = por %p384, %p385
    %p388 = scmp.ne.s32.totalorder %s371, %s387
    %p389 = scmp.eq.s32.totalorder %s28, 0
    %p390 = por %p388, %p389
    %p391 = scmp.le.s32.totalorder 1, %s22
    %p392 = scmp.lt.s32.totalorder %s22, 3
    %p393 = pnand %p391, %p392
    %p394 = pneg %p393
    // Predicated region
    $region9: #{attentional_propagation_forward.2} parent=5 // pred_check
      _
    $region10: #{attentional_propagation_forward.2} parent=5 // pred_check_branch
      %396 = sbr.rel (%p393) target = $region12
    $region11: #{attentional_propagation_forward.2} parent=5 // pred_region
      %s397 = ssub.s32 %s22, 1
      // Predicated region
      $region13: #{attentional_propagation_forward.2} parent=11 // pred_check
        %p398 = pneg %p95
      $region14: #{attentional_propagation_forward.2} parent=11 // pred_check_branch
        %400 = sbr.rel (%p398) target = $region16
      $region15: #{attentional_propagation_forward.2} parent=11 // pred_region
        _
      $region16: #{attentional_propagation_forward.2} parent=11 // pred_fallthru
        _
      // Predicated region
      $region17: #{attentional_propagation_forward.2} parent=11 // pred_check
        %p401 = pneg %p116
      $region18: #{attentional_propagation_forward.2} parent=11 // pred_check_branch
        %403 = sbr.rel (%p401) target = $region20
      $region19: #{attentional_propagation_forward.2} parent=11 // pred_region
        _
      $region20: #{attentional_propagation_forward.2} parent=11 // pred_fallthru
        _
      // Predicated region
      $region21: #{attentional_propagation_forward.2} parent=11 // pred_check
        %p404 = pneg %p137
      $region22: #{attentional_propagation_forward.2} parent=11 // pred_check_branch
        %406 = sbr.rel (%p404) target = $region24
      $region23: #{attentional_propagation_forward.2} parent=11 // pred_region
        _
      $region24: #{attentional_propagation_forward.2} parent=11 // pred_fallthru
        _
      // Predicated region
      $region25: #{attentional_propagation_forward.2} parent=11 // pred_check
        %p407 = pneg %p158
      $region26: #{attentional_propagation_forward.2} parent=11 // pred_check_branch
        %409 = sbr.rel (%p407) target = $region28
      $region27: #{attentional_propagation_forward.2} parent=11 // pred_region
        _
      $region28: #{attentional_propagation_forward.2} parent=11 // pred_fallthru
        _
      // Predicated region
      $region29: #{attentional_propagation_forward.2} parent=11 // pred_check
        %p410 = pneg %p179
      $region30: #{attentional_propagation_forward.2} parent=11 // pred_check_branch
        %412 = sbr.rel (%p410) target = $region32
      $region31: #{attentional_propagation_forward.2} parent=11 // pred_region
        _
      $region32: #{attentional_propagation_forward.2} parent=11 // pred_fallthru
        _
      // Predicated region
      $region33: #{attentional_propagation_forward.2} parent=11 // pred_check
        %p413 = pneg %p200
      $region34: #{attentional_propagation_forward.2} parent=11 // pred_check_branch
        %415 = sbr.rel (%p413) target = $region36
      $region35: #{attentional_propagation_forward.2} parent=11 // pred_region
        _
      $region36: #{attentional_propagation_forward.2} parent=11 // pred_fallthru
        _
      // Predicated region
      $region37: #{attentional_propagation_forward.2} parent=11 // pred_check
        %p416 = pneg %p221
      $region38: #{attentional_propagation_forward.2} parent=11 // pred_check_branch
        %418 = sbr.rel (%p416) target = $region40
      $region39: #{attentional_propagation_forward.2} parent=11 // pred_region
        _
      $region40: #{attentional_propagation_forward.2} parent=11 // pred_fallthru
        _
      // Predicated region
      $region41: #{attentional_propagation_forward.2} parent=11 // pred_check
        %p419 = pneg %p242
      $region42: #{attentional_propagation_forward.2} parent=11 // pred_check_branch
        %421 = sbr.rel (%p419) target = $region44
      $region43: #{attentional_propagation_forward.2} parent=11 // pred_region
        _
      $region44: #{attentional_propagation_forward.2} parent=11 // pred_fallthru
        _
      // Predicated region
      $region45: #{attentional_propagation_forward.2} parent=11 // pred_check
        %p422 = pneg %p263
      $region46: #{attentional_propagation_forward.2} parent=11 // pred_check_branch
        %424 = sbr.rel (%p422) target = $region48
      $region47: #{attentional_propagation_forward.2} parent=11 // pred_region
        _
      $region48: #{attentional_propagation_forward.2} parent=11 // pred_fallthru
        _
      // Predicated region
      $region49: #{attentional_propagation_forward.2} parent=11 // pred_check
        %p425 = pneg %p284
      $region50: #{attentional_propagation_forward.2} parent=11 // pred_check_branch
        %427 = sbr.rel (%p425) target = $region52
      $region51: #{attentional_propagation_forward.2} parent=11 // pred_region
        _
      $region52: #{attentional_propagation_forward.2} parent=11 // pred_fallthru
        _
      // Predicated region
      $region53: #{attentional_propagation_forward.2} parent=11 // pred_check
        %p428 = pneg %p305
      $region54: #{attentional_propagation_forward.2} parent=11 // pred_check_branch
        %430 = sbr.rel (%p428) target = $region56
      $region55: #{attentional_propagation_forward.2} parent=11 // pred_region
        _
      $region56: #{attentional_propagation_forward.2} parent=11 // pred_fallthru
        _
    $region12: #{attentional_propagation_forward.2} parent=5 // pred_fallthru
      _
    %p431 = scmp.lt.s32.totalorder %s22, 2
    // Predicated region
    $region57: #{attentional_propagation_forward.2} parent=5 // pred_check
      %p432 = pneg %p431
    $region58: #{attentional_propagation_forward.2} parent=5 // pred_check_branch
      %434 = sbr.rel (%p432) target = $region60
    $region59: #{attentional_propagation_forward.2} parent=5 // pred_region
      // Predicated region
      $region61: #{attentional_propagation_forward.2} parent=59 // pred_check
        %p435 = pneg %p42
      $region62: #{attentional_propagation_forward.2} parent=59 // pred_check_branch
        %437 = sbr.rel (%p435) target = $region64
      $region63: #{attentional_propagation_forward.2} parent=59 // pred_region
        %p438 = scmp.lt.s32.totalorder %s22, 1
        %s439 = scalar_select %p438, %s22, 1
        %s440 = smul.addr %s439, 16
        %s441 = smul.addr %s440, 8
        %s442 = scalar_lea.vmem %s0, %s441
      $region64: #{attentional_propagation_forward.2} parent=59 // pred_fallthru
        _
      // Predicated region
      $region65: #{attentional_propagation_forward.2} parent=59 // pred_check
        %p443 = pneg %p68
      $region66: #{attentional_propagation_forward.2} parent=59 // pred_check_branch
        %445 = sbr.rel (%p443) target = $region68
      $region67: #{attentional_propagation_forward.2} parent=59 // pred_region
        %p446 = scmp.lt.s32.totalorder %s22, 1
        %s447 = scalar_select %p446, %s22, 1
        %s448 = smul.addr %s447, 16
        %s449 = smul.addr %s448, 8
        %s450 = scalar_lea.vmem %s1, %s449
      $region68: #{attentional_propagation_forward.2} parent=59 // pred_fallthru
        _
    $region60: #{attentional_propagation_forward.2} parent=5 // pred_fallthru
      _
    %p451 = scmp.le.s32.totalorder 1, %s22
    %p452 = scmp.lt.s32.totalorder %s22, 3
    %p453 = pnand %p451, %p452
    %p454 = pneg %p453
    // Predicated region
    $region69: #{attentional_propagation_forward.2} parent=5 // pred_check
      _
    $region70: #{attentional_propagation_forward.2} parent=5 // pred_check_branch
      %456 = sbr.rel (%p453) target = $region72
    $region71: #{attentional_propagation_forward.2} parent=5 // pred_region
      %s457 = ssub.s32 %s22, 1
      %p458 = scmp.lt.s32.totalorder %s27, 1
      %s459 = scalar_select %p458, %s27, 1
      %s460 = smul.addr %s459, 16
      %s461 = smul.addr %s460, 8
      %s462 = scalar_lea.vmem %s0, %s461
      %p463 = pneg %p48
      %p464 = pneg %p45
      %p465 = scmp.lt.s32.totalorder %s27, 1
      %s466 = scalar_select %p465, %s27, 1
      %s467 = smul.addr %s466, 16
      %s468 = smul.addr %s467, 8
      %s469 = scalar_lea.vmem %s1, %s468
      %p470 = pneg %p74
      %p471 = pneg %p71
      %p472 = pneg %p95
      %p473 = pneg %p92
      %p474 = pneg %p116
      %p475 = pneg %p113
      %p476 = pneg %p137
      %p477 = pneg %p134
      %p478 = pneg %p158
      %p479 = pneg %p155
      %p480 = pneg %p179
      %p481 = pneg %p176
      %p482 = pneg %p200
      %p483 = pneg %p197
      %p484 = pneg %p221
      %p485 = pneg %p218
      %p486 = pneg %p242
      %p487 = pneg %p239
      %p488 = pneg %p263
      %p489 = pneg %p260
      %p490 = pneg %p284
      %p491 = pneg %p281
      %p492 = pneg %p305
      %p493 = pneg %p302
      %p494 = pneg %p331
      %p495 = pneg %p328
      %p496 = scmp.lt.s32.totalorder %s27, 1
      %s497 = scalar_select %p496, %s27, 1
      %s498 = smul.addr %s497, 32
      %s499 = smul.addr %s498, 8
      %s500 = scalar_lea.vmem %s13, %s499
      %p501 = pneg %p357
      %p502 = pneg %p354
      %p503 = scmp.lt.s32.totalorder %s27, 1
      %s504 = scalar_select %p503, %s27, 1
      %s505 = smul.addr %s504, 2
      %s506 = scalar_lea.vmem %s14, %s505
      %p507 = pneg %p383
      %p508 = pneg %p380
      %p509 = scmp.lt.s32.totalorder %s27, 1
      %s510 = scalar_select %p509, %s27, 1
      %s511 = smul.addr %s510, 2
      %s512 = scalar_lea.vmem %s15, %s511
      %p513 = scmp.lt.s32.totalorder %s27, 1
      %s514 = scalar_select %p513, %s27, 1
      %s515 = smul.addr %s514, 16
      %s516 = smul.addr %s515, 8
      %s517 = scalar_lea.vmem %s0, %s516
      %p518 = scmp.lt.s32.totalorder %s27, 1
      %s519 = scalar_select %p518, %s27, 1
      %s520 = smul.addr %s519, 16
      %s521 = smul.addr %s520, 8
      %s522 = scalar_lea.vmem %s1, %s521
      %p523 = scmp.lt.s32.totalorder %s27, 1
      %s524 = scalar_select %p523, %s27, 1
      %s525 = smul.addr %s524, 32
      %s526 = smul.addr %s525, 8
      %s527 = scalar_lea.vmem %s13, %s526
      %p528 = scmp.lt.s32.totalorder %s27, 1
      %s529 = scalar_select %p528, %s27, 1
      %s530 = smul.addr %s529, 2
      %s531 = scalar_lea.vmem %s14, %s530
      %p532 = scmp.lt.s32.totalorder %s27, 1
      %s533 = scalar_select %p532, %s27, 1
      %s534 = smul.addr %s533, 2
      %s535 = scalar_lea.vmem %s15, %s534
      %v536 = vld [vmem:[%s517] sm:$0xff]
      %v537 = vld [vmem:[%s517 + $0x8] sm:$0xff]
      %v538 = vld [vmem:[%s517 + $0x10] sm:$0xff]
      %v539 = vld [vmem:[%s517 + $0x18] sm:$0xff]
      %v540 = vld [vmem:[%s517 + $0x20] sm:$0xff]
      %v541 = vld [vmem:[%s517 + $0x28] sm:$0xff]
      %v542 = vld [vmem:[%s517 + $0x30] sm:$0xff]
      %v543 = vld [vmem:[%s517 + $0x38] sm:$0xff]
      %v544 = vld [vmem:[%s517 + $0x40] sm:$0xff]
      %v545 = vld [vmem:[%s517 + $0x48] sm:$0xff]
      %v546 = vld [vmem:[%s517 + $0x50] sm:$0xff]
      %v547 = vld [vmem:[%s517 + $0x58] sm:$0xff]
      %v548 = vld [vmem:[%s517 + $0x60] sm:$0xff]
      %v549 = vld [vmem:[%s517 + $0x68] sm:$0xff]
      %v550 = vld [vmem:[%s517 + $0x70] sm:$0xff]
      %v551 = vld [vmem:[%s517 + $0x78] sm:$0xff]
      %v552 = vld [vmem:[%s522] sm:$0xff]
      %v553 = vld [vmem:[%s522 + $0x8] sm:$0xff]
      %v554 = vld [vmem:[%s522 + $0x10] sm:$0xff]
      %v555 = vld [vmem:[%s522 + $0x18] sm:$0xff]
      %v556 = vld [vmem:[%s522 + $0x20] sm:$0xff]
      %v557 = vld [vmem:[%s522 + $0x28] sm:$0xff]
      %v558 = vld [vmem:[%s522 + $0x30] sm:$0xff]
      %v559 = vld [vmem:[%s522 + $0x38] sm:$0xff]
      %v560 = vld [vmem:[%s522 + $0x40] sm:$0xff]
      %v561 = vld [vmem:[%s522 + $0x48] sm:$0xff]
      %v562 = vld [vmem:[%s522 + $0x50] sm:$0xff]
      %v563 = vld [vmem:[%s522 + $0x58] sm:$0xff]
      %v564 = vld [vmem:[%s522 + $0x60] sm:$0xff]
      %v565 = vld [vmem:[%s522 + $0x68] sm:$0xff]
      %v566 = vld [vmem:[%s522 + $0x70] sm:$0xff]
      %v567 = vld [vmem:[%s522 + $0x78] sm:$0xff]
      %568 = vxpose.xlu0.b32.start [1/16] %v536, 128
      %569 = vxpose.xlu0.b32.cont [2/16] %v537, 128
      %570 = vxpose.xlu0.b32.cont [3/16] %v538, 128
      %571 = vxpose.xlu0.b32.cont [4/16] %v539, 128
      %572 = vxpose.xlu0.b32.cont [5/16] %v540, 128
      %573 = vxpose.xlu0.b32.cont [6/16] %v541, 128
      %574 = vxpose.xlu0.b32.cont [7/16] %v542, 128
      %575 = vxpose.xlu0.b32.cont [8/16] %v543, 128
      %576 = vxpose.xlu0.b32.cont [9/16] %v544, 128
      %577 = vxpose.xlu0.b32.cont [10/16] %v545, 128
      %578 = vxpose.xlu0.b32.cont [11/16] %v546, 128
      %579 = vxpose.xlu0.b32.cont [12/16] %v547, 128
      %580 = vxpose.xlu0.b32.cont [13/16] %v548, 128
      %581 = vxpose.xlu0.b32.cont [14/16] %v549, 128
      %582 = vxpose.xlu0.b32.cont [15/16] %v550, 128
      %583 = vxpose.xlu0.b32.end [16/16] %v551, 128
      %v584 = vpop.trf.xlu0
      %v585 = vpop.trf.xlu0
      %v586 = vpop.trf.xlu0
      %v587 = vpop.trf.xlu0
      %v588 = vpop.trf.xlu0
      %v589 = vpop.trf.xlu0
      %v590 = vpop.trf.xlu0
      %v591 = vpop.trf.xlu0
      %v592 = vpop.trf.xlu0
      %v593 = vpop.trf.xlu0
      %v594 = vpop.trf.xlu0
      %v595 = vpop.trf.xlu0
      %v596 = vpop.trf.xlu0
      %v597 = vpop.trf.xlu0
      %v598 = vpop.trf.xlu0
      %v599 = vpop.trf.xlu0
      %600 = vxpose.xlu0.b32.start [1/16] %v552, 128
      %601 = vxpose.xlu0.b32.cont [2/16] %v553, 128
      %602 = vxpose.xlu0.b32.cont [3/16] %v554, 128
      %603 = vxpose.xlu0.b32.cont [4/16] %v555, 128
      %604 = vxpose.xlu0.b32.cont [5/16] %v556, 128
      %605 = vxpose.xlu0.b32.cont [6/16] %v557, 128
      %606 = vxpose.xlu0.b32.cont [7/16] %v558, 128
      %607 = vxpose.xlu0.b32.cont [8/16] %v559, 128
      %608 = vxpose.xlu0.b32.cont [9/16] %v560, 128
      %609 = vxpose.xlu0.b32.cont [10/16] %v561, 128
      %610 = vxpose.xlu0.b32.cont [11/16] %v562, 128
      %611 = vxpose.xlu0.b32.cont [12/16] %v563, 128
      %612 = vxpose.xlu0.b32.cont [13/16] %v564, 128
      %613 = vxpose.xlu0.b32.cont [14/16] %v565, 128
      %614 = vxpose.xlu0.b32.cont [15/16] %v566, 128
      %615 = vxpose.xlu0.b32.end [16/16] %v567, 128
      %v616 = vpop.trf.xlu0
      %v617 = vpop.trf.xlu0
      %v618 = vpop.trf.xlu0
      %v619 = vpop.trf.xlu0
      %v620 = vpop.trf.xlu0
      %v621 = vpop.trf.xlu0
      %v622 = vpop.trf.xlu0
      %v623 = vpop.trf.xlu0
      %v624 = vpop.trf.xlu0
      %v625 = vpop.trf.xlu0
      %v626 = vpop.trf.xlu0
      %v627 = vpop.trf.xlu0
      %v628 = vpop.trf.xlu0
      %v629 = vpop.trf.xlu0
      %v630 = vpop.trf.xlu0
      %v631 = vpop.trf.xlu0
      %v632 = vld [vmem:[%s2] sm:$0xff]
      %v633 = vld [vmem:[%s2 + $0x8] sm:$0xff]
      %v634 = vld [vmem:[%s2 + $0x10] sm:$0xff]
      %v635 = vld [vmem:[%s2 + $0x18] sm:$0xff]
      %v636 = vld [vmem:[%s2 + $0x20] sm:$0xff]
      %v637 = vld [vmem:[%s2 + $0x28] sm:$0xff]
      %v638 = vld [vmem:[%s2 + $0x30] sm:$0xff]
      %v639 = vld [vmem:[%s2 + $0x38] sm:$0xff]
      %v640 = vld [vmem:[%s2 + $0x40] sm:$0xff]
      %v641 = vld [vmem:[%s2 + $0x48] sm:$0xff]
      %v642 = vld [vmem:[%s2 + $0x50] sm:$0xff]
      %v643 = vld [vmem:[%s2 + $0x58] sm:$0xff]
      %v644 = vld [vmem:[%s2 + $0x60] sm:$0xff]
      %v645 = vld [vmem:[%s2 + $0x68] sm:$0xff]
      %v646 = vld [vmem:[%s2 + $0x70] sm:$0xff]
      %v647 = vld [vmem:[%s2 + $0x78] sm:$0xff]
      %v648 = vld [vmem:[%s3] sm:$0x1]
      %v650 = vlaneseq
      %v651 = vshrl.u32 %v650, 7
      %v652 = vsub.s32 0, %v651
      %v653 = vrot.slane %v648, %v652
      %655 = vmatprep.subr.mxu0 0.0
      %656 = vmatpush1.msra.mxu0 %v647
      %657 = vmatprep.subr.mxu0 0.0
      %658 = vmatpush1.msra.mxu0 %v646
      %659 = vmatprep.subr.mxu0 0.0
      %660 = vmatpush1.msra.mxu0 %v645
      %661 = vmatprep.subr.mxu0 0.0
      %662 = vmatpush1.msra.mxu0 %v644
      %663 = vmatprep.subr.mxu0 0.0
      %664 = vmatpush1.msra.mxu0 %v643
      %665 = vmatprep.subr.mxu0 0.0
      %666 = vmatpush1.msra.mxu0 %v642
      %667 = vmatprep.subr.mxu0 0.0
      %668 = vmatpush1.msra.mxu0 %v641
      %669 = vmatprep.subr.mxu0 0.0
      %670 = vmatpush1.msra.mxu0 %v640
      %671 = vmatprep.subr.mxu0 0.0
      %672 = vmatpush1.msra.mxu0 %v639
      %673 = vmatprep.subr.mxu0 0.0
      %674 = vmatpush1.msra.mxu0 %v638
      %675 = vmatprep.subr.mxu0 0.0
      %676 = vmatpush1.msra.mxu0 %v637
      %677 = vmatprep.subr.mxu0 0.0
      %678 = vmatpush1.msra.mxu0 %v636
      %679 = vmatprep.subr.mxu0 0.0
      %680 = vmatpush1.msra.mxu0 %v635
      %681 = vmatprep.subr.mxu0 0.0
      %682 = vmatpush1.msra.mxu0 %v634
      %683 = vmatprep.subr.mxu0 0.0
      %684 = vmatpush1.msra.mxu0 %v633
      %685 = vmatprep.subr.mxu0 0.0
      %686 = vmatpush1.msra.mxu0 %v632
      %687 = vmatprep.subr.mxu0 0.0
      %688 = vmatpush2.msra.mxu0 0.0
      %689 = vmatprep.subr.mxu0 0.0
      %690 = vmatpush2.msra.mxu0 0.0
      %691 = vmatprep.subr.mxu0 0.0
      %692 = vmatpush2.msra.mxu0 0.0
      %693 = vmatprep.subr.mxu0 0.0
      %694 = vmatpush2.msra.mxu0 0.0
      %695 = vmatprep.subr.mxu0 0.0
      %696 = vmatpush2.msra.mxu0 0.0
      %697 = vmatprep.subr.mxu0 0.0
      %698 = vmatpush2.msra.mxu0 0.0
      %699 = vmatprep.subr.mxu0 0.0
      %700 = vmatpush2.msra.mxu0 0.0
      %701 = vmatprep.subr.mxu0 0.0
      %702 = vmatpush2.msra.mxu0 0.0
      %703 = vmatprep.subr.mxu0 0.0
      %704 = vmatpush2.msra.mxu0 0.0
      %705 = vmatprep.subr.mxu0 0.0
      %706 = vmatpush2.msra.mxu0 0.0
      %707 = vmatprep.subr.mxu0 0.0
      %708 = vmatpush2.msra.mxu0 0.0
      %709 = vmatprep.subr.mxu0 0.0
      %710 = vmatpush2.msra.mxu0 0.0
      %711 = vmatprep.subr.mxu0 0.0
      %712 = vmatpush2.msra.mxu0 0.0
      %713 = vmatprep.subr.mxu0 0.0
      %714 = vmatpush2.msra.mxu0 0.0
      %715 = vmatprep.subr.mxu0 0.0
      %716 = vmatpush2.msra.mxu0 0.0
      %717 = vmatprep.subr.mxu0 0.0
      %718 = vmatpush2.msra.mxu0 0.0
      %719 = vmatprep.mubr.f32.mxu0 0.0
      %720 = vmatmul.mubr.f32.gmra.mxu0 %v584
      %v721 = vpop.f32.mrf.mxu0
      %v722 = vadd.f32 %v653, %v721
      %v723 = vpop.f32.mrf.mxu0
      %724 = vmatprep.mubr.f32.mxu0 0.0
      %725 = vmatmul.mubr.f32.gmra.mxu0 %v585
      %v726 = vpop.f32.mrf.mxu0
      %v727 = vadd.f32 %v653, %v726
      %v728 = vpop.f32.mrf.mxu0
      %729 = vmatprep.mubr.f32.mxu0 0.0
      %730 = vmatmul.mubr.f32.gmra.mxu0 %v586
      %v731 = vpop.f32.mrf.mxu0
      %v732 = vadd.f32 %v653, %v731
      %v733 = vpop.f32.mrf.mxu0
      %734 = vmatprep.mubr.f32.mxu0 0.0
      %735 = vmatmul.mubr.f32.gmra.mxu0 %v587
      %v736 = vpop.f32.mrf.mxu0
      %v737 = vadd.f32 %v653, %v736
      %v738 = vpop.f32.mrf.mxu0
      %739 = vmatprep.mubr.f32.mxu0 0.0
      %740 = vmatmul.mubr.f32.gmra.mxu0 %v588
      %v741 = vpop.f32.mrf.mxu0
      %v742 = vadd.f32 %v653, %v741
      %v743 = vpop.f32.mrf.mxu0
      %744 = vmatprep.mubr.f32.mxu0 0.0
      %745 = vmatmul.mubr.f32.gmra.mxu0 %v589
      %v746 = vpop.f32.mrf.mxu0
      %v747 = vadd.f32 %v653, %v746
      %v748 = vpop.f32.mrf.mxu0
      %749 = vmatprep.mubr.f32.mxu0 0.0
      %750 = vmatmul.mubr.f32.gmra.mxu0 %v590
      %v751 = vpop.f32.mrf.mxu0
      %v752 = vadd.f32 %v653, %v751
      %v753 = vpop.f32.mrf.mxu0
      %754 = vmatprep.mubr.f32.mxu0 0.0
      %755 = vmatmul.mubr.f32.gmra.mxu0 %v591
      %v756 = vpop.f32.mrf.mxu0
      %v757 = vadd.f32 %v653, %v756
      %v758 = vpop.f32.mrf.mxu0
      %759 = vmatprep.mubr.f32.mxu0 0.0
      %760 = vmatmul.mubr.f32.gmra.mxu0 %v592
      %v761 = vpop.f32.mrf.mxu0
      %v762 = vadd.f32 %v653, %v761
      %v763 = vpop.f32.mrf.mxu0
      %764 = vmatprep.mubr.f32.mxu0 0.0
      %765 = vmatmul.mubr.f32.gmra.mxu0 %v593
      %v766 = vpop.f32.mrf.mxu0
      %v767 = vadd.f32 %v653, %v766
      %v768 = vpop.f32.mrf.mxu0
      %769 = vmatprep.mubr.f32.mxu0 0.0
      %770 = vmatmul.mubr.f32.gmra.mxu0 %v594
      %v771 = vpop.f32.mrf.mxu0
      %v772 = vadd.f32 %v653, %v771
      %v773 = vpop.f32.mrf.mxu0
      %774 = vmatprep.mubr.f32.mxu0 0.0
      %775 = vmatmul.mubr.f32.gmra.mxu0 %v595
      %v776 = vpop.f32.mrf.mxu0
      %v777 = vadd.f32 %v653, %v776
      %v778 = vpop.f32.mrf.mxu0
      %779 = vmatprep.mubr.f32.mxu0 0.0
      %780 = vmatmul.mubr.f32.gmra.mxu0 %v596
      %v781 = vpop.f32.mrf.mxu0
      %v782 = vadd.f32 %v653, %v781
      %v783 = vpop.f32.mrf.mxu0
      %784 = vmatprep.mubr.f32.mxu0 0.0
      %785 = vmatmul.mubr.f32.gmra.mxu0 %v597
      %v786 = vpop.f32.mrf.mxu0
      %v787 = vadd.f32 %v653, %v786
      %v788 = vpop.f32.mrf.mxu0
      %789 = vmatprep.mubr.f32.mxu0 0.0
      %790 = vmatmul.mubr.f32.gmra.mxu0 %v598
      %v791 = vpop.f32.mrf.mxu0
      %v792 = vadd.f32 %v653, %v791
      %v793 = vpop.f32.mrf.mxu0
      %794 = vmatprep.mubr.f32.mxu0 0.0
      %795 = vmatmul.mubr.f32.gmra.mxu0 %v599
      %v796 = vpop.f32.mrf.mxu0
      %v797 = vadd.f32 %v653, %v796
      %v798 = vpop.f32.mrf.mxu0
      %799 = vdwg.mxu0
      %v800 = vmul.f32 %v722, 0.17677669
      %v801 = vmul.f32 %v727, 0.17677669
      %v802 = vmul.f32 %v732, 0.17677669
      %v803 = vmul.f32 %v737, 0.17677669
      %v804 = vmul.f32 %v742, 0.17677669
      %v805 = vmul.f32 %v747, 0.17677669
      %v806 = vmul.f32 %v752, 0.17677669
      %v807 = vmul.f32 %v757, 0.17677669
      %v808 = vmul.f32 %v762, 0.17677669
      %v809 = vmul.f32 %v767, 0.17677669
      %v810 = vmul.f32 %v772, 0.17677669
      %v811 = vmul.f32 %v777, 0.17677669
      %v812 = vmul.f32 %v782, 0.17677669
      %v813 = vmul.f32 %v787, 0.17677669
      %v814 = vmul.f32 %v792, 0.17677669
      %v815 = vmul.f32 %v797, 0.17677669
      %v816 = vld [vmem:[%s4] sm:$0xff]
      %v817 = vld [vmem:[%s4 + $0x8] sm:$0xff]
      %v818 = vld [vmem:[%s4 + $0x10] sm:$0xff]
      %v819 = vld [vmem:[%s4 + $0x18] sm:$0xff]
      %v820 = vld [vmem:[%s4 + $0x20] sm:$0xff]
      %v821 = vld [vmem:[%s4 + $0x28] sm:$0xff]
      %v822 = vld [vmem:[%s4 + $0x30] sm:$0xff]
      %v823 = vld [vmem:[%s4 + $0x38] sm:$0xff]
      %v824 = vld [vmem:[%s4 + $0x40] sm:$0xff]
      %v825 = vld [vmem:[%s4 + $0x48] sm:$0xff]
      %v826 = vld [vmem:[%s4 + $0x50] sm:$0xff]
      %v827 = vld [vmem:[%s4 + $0x58] sm:$0xff]
      %v828 = vld [vmem:[%s4 + $0x60] sm:$0xff]
      %v829 = vld [vmem:[%s4 + $0x68] sm:$0xff]
      %v830 = vld [vmem:[%s4 + $0x70] sm:$0xff]
      %v831 = vld [vmem:[%s4 + $0x78] sm:$0xff]
      %v832 = vld [vmem:[%s5] sm:$0xff]
      %v833 = vld [vmem:[%s5 + $0x8] sm:$0xff]
      %v834 = vld [vmem:[%s5 + $0x10] sm:$0xff]
      %v835 = vld [vmem:[%s5 + $0x18] sm:$0xff]
      %v836 = vld [vmem:[%s5 + $0x20] sm:$0xff]
      %v837 = vld [vmem:[%s5 + $0x28] sm:$0xff]
      %v838 = vld [vmem:[%s5 + $0x30] sm:$0xff]
      %v839 = vld [vmem:[%s5 + $0x38] sm:$0xff]
      %v840 = vld [vmem:[%s5 + $0x40] sm:$0xff]
      %v841 = vld [vmem:[%s5 + $0x48] sm:$0xff]
      %v842 = vld [vmem:[%s5 + $0x50] sm:$0xff]
      %v843 = vld [vmem:[%s5 + $0x58] sm:$0xff]
      %v844 = vld [vmem:[%s5 + $0x60] sm:$0xff]
      %v845 = vld [vmem:[%s5 + $0x68] sm:$0xff]
      %v846 = vld [vmem:[%s5 + $0x70] sm:$0xff]
      %v847 = vld [vmem:[%s5 + $0x78] sm:$0xff]
      %849 = vset.pattern.permute.xlu0 0
      %850 = vperm.xlu0 %849, %v832
      %v851 = vpop.permute.xlu0 %850
      %854 = vset.pattern.permute.xlu0 0
      %855 = vperm.xlu0 %854, %v833
      %v856 = vpop.permute.xlu0 %855
      %859 = vset.pattern.permute.xlu0 0
      %860 = vperm.xlu0 %859, %v834
      %v861 = vpop.permute.xlu0 %860
      %864 = vset.pattern.permute.xlu0 0
      %865 = vperm.xlu0 %864, %v835
      %v866 = vpop.permute.xlu0 %865
      %869 = vset.pattern.permute.xlu0 0
      %870 = vperm.xlu0 %869, %v836
      %v871 = vpop.permute.xlu0 %870
      %874 = vset.pattern.permute.xlu0 0
      %875 = vperm.xlu0 %874, %v837
      %v876 = vpop.permute.xlu0 %875
      %879 = vset.pattern.permute.xlu0 0
      %880 = vperm.xlu0 %879, %v838
      %v881 = vpop.permute.xlu0 %880
      %884 = vset.pattern.permute.xlu0 0
      %885 = vperm.xlu0 %884, %v839
      %v886 = vpop.permute.xlu0 %885
      %889 = vset.pattern.permute.xlu0 0
      %890 = vperm.xlu0 %889, %v840
      %v891 = vpop.permute.xlu0 %890
      %894 = vset.pattern.permute.xlu0 0
      %895 = vperm.xlu0 %894, %v841
      %v896 = vpop.permute.xlu0 %895
      %899 = vset.pattern.permute.xlu0 0
      %900 = vperm.xlu0 %899, %v842
      %v901 = vpop.permute.xlu0 %900
      %904 = vset.pattern.permute.xlu0 0
      %905 = vperm.xlu0 %904, %v843
      %v906 = vpop.permute.xlu0 %905
      %909 = vset.pattern.permute.xlu0 0
      %910 = vperm.xlu0 %909, %v844
      %v911 = vpop.permute.xlu0 %910
      %914 = vset.pattern.permute.xlu0 0
      %915 = vperm.xlu0 %914, %v845
      %v916 = vpop.permute.xlu0 %915
      %919 = vset.pattern.permute.xlu0 0
      %920 = vperm.xlu0 %919, %v846
      %v921 = vpop.permute.xlu0 %920
      %924 = vset.pattern.permute.xlu0 0
      %925 = vperm.xlu0 %924, %v847
      %v926 = vpop.permute.xlu0 %925
      %928 = vmatprep.subr.mxu0 0.0
      %929 = vmatpush1.msra.mxu0 %v567
      %930 = vmatprep.subr.mxu0 0.0
      %931 = vmatpush1.msra.mxu0 %v566
      %932 = vmatprep.subr.mxu0 0.0
      %933 = vmatpush1.msra.mxu0 %v565
      %934 = vmatprep.subr.mxu0 0.0
      %935 = vmatpush1.msra.mxu0 %v564
      %936 = vmatprep.subr.mxu0 0.0
      %937 = vmatpush1.msra.mxu0 %v563
      %938 = vmatprep.subr.mxu0 0.0
      %939 = vmatpush1.msra.mxu0 %v562
      %940 = vmatprep.subr.mxu0 0.0
      %941 = vmatpush1.msra.mxu0 %v561
      %942 = vmatprep.subr.mxu0 0.0
      %943 = vmatpush1.msra.mxu0 %v560
      %944 = vmatprep.subr.mxu0 0.0
      %945 = vmatpush1.msra.mxu0 %v559
      %946 = vmatprep.subr.mxu0 0.0
      %947 = vmatpush1.msra.mxu0 %v558
      %948 = vmatprep.subr.mxu0 0.0
      %949 = vmatpush1.msra.mxu0 %v557
      %950 = vmatprep.subr.mxu0 0.0
      %951 = vmatpush1.msra.mxu0 %v556
      %952 = vmatprep.subr.mxu0 0.0
      %953 = vmatpush1.msra.mxu0 %v555
      %954 = vmatprep.subr.mxu0 0.0
      %955 = vmatpush1.msra.mxu0 %v554
      %956 = vmatprep.subr.mxu0 0.0
      %957 = vmatpush1.msra.mxu0 %v553
      %958 = vmatprep.subr.mxu0 0.0
      %959 = vmatpush1.msra.mxu0 %v552
      %960 = vmatprep.subr.mxu0 0.0
      %961 = vmatpush2.msra.mxu0 0.0
      %962 = vmatprep.subr.mxu0 0.0
      %963 = vmatpush2.msra.mxu0 0.0
      %964 = vmatprep.subr.mxu0 0.0
      %965 = vmatpush2.msra.mxu0 0.0
      %966 = vmatprep.subr.mxu0 0.0
      %967 = vmatpush2.msra.mxu0 0.0
      %968 = vmatprep.subr.mxu0 0.0
      %969 = vmatpush2.msra.mxu0 0.0
      %970 = vmatprep.subr.mxu0 0.0
      %971 = vmatpush2.msra.mxu0 0.0
      %972 = vmatprep.subr.mxu0 0.0
      %973 = vmatpush2.msra.mxu0 0.0
      %974 = vmatprep.subr.mxu0 0.0
      %975 = vmatpush2.msra.mxu0 0.0
      %976 = vmatprep.subr.mxu0 0.0
      %977 = vmatpush2.msra.mxu0 0.0
      %978 = vmatprep.subr.mxu0 0.0
      %979 = vmatpush2.msra.mxu0 0.0
      %980 = vmatprep.subr.mxu0 0.0
      %981 = vmatpush2.msra.mxu0 0.0
      %982 = vmatprep.subr.mxu0 0.0
      %983 = vmatpush2.msra.mxu0 0.0
      %984 = vmatprep.subr.mxu0 0.0
      %985 = vmatpush2.msra.mxu0 0.0
      %986 = vmatprep.subr.mxu0 0.0
      %987 = vmatpush2.msra.mxu0 0.0
      %988 = vmatprep.subr.mxu0 0.0
      %989 = vmatpush2.msra.mxu0 0.0
      %990 = vmatprep.subr.mxu0 0.0
      %991 = vmatpush2.msra.mxu0 0.0
      %992 = vmatprep.mubr.f32.mxu0 0.0
      %993 = vmatmul.mubr.f32.gmra.mxu0 %v816
      %v994 = vpop.f32.mrf.mxu0
      %v995 = vadd.f32 %v851, %v994
      %v996 = vpop.f32.mrf.mxu0
      %997 = vmatprep.mubr.f32.mxu0 0.0
      %998 = vmatmul.mubr.f32.gmra.mxu0 %v817
      %v999 = vpop.f32.mrf.mxu0
      %v1000 = vadd.f32 %v856, %v999
      %v1001 = vpop.f32.mrf.mxu0
      %1002 = vmatprep.mubr.f32.mxu0 0.0
      %1003 = vmatmul.mubr.f32.gmra.mxu0 %v818
      %v1004 = vpop.f32.mrf.mxu0
      %v1005 = vadd.f32 %v861, %v1004
      %v1006 = vpop.f32.mrf.mxu0
      %1007 = vmatprep.mubr.f32.mxu0 0.0
      %1008 = vmatmul.mubr.f32.gmra.mxu0 %v819
      %v1009 = vpop.f32.mrf.mxu0
      %v1010 = vadd.f32 %v866, %v1009
      %v1011 = vpop.f32.mrf.mxu0
      %1012 = vmatprep.mubr.f32.mxu0 0.0
      %1013 = vmatmul.mubr.f32.gmra.mxu0 %v820
      %v1014 = vpop.f32.mrf.mxu0
      %v1015 = vadd.f32 %v871, %v1014
      %v1016 = vpop.f32.mrf.mxu0
      %1017 = vmatprep.mubr.f32.mxu0 0.0
      %1018 = vmatmul.mubr.f32.gmra.mxu0 %v821
      %v1019 = vpop.f32.mrf.mxu0
      %v1020 = vadd.f32 %v876, %v1019
      %v1021 = vpop.f32.mrf.mxu0
      %1022 = vmatprep.mubr.f32.mxu0 0.0
      %1023 = vmatmul.mubr.f32.gmra.mxu0 %v822
      %v1024 = vpop.f32.mrf.mxu0
      %v1025 = vadd.f32 %v881, %v1024
      %v1026 = vpop.f32.mrf.mxu0
      %1027 = vmatprep.mubr.f32.mxu0 0.0
      %1028 = vmatmul.mubr.f32.gmra.mxu0 %v823
      %v1029 = vpop.f32.mrf.mxu0
      %v1030 = vadd.f32 %v886, %v1029
      %v1031 = vpop.f32.mrf.mxu0
      %1032 = vmatprep.mubr.f32.mxu0 0.0
      %1033 = vmatmul.mubr.f32.gmra.mxu0 %v824
      %v1034 = vpop.f32.mrf.mxu0
      %v1035 = vadd.f32 %v891, %v1034
      %v1036 = vpop.f32.mrf.mxu0
      %1037 = vmatprep.mubr.f32.mxu0 0.0
      %1038 = vmatmul.mubr.f32.gmra.mxu0 %v825
      %v1039 = vpop.f32.mrf.mxu0
      %v1040 = vadd.f32 %v896, %v1039
      %v1041 = vpop.f32.mrf.mxu0
      %1042 = vmatprep.mubr.f32.mxu0 0.0
      %1043 = vmatmul.mubr.f32.gmra.mxu0 %v826
      %v1044 = vpop.f32.mrf.mxu0
      %v1045 = vadd.f32 %v901, %v1044
      %v1046 = vpop.f32.mrf.mxu0
      %1047 = vmatprep.mubr.f32.mxu0 0.0
      %1048 = vmatmul.mubr.f32.gmra.mxu0 %v827
      %v1049 = vpop.f32.mrf.mxu0
      %v1050 = vadd.f32 %v906, %v1049
      %v1051 = vpop.f32.mrf.mxu0
      %1052 = vmatprep.mubr.f32.mxu0 0.0
      %1053 = vmatmul.mubr.f32.gmra.mxu0 %v828
      %v1054 = vpop.f32.mrf.mxu0
      %v1055 = vadd.f32 %v911, %v1054
      %v1056 = vpop.f32.mrf.mxu0
      %1057 = vmatprep.mubr.f32.mxu0 0.0
      %1058 = vmatmul.mubr.f32.gmra.mxu0 %v829
      %v1059 = vpop.f32.mrf.mxu0
      %v1060 = vadd.f32 %v916, %v1059
      %v1061 = vpop.f32.mrf.mxu0
      %1062 = vmatprep.mubr.f32.mxu0 0.0
      %1063 = vmatmul.mubr.f32.gmra.mxu0 %v830
      %v1064 = vpop.f32.mrf.mxu0
      %v1065 = vadd.f32 %v921, %v1064
      %v1066 = vpop.f32.mrf.mxu0
      %1067 = vmatprep.mubr.f32.mxu0 0.0
      %1068 = vmatmul.mubr.f32.gmra.mxu0 %v831
      %v1069 = vpop.f32.mrf.mxu0
      %v1070 = vadd.f32 %v926, %v1069
      %v1071 = vpop.f32.mrf.mxu0
      %1072 = vdwg.mxu0
      %v1073 = vld [vmem:[%s6] sm:$0xff]
      %v1074 = vld [vmem:[%s6 + $0x8] sm:$0xff]
      %v1075 = vld [vmem:[%s6 + $0x10] sm:$0xff]
      %v1076 = vld [vmem:[%s6 + $0x18] sm:$0xff]
      %v1077 = vld [vmem:[%s6 + $0x20] sm:$0xff]
      %v1078 = vld [vmem:[%s6 + $0x28] sm:$0xff]
      %v1079 = vld [vmem:[%s6 + $0x30] sm:$0xff]
      %v1080 = vld [vmem:[%s6 + $0x38] sm:$0xff]
      %v1081 = vld [vmem:[%s6 + $0x40] sm:$0xff]
      %v1082 = vld [vmem:[%s6 + $0x48] sm:$0xff]
      %v1083 = vld [vmem:[%s6 + $0x50] sm:$0xff]
      %v1084 = vld [vmem:[%s6 + $0x58] sm:$0xff]
      %v1085 = vld [vmem:[%s6 + $0x60] sm:$0xff]
      %v1086 = vld [vmem:[%s6 + $0x68] sm:$0xff]
      %v1087 = vld [vmem:[%s6 + $0x70] sm:$0xff]
      %v1088 = vld [vmem:[%s6 + $0x78] sm:$0xff]
      %v1089 = vld [vmem:[%s7] sm:$0x1]
      %v1091 = vlaneseq
      %v1092 = vshrl.u32 %v1091, 7
      %v1093 = vsub.s32 0, %v1092
      %v1094 = vrot.slane %v1089, %v1093
      %1096 = vmatprep.subr.mxu0 0.0
      %1097 = vmatpush1.msra.mxu0 %v1088
      %1098 = vmatprep.subr.mxu0 0.0
      %1099 = vmatpush1.msra.mxu0 %v1087
      %1100 = vmatprep.subr.mxu0 0.0
      %1101 = vmatpush1.msra.mxu0 %v1086
      %1102 = vmatprep.subr.mxu0 0.0
      %1103 = vmatpush1.msra.mxu0 %v1085
      %1104 = vmatprep.subr.mxu0 0.0
      %1105 = vmatpush1.msra.mxu0 %v1084
      %1106 = vmatprep.subr.mxu0 0.0
      %1107 = vmatpush1.msra.mxu0 %v1083
      %1108 = vmatprep.subr.mxu0 0.0
      %1109 = vmatpush1.msra.mxu0 %v1082
      %1110 = vmatprep.subr.mxu0 0.0
      %1111 = vmatpush1.msra.mxu0 %v1081
      %1112 = vmatprep.subr.mxu0 0.0
      %1113 = vmatpush1.msra.mxu0 %v1080
      %1114 = vmatprep.subr.mxu0 0.0
      %1115 = vmatpush1.msra.mxu0 %v1079
      %1116 = vmatprep.subr.mxu0 0.0
      %1117 = vmatpush1.msra.mxu0 %v1078
      %1118 = vmatprep.subr.mxu0 0.0
      %1119 = vmatpush1.msra.mxu0 %v1077
      %1120 = vmatprep.subr.mxu0 0.0
      %1121 = vmatpush1.msra.mxu0 %v1076
      %1122 = vmatprep.subr.mxu0 0.0
      %1123 = vmatpush1.msra.mxu0 %v1075
      %1124 = vmatprep.subr.mxu0 0.0
      %1125 = vmatpush1.msra.mxu0 %v1074
      %1126 = vmatprep.subr.mxu0 0.0
      %1127 = vmatpush1.msra.mxu0 %v1073
      %1128 = vmatprep.subr.mxu0 0.0
      %1129 = vmatpush2.msra.mxu0 0.0
      %1130 = vmatprep.subr.mxu0 0.0
      %1131 = vmatpush2.msra.mxu0 0.0
      %1132 = vmatprep.subr.mxu0 0.0
      %1133 = vmatpush2.msra.mxu0 0.0
      %1134 = vmatprep.subr.mxu0 0.0
      %1135 = vmatpush2.msra.mxu0 0.0
      %1136 = vmatprep.subr.mxu0 0.0
      %1137 = vmatpush2.msra.mxu0 0.0
      %1138 = vmatprep.subr.mxu0 0.0
      %1139 = vmatpush2.msra.mxu0 0.0
      %1140 = vmatprep.subr.mxu0 0.0
      %1141 = vmatpush2.msra.mxu0 0.0
      %1142 = vmatprep.subr.mxu0 0.0
      %1143 = vmatpush2.msra.mxu0 0.0
      %1144 = vmatprep.subr.mxu0 0.0
      %1145 = vmatpush2.msra.mxu0 0.0
      %1146 = vmatprep.subr.mxu0 0.0
      %1147 = vmatpush2.msra.mxu0 0.0
      %1148 = vmatprep.subr.mxu0 0.0
      %1149 = vmatpush2.msra.mxu0 0.0
      %1150 = vmatprep.subr.mxu0 0.0
      %1151 = vmatpush2.msra.mxu0 0.0
      %1152 = vmatprep.subr.mxu0 0.0
      %1153 = vmatpush2.msra.mxu0 0.0
      %1154 = vmatprep.subr.mxu0 0.0
      %1155 = vmatpush2.msra.mxu0 0.0
      %1156 = vmatprep.subr.mxu0 0.0
      %1157 = vmatpush2.msra.mxu0 0.0
      %1158 = vmatprep.subr.mxu0 0.0
      %1159 = vmatpush2.msra.mxu0 0.0
      %1160 = vmatprep.mubr.f32.mxu0 0.0
      %1161 = vmatmul.mubr.f32.gmra.mxu0 %v616
      %v1162 = vpop.f32.mrf.mxu0
      %v1163 = vadd.f32 %v1094, %v1162
      %v1164 = vpop.f32.mrf.mxu0
      %1165 = vmatprep.mubr.f32.mxu0 0.0
      %1166 = vmatmul.mubr.f32.gmra.mxu0 %v617
      %v1167 = vpop.f32.mrf.mxu0
      %v1168 = vadd.f32 %v1094, %v1167
      %v1169 = vpop.f32.mrf.mxu0
      %1170 = vmatprep.mubr.f32.mxu0 0.0
      %1171 = vmatmul.mubr.f32.gmra.mxu0 %v618
      %v1172 = vpop.f32.mrf.mxu0
      %v1173 = vadd.f32 %v1094, %v1172
      %v1174 = vpop.f32.mrf.mxu0
      %1175 = vmatprep.mubr.f32.mxu0 0.0
      %1176 = vmatmul.mubr.f32.gmra.mxu0 %v619
      %v1177 = vpop.f32.mrf.mxu0
      %v1178 = vadd.f32 %v1094, %v1177
      %v1179 = vpop.f32.mrf.mxu0
      %1180 = vmatprep.mubr.f32.mxu0 0.0
      %1181 = vmatmul.mubr.f32.gmra.mxu0 %v620
      %v1182 = vpop.f32.mrf.mxu0
      %v1183 = vadd.f32 %v1094, %v1182
      %v1184 = vpop.f32.mrf.mxu0
      %1185 = vmatprep.mubr.f32.mxu0 0.0
      %1186 = vmatmul.mubr.f32.gmra.mxu0 %v621
      %v1187 = vpop.f32.mrf.mxu0
      %v1188 = vadd.f32 %v1094, %v1187
      %v1189 = vpop.f32.mrf.mxu0
      %1190 = vmatprep.mubr.f32.mxu0 0.0
      %1191 = vmatmul.mubr.f32.gmra.mxu0 %v622
      %v1192 = vpop.f32.mrf.mxu0
      %v1193 = vadd.f32 %v1094, %v1192
      %v1194 = vpop.f32.mrf.mxu0
      %1195 = vmatprep.mubr.f32.mxu0 0.0
      %1196 = vmatmul.mubr.f32.gmra.mxu0 %v623
      %v1197 = vpop.f32.mrf.mxu0
      %v1198 = vadd.f32 %v1094, %v1197
      %v1199 = vpop.f32.mrf.mxu0
      %1200 = vmatprep.mubr.f32.mxu0 0.0
      %1201 = vmatmul.mubr.f32.gmra.mxu0 %v624
      %v1202 = vpop.f32.mrf.mxu0
      %v1203 = vadd.f32 %v1094, %v1202
      %v1204 = vpop.f32.mrf.mxu0
      %1205 = vmatprep.mubr.f32.mxu0 0.0
      %1206 = vmatmul.mubr.f32.gmra.mxu0 %v625
      %v1207 = vpop.f32.mrf.mxu0
      %v1208 = vadd.f32 %v1094, %v1207
      %v1209 = vpop.f32.mrf.mxu0
      %1210 = vmatprep.mubr.f32.mxu0 0.0
      %1211 = vmatmul.mubr.f32.gmra.mxu0 %v626
      %v1212 = vpop.f32.mrf.mxu0
      %v1213 = vadd.f32 %v1094, %v1212
      %v1214 = vpop.f32.mrf.mxu0
      %1215 = vmatprep.mubr.f32.mxu0 0.0
      %1216 = vmatmul.mubr.f32.gmra.mxu0 %v627
      %v1217 = vpop.f32.mrf.mxu0
      %v1218 = vadd.f32 %v1094, %v1217
      %v1219 = vpop.f32.mrf.mxu0
      %1220 = vmatprep.mubr.f32.mxu0 0.0
      %1221 = vmatmul.mubr.f32.gmra.mxu0 %v628
      %v1222 = vpop.f32.mrf.mxu0
      %v1223 = vadd.f32 %v1094, %v1222
      %v1224 = vpop.f32.mrf.mxu0
      %1225 = vmatprep.mubr.f32.mxu0 0.0
      %1226 = vmatmul.mubr.f32.gmra.mxu0 %v629
      %v1227 = vpop.f32.mrf.mxu0
      %v1228 = vadd.f32 %v1094, %v1227
      %v1229 = vpop.f32.mrf.mxu0
      %1230 = vmatprep.mubr.f32.mxu0 0.0
      %1231 = vmatmul.mubr.f32.gmra.mxu0 %v630
      %v1232 = vpop.f32.mrf.mxu0
      %v1233 = vadd.f32 %v1094, %v1232
      %v1234 = vpop.f32.mrf.mxu0
      %1235 = vmatprep.mubr.f32.mxu0 0.0
      %1236 = vmatmul.mubr.f32.gmra.mxu0 %v631
      %v1237 = vpop.f32.mrf.mxu0
      %v1238 = vadd.f32 %v1094, %v1237
      %v1239 = vpop.f32.mrf.mxu0
      %1240 = vdwg.mxu0
      %v1241 = vld [vmem:[%s8] sm:$0xff]
      %v1242 = vld [vmem:[%s8 + $0x8] sm:$0xff]
      %v1243 = vld [vmem:[%s8 + $0x10] sm:$0xff]
      %v1244 = vld [vmem:[%s8 + $0x18] sm:$0xff]
      %v1245 = vld [vmem:[%s8 + $0x20] sm:$0xff]
      %v1246 = vld [vmem:[%s8 + $0x28] sm:$0xff]
      %v1247 = vld [vmem:[%s8 + $0x30] sm:$0xff]
      %v1248 = vld [vmem:[%s8 + $0x38] sm:$0xff]
      %v1249 = vld [vmem:[%s8 + $0x40] sm:$0xff]
      %v1250 = vld [vmem:[%s8 + $0x48] sm:$0xff]
      %v1251 = vld [vmem:[%s8 + $0x50] sm:$0xff]
      %v1252 = vld [vmem:[%s8 + $0x58] sm:$0xff]
      %v1253 = vld [vmem:[%s8 + $0x60] sm:$0xff]
      %v1254 = vld [vmem:[%s8 + $0x68] sm:$0xff]
      %v1255 = vld [vmem:[%s8 + $0x70] sm:$0xff]
      %v1256 = vld [vmem:[%s8 + $0x78] sm:$0xff]
      %vm1257 = vcmask 261120
      %v1259 = vsel %vm1257, %v800, 0
      %v1262 = vsel %vm1257, %v801, 0
      %v1265 = vsel %vm1257, %v802, 0
      %v1268 = vsel %vm1257, %v803, 0
      %v1271 = vsel %vm1257, %v804, 0
      %v1274 = vsel %vm1257, %v805, 0
      %v1277 = vsel %vm1257, %v806, 0
      %v1280 = vsel %vm1257, %v807, 0
      %v1283 = vsel %vm1257, %v808, 0
      %v1286 = vsel %vm1257, %v809, 0
      %v1289 = vsel %vm1257, %v810, 0
      %v1292 = vsel %vm1257, %v811, 0
      %v1295 = vsel %vm1257, %v812, 0
      %v1298 = vsel %vm1257, %v813, 0
      %v1301 = vsel %vm1257, %v814, 0
      %v1304 = vsel %vm1257, %v815, 0
      %1306 = vmatprep.subr.mxu0 0.0
      %1307 = vmatpush1.msra.mxu0 0.0
      %1308 = vmatprep.subr.mxu0 0.0
      %1309 = vmatpush1.msra.mxu0 0.0
      %1310 = vmatprep.subr.mxu0 0.0
      %1311 = vmatpush1.msra.mxu0 0.0
      %1312 = vmatprep.subr.mxu0 0.0
      %1313 = vmatpush1.msra.mxu0 0.0
      %1314 = vmatprep.subr.mxu0 0.0
      %1315 = vmatpush1.msra.mxu0 0.0
      %1316 = vmatprep.subr.mxu0 0.0
      %1317 = vmatpush1.msra.mxu0 0.0
      %1318 = vmatprep.subr.mxu0 0.0
      %1319 = vmatpush1.msra.mxu0 0.0
      %1320 = vmatprep.subr.mxu0 0.0
      %1321 = vmatpush1.msra.mxu0 0.0
      %1322 = vmatprep.subr.mxu0 0.0
      %1323 = vmatpush1.msra.mxu0 0.0
      %1324 = vmatprep.subr.mxu0 0.0
      %1325 = vmatpush1.msra.mxu0 0.0
      %1326 = vmatprep.subr.mxu0 0.0
      %1327 = vmatpush1.msra.mxu0 0.0
      %1328 = vmatprep.subr.mxu0 0.0
      %1329 = vmatpush1.msra.mxu0 0.0
      %1330 = vmatprep.subr.mxu0 0.0
      %1331 = vmatpush1.msra.mxu0 %v1010
      %1332 = vmatprep.subr.mxu0 0.0
      %1333 = vmatpush1.msra.mxu0 %v1005
      %1334 = vmatprep.subr.mxu0 0.0
      %1335 = vmatpush1.msra.mxu0 %v1000
      %1336 = vmatprep.subr.mxu0 0.0
      %1337 = vmatpush1.msra.mxu0 %v995
      %1338 = vmatprep.subr.mxu0 0.0
      %1339 = vmatpush2.msra.mxu0 0.0
      %1340 = vmatprep.subr.mxu0 0.0
      %1341 = vmatpush2.msra.mxu0 0.0
      %1342 = vmatprep.subr.mxu0 0.0
      %1343 = vmatpush2.msra.mxu0 0.0
      %1344 = vmatprep.subr.mxu0 0.0
      %1345 = vmatpush2.msra.mxu0 0.0
      %1346 = vmatprep.subr.mxu0 0.0
      %1347 = vmatpush2.msra.mxu0 0.0
      %1348 = vmatprep.subr.mxu0 0.0
      %1349 = vmatpush2.msra.mxu0 0.0
      %1350 = vmatprep.subr.mxu0 0.0
      %1351 = vmatpush2.msra.mxu0 0.0
      %1352 = vmatprep.subr.mxu0 0.0
      %1353 = vmatpush2.msra.mxu0 0.0
      %1354 = vmatprep.subr.mxu0 0.0
      %1355 = vmatpush2.msra.mxu0 0.0
      %1356 = vmatprep.subr.mxu0 0.0
      %1357 = vmatpush2.msra.mxu0 0.0
      %1358 = vmatprep.subr.mxu0 0.0
      %1359 = vmatpush2.msra.mxu0 0.0
      %1360 = vmatprep.subr.mxu0 0.0
      %1361 = vmatpush2.msra.mxu0 0.0
      %1362 = vmatprep.subr.mxu0 0.0
      %1363 = vmatpush2.msra.mxu0 0.0
      %1364 = vmatprep.subr.mxu0 0.0
      %1365 = vmatpush2.msra.mxu0 0.0
      %1366 = vmatprep.subr.mxu0 0.0
      %1367 = vmatpush2.msra.mxu0 0.0
      %1368 = vmatprep.subr.mxu0 0.0
      %1369 = vmatpush2.msra.mxu0 0.0
      %1370 = vmatprep.mubr.f32.mxu0 0.0
      %1371 = vmatmul.mubr.f32.gmra.mxu0 %v1259
      %v1372 = vpop.f32.mrf.mxu0
      %v1373 = vadd.f32 0.0, %v1372
      %v1374 = vpop.f32.mrf.mxu0
      %1375 = vmatprep.mubr.f32.mxu0 0.0
      %1376 = vmatmul.mubr.f32.gmra.mxu0 %v1262
      %v1377 = vpop.f32.mrf.mxu0
      %v1378 = vadd.f32 0.0, %v1377
      %v1379 = vpop.f32.mrf.mxu0
      %1380 = vmatprep.mubr.f32.mxu0 0.0
      %1381 = vmatmul.mubr.f32.gmra.mxu0 %v1265
      %v1382 = vpop.f32.mrf.mxu0
      %v1383 = vadd.f32 0.0, %v1382
      %v1384 = vpop.f32.mrf.mxu0
      %1385 = vmatprep.mubr.f32.mxu0 0.0
      %1386 = vmatmul.mubr.f32.gmra.mxu0 %v1268
      %v1387 = vpop.f32.mrf.mxu0
      %v1388 = vadd.f32 0.0, %v1387
      %v1389 = vpop.f32.mrf.mxu0
      %1390 = vmatprep.mubr.f32.mxu0 0.0
      %1391 = vmatmul.mubr.f32.gmra.mxu0 %v1271
      %v1392 = vpop.f32.mrf.mxu0
      %v1393 = vadd.f32 0.0, %v1392
      %v1394 = vpop.f32.mrf.mxu0
      %1395 = vmatprep.mubr.f32.mxu0 0.0
      %1396 = vmatmul.mubr.f32.gmra.mxu0 %v1274
      %v1397 = vpop.f32.mrf.mxu0
      %v1398 = vadd.f32 0.0, %v1397
      %v1399 = vpop.f32.mrf.mxu0
      %1400 = vmatprep.mubr.f32.mxu0 0.0
      %1401 = vmatmul.mubr.f32.gmra.mxu0 %v1277
      %v1402 = vpop.f32.mrf.mxu0
      %v1403 = vadd.f32 0.0, %v1402
      %v1404 = vpop.f32.mrf.mxu0
      %1405 = vmatprep.mubr.f32.mxu0 0.0
      %1406 = vmatmul.mubr.f32.gmra.mxu0 %v1280
      %v1407 = vpop.f32.mrf.mxu0
      %v1408 = vadd.f32 0.0, %v1407
      %v1409 = vpop.f32.mrf.mxu0
      %1410 = vmatprep.mubr.f32.mxu0 0.0
      %1411 = vmatmul.mubr.f32.gmra.mxu0 %v1283
      %v1412 = vpop.f32.mrf.mxu0
      %v1413 = vadd.f32 0.0, %v1412
      %v1414 = vpop.f32.mrf.mxu0
      %1415 = vmatprep.mubr.f32.mxu0 0.0
      %1416 = vmatmul.mubr.f32.gmra.mxu0 %v1286
      %v1417 = vpop.f32.mrf.mxu0
      %v1418 = vadd.f32 0.0, %v1417
      %v1419 = vpop.f32.mrf.mxu0
      %1420 = vmatprep.mubr.f32.mxu0 0.0
      %1421 = vmatmul.mubr.f32.gmra.mxu0 %v1289
      %v1422 = vpop.f32.mrf.mxu0
      %v1423 = vadd.f32 0.0, %v1422
      %v1424 = vpop.f32.mrf.mxu0
      %1425 = vmatprep.mubr.f32.mxu0 0.0
      %1426 = vmatmul.mubr.f32.gmra.mxu0 %v1292
      %v1427 = vpop.f32.mrf.mxu0
      %v1428 = vadd.f32 0.0, %v1427
      %v1429 = vpop.f32.mrf.mxu0
      %1430 = vmatprep.mubr.f32.mxu0 0.0
      %1431 = vmatmul.mubr.f32.gmra.mxu0 %v1295
      %v1432 = vpop.f32.mrf.mxu0
      %v1433 = vadd.f32 0.0, %v1432
      %v1434 = vpop.f32.mrf.mxu0
      %1435 = vmatprep.mubr.f32.mxu0 0.0
      %1436 = vmatmul.mubr.f32.gmra.mxu0 %v1298
      %v1437 = vpop.f32.mrf.mxu0
      %v1438 = vadd.f32 0.0, %v1437
      %v1439 = vpop.f32.mrf.mxu0
      %1440 = vmatprep.mubr.f32.mxu0 0.0
      %1441 = vmatmul.mubr.f32.gmra.mxu0 %v1301
      %v1442 = vpop.f32.mrf.mxu0
      %v1443 = vadd.f32 0.0, %v1442
      %v1444 = vpop.f32.mrf.mxu0
      %1445 = vmatprep.mubr.f32.mxu0 0.0
      %1446 = vmatmul.mubr.f32.gmra.mxu0 %v1304
      %v1447 = vpop.f32.mrf.mxu0
      %v1448 = vadd.f32 0.0, %v1447
      %v1449 = vpop.f32.mrf.mxu0
      %1450 = vdwg.mxu0
      %1451 = vmax.xlane.f32.xlu0 %v1373
      %v1452 = vpop.xlane.xlu0 %1451
      %1453 = vmax.xlane.f32.xlu0 %v1378
      %v1454 = vpop.xlane.xlu0 %1453
      %1455 = vmax.xlane.f32.xlu0 %v1383
      %v1456 = vpop.xlane.xlu0 %1455
      %1457 = vmax.xlane.f32.xlu0 %v1388
      %v1458 = vpop.xlane.xlu0 %1457
      %1459 = vmax.xlane.f32.xlu0 %v1393
      %v1460 = vpop.xlane.xlu0 %1459
      %1461 = vmax.xlane.f32.xlu0 %v1398
      %v1462 = vpop.xlane.xlu0 %1461
      %1463 = vmax.xlane.f32.xlu0 %v1403
      %v1464 = vpop.xlane.xlu0 %1463
      %1465 = vmax.xlane.f32.xlu0 %v1408
      %v1466 = vpop.xlane.xlu0 %1465
      %1467 = vmax.xlane.f32.xlu0 %v1413
      %v1468 = vpop.xlane.xlu0 %1467
      %1469 = vmax.xlane.f32.xlu0 %v1418
      %v1470 = vpop.xlane.xlu0 %1469
      %1471 = vmax.xlane.f32.xlu0 %v1423
      %v1472 = vpop.xlane.xlu0 %1471
      %1473 = vmax.xlane.f32.xlu0 %v1428
      %v1474 = vpop.xlane.xlu0 %1473
      %1475 = vmax.xlane.f32.xlu0 %v1433
      %v1476 = vpop.xlane.xlu0 %1475
      %1477 = vmax.xlane.f32.xlu0 %v1438
      %v1478 = vpop.xlane.xlu0 %1477
      %1479 = vmax.xlane.f32.xlu0 %v1443
      %v1480 = vpop.xlane.xlu0 %1479
      %1481 = vmax.xlane.f32.xlu0 %v1448
      %v1482 = vpop.xlane.xlu0 %1481
      %v1483 = vsub.f32 %v1373, %v1452
      %v1484 = vsub.f32 %v1378, %v1454
      %v1485 = vsub.f32 %v1383, %v1456
      %v1486 = vsub.f32 %v1388, %v1458
      %v1487 = vsub.f32 %v1393, %v1460
      %v1488 = vsub.f32 %v1398, %v1462
      %v1489 = vsub.f32 %v1403, %v1464
      %v1490 = vsub.f32 %v1408, %v1466
      %v1491 = vsub.f32 %v1413, %v1468
      %v1492 = vsub.f32 %v1418, %v1470
      %v1493 = vsub.f32 %v1423, %v1472
      %v1494 = vsub.f32 %v1428, %v1474
      %v1495 = vsub.f32 %v1433, %v1476
      %v1496 = vsub.f32 %v1438, %v1478
      %v1497 = vsub.f32 %v1443, %v1480
      %v1498 = vsub.f32 %v1448, %v1482
      %v1499 = vmul.f32 %v1483, 1.442695
      %v1500 = vpow.pop %v1499
      %v1501 = vmul.f32 %v1484, 1.442695
      %v1502 = vpow.pop %v1501
      %v1503 = vmul.f32 %v1485, 1.442695
      %v1504 = vpow.pop %v1503
      %v1505 = vmul.f32 %v1486, 1.442695
      %v1506 = vpow.pop %v1505
      %v1507 = vmul.f32 %v1487, 1.442695
      %v1508 = vpow.pop %v1507
      %v1509 = vmul.f32 %v1488, 1.442695
      %v1510 = vpow.pop %v1509
      %v1511 = vmul.f32 %v1489, 1.442695
      %v1512 = vpow.pop %v1511
      %v1513 = vmul.f32 %v1490, 1.442695
      %v1514 = vpow.pop %v1513
      %v1515 = vmul.f32 %v1491, 1.442695
      %v1516 = vpow.pop %v1515
      %v1517 = vmul.f32 %v1492, 1.442695
      %v1518 = vpow.pop %v1517
      %v1519 = vmul.f32 %v1493, 1.442695
      %v1520 = vpow.pop %v1519
      %v1521 = vmul.f32 %v1494, 1.442695
      %v1522 = vpow.pop %v1521
      %v1523 = vmul.f32 %v1495, 1.442695
      %v1524 = vpow.pop %v1523
      %v1525 = vmul.f32 %v1496, 1.442695
      %v1526 = vpow.pop %v1525
      %v1527 = vmul.f32 %v1497, 1.442695
      %v1528 = vpow.pop %v1527
      %v1529 = vmul.f32 %v1498, 1.442695
      %v1530 = vpow.pop %v1529
      %1531 = vadd.xlane.f32.xlu0 %v1500
      %v1532 = vpop.xlane.xlu0 %1531
      %1533 = vadd.xlane.f32.xlu0 %v1502
      %v1534 = vpop.xlane.xlu0 %1533
      %1535 = vadd.xlane.f32.xlu0 %v1504
      %v1536 = vpop.xlane.xlu0 %1535
      %1537 = vadd.xlane.f32.xlu0 %v1506
      %v1538 = vpop.xlane.xlu0 %1537
      %1539 = vadd.xlane.f32.xlu0 %v1508
      %v1540 = vpop.xlane.xlu0 %1539
      %1541 = vadd.xlane.f32.xlu0 %v1510
      %v1542 = vpop.xlane.xlu0 %1541
      %1543 = vadd.xlane.f32.xlu0 %v1512
      %v1544 = vpop.xlane.xlu0 %1543
      %1545 = vadd.xlane.f32.xlu0 %v1514
      %v1546 = vpop.xlane.xlu0 %1545
      %1547 = vadd.xlane.f32.xlu0 %v1516
      %v1548 = vpop.xlane.xlu0 %1547
      %1549 = vadd.xlane.f32.xlu0 %v1518
      %v1550 = vpop.xlane.xlu0 %1549
      %1551 = vadd.xlane.f32.xlu0 %v1520
      %v1552 = vpop.xlane.xlu0 %1551
      %1553 = vadd.xlane.f32.xlu0 %v1522
      %v1554 = vpop.xlane.xlu0 %1553
      %1555 = vadd.xlane.f32.xlu0 %v1524
      %v1556 = vpop.xlane.xlu0 %1555
      %1557 = vadd.xlane.f32.xlu0 %v1526
      %v1558 = vpop.xlane.xlu0 %1557
      %1559 = vadd.xlane.f32.xlu0 %v1528
      %v1560 = vpop.xlane.xlu0 %1559
      %1561 = vadd.xlane.f32.xlu0 %v1530
      %v1562 = vpop.xlane.xlu0 %1561
      %1563 = vmatprep.subr.mxu0 0.0
      %1564 = vmatpush1.msra.mxu0 %v1238
      %1565 = vmatprep.subr.mxu0 0.0
      %1566 = vmatpush1.msra.mxu0 %v1233
      %1567 = vmatprep.subr.mxu0 0.0
      %1568 = vmatpush1.msra.mxu0 %v1228
      %1569 = vmatprep.subr.mxu0 0.0
      %1570 = vmatpush1.msra.mxu0 %v1223
      %1571 = vmatprep.subr.mxu0 0.0
      %1572 = vmatpush1.msra.mxu0 %v1218
      %1573 = vmatprep.subr.mxu0 0.0
      %1574 = vmatpush1.msra.mxu0 %v1213
      %1575 = vmatprep.subr.mxu0 0.0
      %1576 = vmatpush1.msra.mxu0 %v1208
      %1577 = vmatprep.subr.mxu0 0.0
      %1578 = vmatpush1.msra.mxu0 %v1203
      %1579 = vmatprep.subr.mxu0 0.0
      %1580 = vmatpush1.msra.mxu0 %v1198
      %1581 = vmatprep.subr.mxu0 0.0
      %1582 = vmatpush1.msra.mxu0 %v1193
      %1583 = vmatprep.subr.mxu0 0.0
      %1584 = vmatpush1.msra.mxu0 %v1188
      %1585 = vmatprep.subr.mxu0 0.0
      %1586 = vmatpush1.msra.mxu0 %v1183
      %1587 = vmatprep.subr.mxu0 0.0
      %1588 = vmatpush1.msra.mxu0 %v1178
      %1589 = vmatprep.subr.mxu0 0.0
      %1590 = vmatpush1.msra.mxu0 %v1173
      %1591 = vmatprep.subr.mxu0 0.0
      %1592 = vmatpush1.msra.mxu0 %v1168
      %1593 = vmatprep.subr.mxu0 0.0
      %1594 = vmatpush1.msra.mxu0 %v1163
      %1595 = vmatprep.subr.mxu0 0.0
      %1596 = vmatpush2.msra.mxu0 0.0
      %1597 = vmatprep.subr.mxu0 0.0
      %1598 = vmatpush2.msra.mxu0 0.0
      %1599 = vmatprep.subr.mxu0 0.0
      %1600 = vmatpush2.msra.mxu0 0.0
      %1601 = vmatprep.subr.mxu0 0.0
      %1602 = vmatpush2.msra.mxu0 0.0
      %1603 = vmatprep.subr.mxu0 0.0
      %1604 = vmatpush2.msra.mxu0 0.0
      %1605 = vmatprep.subr.mxu0 0.0
      %1606 = vmatpush2.msra.mxu0 0.0
      %1607 = vmatprep.subr.mxu0 0.0
      %1608 = vmatpush2.msra.mxu0 0.0
      %1609 = vmatprep.subr.mxu0 0.0
      %1610 = vmatpush2.msra.mxu0 0.0
      %1611 = vmatprep.subr.mxu0 0.0
      %1612 = vmatpush2.msra.mxu0 0.0
      %1613 = vmatprep.subr.mxu0 0.0
      %1614 = vmatpush2.msra.mxu0 0.0
      %1615 = vmatprep.subr.mxu0 0.0
      %1616 = vmatpush2.msra.mxu0 0.0
      %1617 = vmatprep.subr.mxu0 0.0
      %1618 = vmatpush2.msra.mxu0 0.0
      %1619 = vmatprep.subr.mxu0 0.0
      %1620 = vmatpush2.msra.mxu0 0.0
      %1621 = vmatprep.subr.mxu0 0.0
      %1622 = vmatpush2.msra.mxu0 0.0
      %1623 = vmatprep.subr.mxu0 0.0
      %1624 = vmatpush2.msra.mxu0 0.0
      %1625 = vmatprep.subr.mxu0 0.0
      %1626 = vmatpush2.msra.mxu0 0.0
      %1627 = vmatprep.mubr.f32.mxu0 0.0
      %1628 = vmatmul.mubr.f32.gmra.mxu0 %v1500
      %v1629 = vpop.f32.mrf.mxu0
      %v1630 = vadd.f32 0.0, %v1629
      %v1631 = vpop.f32.mrf.mxu0
      %1632 = vmatprep.mubr.f32.mxu0 0.0
      %1633 = vmatmul.mubr.f32.gmra.mxu0 %v1502
      %v1634 = vpop.f32.mrf.mxu0
      %v1635 = vadd.f32 0.0, %v1634
      %v1636 = vpop.f32.mrf.mxu0
      %1637 = vmatprep.mubr.f32.mxu0 0.0
      %1638 = vmatmul.mubr.f32.gmra.mxu0 %v1504
      %v1639 = vpop.f32.mrf.mxu0
      %v1640 = vadd.f32 0.0, %v1639
      %v1641 = vpop.f32.mrf.mxu0
      %1642 = vmatprep.mubr.f32.mxu0 0.0
      %1643 = vmatmul.mubr.f32.gmra.mxu0 %v1506
      %v1644 = vpop.f32.mrf.mxu0
      %v1645 = vadd.f32 0.0, %v1644
      %v1646 = vpop.f32.mrf.mxu0
      %1647 = vmatprep.mubr.f32.mxu0 0.0
      %1648 = vmatmul.mubr.f32.gmra.mxu0 %v1508
      %v1649 = vpop.f32.mrf.mxu0
      %v1650 = vadd.f32 0.0, %v1649
      %v1651 = vpop.f32.mrf.mxu0
      %1652 = vmatprep.mubr.f32.mxu0 0.0
      %1653 = vmatmul.mubr.f32.gmra.mxu0 %v1510
      %v1654 = vpop.f32.mrf.mxu0
      %v1655 = vadd.f32 0.0, %v1654
      %v1656 = vpop.f32.mrf.mxu0
      %1657 = vmatprep.mubr.f32.mxu0 0.0
      %1658 = vmatmul.mubr.f32.gmra.mxu0 %v1512
      %v1659 = vpop.f32.mrf.mxu0
      %v1660 = vadd.f32 0.0, %v1659
      %v1661 = vpop.f32.mrf.mxu0
      %1662 = vmatprep.mubr.f32.mxu0 0.0
      %1663 = vmatmul.mubr.f32.gmra.mxu0 %v1514
      %v1664 = vpop.f32.mrf.mxu0
      %v1665 = vadd.f32 0.0, %v1664
      %v1666 = vpop.f32.mrf.mxu0
      %1667 = vmatprep.mubr.f32.mxu0 0.0
      %1668 = vmatmul.mubr.f32.gmra.mxu0 %v1516
      %v1669 = vpop.f32.mrf.mxu0
      %v1670 = vadd.f32 0.0, %v1669
      %v1671 = vpop.f32.mrf.mxu0
      %1672 = vmatprep.mubr.f32.mxu0 0.0
      %1673 = vmatmul.mubr.f32.gmra.mxu0 %v1518
      %v1674 = vpop.f32.mrf.mxu0
      %v1675 = vadd.f32 0.0, %v1674
      %v1676 = vpop.f32.mrf.mxu0
      %1677 = vmatprep.mubr.f32.mxu0 0.0
      %1678 = vmatmul.mubr.f32.gmra.mxu0 %v1520
      %v1679 = vpop.f32.mrf.mxu0
      %v1680 = vadd.f32 0.0, %v1679
      %v1681 = vpop.f32.mrf.mxu0
      %1682 = vmatprep.mubr.f32.mxu0 0.0
      %1683 = vmatmul.mubr.f32.gmra.mxu0 %v1522
      %v1684 = vpop.f32.mrf.mxu0
      %v1685 = vadd.f32 0.0, %v1684
      %v1686 = vpop.f32.mrf.mxu0
      %1687 = vmatprep.mubr.f32.mxu0 0.0
      %1688 = vmatmul.mubr.f32.gmra.mxu0 %v1524
      %v1689 = vpop.f32.mrf.mxu0
      %v1690 = vadd.f32 0.0, %v1689
      %v1691 = vpop.f32.mrf.mxu0
      %1692 = vmatprep.mubr.f32.mxu0 0.0
      %1693 = vmatmul.mubr.f32.gmra.mxu0 %v1526
      %v1694 = vpop.f32.mrf.mxu0
      %v1695 = vadd.f32 0.0, %v1694
      %v1696 = vpop.f32.mrf.mxu0
      %1697 = vmatprep.mubr.f32.mxu0 0.0
      %1698 = vmatmul.mubr.f32.gmra.mxu0 %v1528
      %v1699 = vpop.f32.mrf.mxu0
      %v1700 = vadd.f32 0.0, %v1699
      %v1701 = vpop.f32.mrf.mxu0
      %1702 = vmatprep.mubr.f32.mxu0 0.0
      %1703 = vmatmul.mubr.f32.gmra.mxu0 %v1530
      %v1704 = vpop.f32.mrf.mxu0
      %v1705 = vadd.f32 0.0, %v1704
      %v1706 = vpop.f32.mrf.mxu0
      %1707 = vdwg.mxu0
      %v1708 = vrcp.pop %v1532
      %v1709 = vrcp.pop %v1534
      %v1710 = vrcp.pop %v1536
      %v1711 = vrcp.pop %v1538
      %v1712 = vrcp.pop %v1540
      %v1713 = vrcp.pop %v1542
      %v1714 = vrcp.pop %v1544
      %v1715 = vrcp.pop %v1546
      %v1716 = vrcp.pop %v1548
      %v1717 = vrcp.pop %v1550
      %v1718 = vrcp.pop %v1552
      %v1719 = vrcp.pop %v1554
      %v1720 = vrcp.pop %v1556
      %v1721 = vrcp.pop %v1558
      %v1722 = vrcp.pop %v1560
      %v1723 = vrcp.pop %v1562
      %v1724 = vmul.f32 %v1630, %v1708
      %v1725 = vmul.f32 %v1635, %v1709
      %v1726 = vmul.f32 %v1640, %v1710
      %v1727 = vmul.f32 %v1645, %v1711
      %v1728 = vmul.f32 %v1650, %v1712
      %v1729 = vmul.f32 %v1655, %v1713
      %v1730 = vmul.f32 %v1660, %v1714
      %v1731 = vmul.f32 %v1665, %v1715
      %v1732 = vmul.f32 %v1670, %v1716
      %v1733 = vmul.f32 %v1675, %v1717
      %v1734 = vmul.f32 %v1680, %v1718
      %v1735 = vmul.f32 %v1685, %v1719
      %v1736 = vmul.f32 %v1690, %v1720
      %v1737 = vmul.f32 %v1695, %v1721
      %v1738 = vmul.f32 %v1700, %v1722
      %v1739 = vmul.f32 %v1705, %v1723
      %1740 = vrot.lane.b32.xlu0 %v800, 96
      %v1741 = vpop.permute.xlu0 %1740
      %1742 = vrot.lane.b32.xlu0 %v801, 96
      %v1743 = vpop.permute.xlu0 %1742
      %1744 = vrot.lane.b32.xlu0 %v802, 96
      %v1745 = vpop.permute.xlu0 %1744
      %1746 = vrot.lane.b32.xlu0 %v803, 96
      %v1747 = vpop.permute.xlu0 %1746
      %1748 = vrot.lane.b32.xlu0 %v804, 96
      %v1749 = vpop.permute.xlu0 %1748
      %1750 = vrot.lane.b32.xlu0 %v805, 96
      %v1751 = vpop.permute.xlu0 %1750
      %1752 = vrot.lane.b32.xlu0 %v806, 96
      %v1753 = vpop.permute.xlu0 %1752
      %1754 = vrot.lane.b32.xlu0 %v807, 96
      %v1755 = vpop.permute.xlu0 %1754
      %1756 = vrot.lane.b32.xlu0 %v808, 96
      %v1757 = vpop.permute.xlu0 %1756
      %1758 = vrot.lane.b32.xlu0 %v809, 96
      %v1759 = vpop.permute.xlu0 %1758
      %1760 = vrot.lane.b32.xlu0 %v810, 96
      %v1761 = vpop.permute.xlu0 %1760
      %1762 = vrot.lane.b32.xlu0 %v811, 96
      %v1763 = vpop.permute.xlu0 %1762
      %1764 = vrot.lane.b32.xlu0 %v812, 96
      %v1765 = vpop.permute.xlu0 %1764
      %1766 = vrot.lane.b32.xlu0 %v813, 96
      %v1767 = vpop.permute.xlu0 %1766
      %1768 = vrot.lane.b32.xlu0 %v814, 96
      %v1769 = vpop.permute.xlu0 %1768
      %1770 = vrot.lane.b32.xlu0 %v815, 96
      %v1771 = vpop.permute.xlu0 %1770
      %v1772 = vsel %vm1257, %v1741, 0
      %v1774 = vsel %vm1257, %v1743, 0
      %v1776 = vsel %vm1257, %v1745, 0
      %v1778 = vsel %vm1257, %v1747, 0
      %v1780 = vsel %vm1257, %v1749, 0
      %v1782 = vsel %vm1257, %v1751, 0
      %v1784 = vsel %vm1257, %v1753, 0
      %v1786 = vsel %vm1257, %v1755, 0
      %v1788 = vsel %vm1257, %v1757, 0
      %v1790 = vsel %vm1257, %v1759, 0
      %v1792 = vsel %vm1257, %v1761, 0
      %v1794 = vsel %vm1257, %v1763, 0
      %v1796 = vsel %vm1257, %v1765, 0
      %v1798 = vsel %vm1257, %v1767, 0
      %v1800 = vsel %vm1257, %v1769, 0
      %v1802 = vsel %vm1257, %v1771, 0
      %1804 = vmatprep.subr.mxu0 0.0
      %1805 = vmatpush1.msra.mxu0 0.0
      %1806 = vmatprep.subr.mxu0 0.0
      %1807 = vmatpush1.msra.mxu0 0.0
      %1808 = vmatprep.subr.mxu0 0.0
      %1809 = vmatpush1.msra.mxu0 0.0
      %1810 = vmatprep.subr.mxu0 0.0
      %1811 = vmatpush1.msra.mxu0 0.0
      %1812 = vmatprep.subr.mxu0 0.0
      %1813 = vmatpush1.msra.mxu0 0.0
      %1814 = vmatprep.subr.mxu0 0.0
      %1815 = vmatpush1.msra.mxu0 0.0
      %1816 = vmatprep.subr.mxu0 0.0
      %1817 = vmatpush1.msra.mxu0 0.0
      %1818 = vmatprep.subr.mxu0 0.0
      %1819 = vmatpush1.msra.mxu0 0.0
      %1820 = vmatprep.subr.mxu0 0.0
      %1821 = vmatpush1.msra.mxu0 0.0
      %1822 = vmatprep.subr.mxu0 0.0
      %1823 = vmatpush1.msra.mxu0 0.0
      %1824 = vmatprep.subr.mxu0 0.0
      %1825 = vmatpush1.msra.mxu0 0.0
      %1826 = vmatprep.subr.mxu0 0.0
      %1827 = vmatpush1.msra.mxu0 0.0
      %1828 = vmatprep.subr.mxu0 0.0
      %1829 = vmatpush1.msra.mxu0 %v1030
      %1830 = vmatprep.subr.mxu0 0.0
      %1831 = vmatpush1.msra.mxu0 %v1025
      %1832 = vmatprep.subr.mxu0 0.0
      %1833 = vmatpush1.msra.mxu0 %v1020
      %1834 = vmatprep.subr.mxu0 0.0
      %1835 = vmatpush1.msra.mxu0 %v1015
      %1836 = vmatprep.subr.mxu0 0.0
      %1837 = vmatpush2.msra.mxu0 0.0
      %1838 = vmatprep.subr.mxu0 0.0
      %1839 = vmatpush2.msra.mxu0 0.0
      %1840 = vmatprep.subr.mxu0 0.0
      %1841 = vmatpush2.msra.mxu0 0.0
      %1842 = vmatprep.subr.mxu0 0.0
      %1843 = vmatpush2.msra.mxu0 0.0
      %1844 = vmatprep.subr.mxu0 0.0
      %1845 = vmatpush2.msra.mxu0 0.0
      %1846 = vmatprep.subr.mxu0 0.0
      %1847 = vmatpush2.msra.mxu0 0.0
      %1848 = vmatprep.subr.mxu0 0.0
      %1849 = vmatpush2.msra.mxu0 0.0
      %1850 = vmatprep.subr.mxu0 0.0
      %1851 = vmatpush2.msra.mxu0 0.0
      %1852 = vmatprep.subr.mxu0 0.0
      %1853 = vmatpush2.msra.mxu0 0.0
      %1854 = vmatprep.subr.mxu0 0.0
      %1855 = vmatpush2.msra.mxu0 0.0
      %1856 = vmatprep.subr.mxu0 0.0
      %1857 = vmatpush2.msra.mxu0 0.0
      %1858 = vmatprep.subr.mxu0 0.0
      %1859 = vmatpush2.msra.mxu0 0.0
      %1860 = vmatprep.subr.mxu0 0.0
      %1861 = vmatpush2.msra.mxu0 0.0
      %1862 = vmatprep.subr.mxu0 0.0
      %1863 = vmatpush2.msra.mxu0 0.0
      %1864 = vmatprep.subr.mxu0 0.0
      %1865 = vmatpush2.msra.mxu0 0.0
      %1866 = vmatprep.subr.mxu0 0.0
      %1867 = vmatpush2.msra.mxu0 0.0
      %1868 = vmatprep.mubr.f32.mxu0 0.0
      %1869 = vmatmul.mubr.f32.gmra.mxu0 %v1772
      %v1870 = vpop.f32.mrf.mxu0
      %v1871 = vadd.f32 0.0, %v1870
      %v1872 = vpop.f32.mrf.mxu0
      %1873 = vmatprep.mubr.f32.mxu0 0.0
      %1874 = vmatmul.mubr.f32.gmra.mxu0 %v1774
      %v1875 = vpop.f32.mrf.mxu0
      %v1876 = vadd.f32 0.0, %v1875
      %v1877 = vpop.f32.mrf.mxu0
      %1878 = vmatprep.mubr.f32.mxu0 0.0
      %1879 = vmatmul.mubr.f32.gmra.mxu0 %v1776
      %v1880 = vpop.f32.mrf.mxu0
      %v1881 = vadd.f32 0.0, %v1880
      %v1882 = vpop.f32.mrf.mxu0
      %1883 = vmatprep.mubr.f32.mxu0 0.0
      %1884 = vmatmul.mubr.f32.gmra.mxu0 %v1778
      %v1885 = vpop.f32.mrf.mxu0
      %v1886 = vadd.f32 0.0, %v1885
      %v1887 = vpop.f32.mrf.mxu0
      %1888 = vmatprep.mubr.f32.mxu0 0.0
      %1889 = vmatmul.mubr.f32.gmra.mxu0 %v1780
      %v1890 = vpop.f32.mrf.mxu0
      %v1891 = vadd.f32 0.0, %v1890
      %v1892 = vpop.f32.mrf.mxu0
      %1893 = vmatprep.mubr.f32.mxu0 0.0
      %1894 = vmatmul.mubr.f32.gmra.mxu0 %v1782
      %v1895 = vpop.f32.mrf.mxu0
      %v1896 = vadd.f32 0.0, %v1895
      %v1897 = vpop.f32.mrf.mxu0
      %1898 = vmatprep.mubr.f32.mxu0 0.0
      %1899 = vmatmul.mubr.f32.gmra.mxu0 %v1784
      %v1900 = vpop.f32.mrf.mxu0
      %v1901 = vadd.f32 0.0, %v1900
      %v1902 = vpop.f32.mrf.mxu0
      %1903 = vmatprep.mubr.f32.mxu0 0.0
      %1904 = vmatmul.mubr.f32.gmra.mxu0 %v1786
      %v1905 = vpop.f32.mrf.mxu0
      %v1906 = vadd.f32 0.0, %v1905
      %v1907 = vpop.f32.mrf.mxu0
      %1908 = vmatprep.mubr.f32.mxu0 0.0
      %1909 = vmatmul.mubr.f32.gmra.mxu0 %v1788
      %v1910 = vpop.f32.mrf.mxu0
      %v1911 = vadd.f32 0.0, %v1910
      %v1912 = vpop.f32.mrf.mxu0
      %1913 = vmatprep.mubr.f32.mxu0 0.0
      %1914 = vmatmul.mubr.f32.gmra.mxu0 %v1790
      %v1915 = vpop.f32.mrf.mxu0
      %v1916 = vadd.f32 0.0, %v1915
      %v1917 = vpop.f32.mrf.mxu0
      %1918 = vmatprep.mubr.f32.mxu0 0.0
      %1919 = vmatmul.mubr.f32.gmra.mxu0 %v1792
      %v1920 = vpop.f32.mrf.mxu0
      %v1921 = vadd.f32 0.0, %v1920
      %v1922 = vpop.f32.mrf.mxu0
      %1923 = vmatprep.mubr.f32.mxu0 0.0
      %1924 = vmatmul.mubr.f32.gmra.mxu0 %v1794
      %v1925 = vpop.f32.mrf.mxu0
      %v1926 = vadd.f32 0.0, %v1925
      %v1927 = vpop.f32.mrf.mxu0
      %1928 = vmatprep.mubr.f32.mxu0 0.0
      %1929 = vmatmul.mubr.f32.gmra.mxu0 %v1796
      %v1930 = vpop.f32.mrf.mxu0
      %v1931 = vadd.f32 0.0, %v1930
      %v1932 = vpop.f32.mrf.mxu0
      %1933 = vmatprep.mubr.f32.mxu0 0.0
      %1934 = vmatmul.mubr.f32.gmra.mxu0 %v1798
      %v1935 = vpop.f32.mrf.mxu0
      %v1936 = vadd.f32 0.0, %v1935
      %v1937 = vpop.f32.mrf.mxu0
      %1938 = vmatprep.mubr.f32.mxu0 0.0
      %1939 = vmatmul.mubr.f32.gmra.mxu0 %v1800
      %v1940 = vpop.f32.mrf.mxu0
      %v1941 = vadd.f32 0.0, %v1940
      %v1942 = vpop.f32.mrf.mxu0
      %1943 = vmatprep.mubr.f32.mxu0 0.0
      %1944 = vmatmul.mubr.f32.gmra.mxu0 %v1802
      %v1945 = vpop.f32.mrf.mxu0
      %v1946 = vadd.f32 0.0, %v1945
      %v1947 = vpop.f32.mrf.mxu0
      %1948 = vdwg.mxu0
      %1949 = vmax.xlane.f32.xlu0 %v1871
      %v1950 = vpop.xlane.xlu0 %1949
      %1951 = vmax.xlane.f32.xlu0 %v1876
      %v1952 = vpop.xlane.xlu0 %1951
      %1953 = vmax.xlane.f32.xlu0 %v1881
      %v1954 = vpop.xlane.xlu0 %1953
      %1955 = vmax.xlane.f32.xlu0 %v1886
      %v1956 = vpop.xlane.xlu0 %1955
      %1957 = vmax.xlane.f32.xlu0 %v1891
      %v1958 = vpop.xlane.xlu0 %1957
      %1959 = vmax.xlane.f32.xlu0 %v1896
      %v1960 = vpop.xlane.xlu0 %1959
      %1961 = vmax.xlane.f32.xlu0 %v1901
      %v1962 = vpop.xlane.xlu0 %1961
      %1963 = vmax.xlane.f32.xlu0 %v1906
      %v1964 = vpop.xlane.xlu0 %1963
      %1965 = vmax.xlane.f32.xlu0 %v1911
      %v1966 = vpop.xlane.xlu0 %1965
      %1967 = vmax.xlane.f32.xlu0 %v1916
      %v1968 = vpop.xlane.xlu0 %1967
      %1969 = vmax.xlane.f32.xlu0 %v1921
      %v1970 = vpop.xlane.xlu0 %1969
      %1971 = vmax.xlane.f32.xlu0 %v1926
      %v1972 = vpop.xlane.xlu0 %1971
      %1973 = vmax.xlane.f32.xlu0 %v1931
      %v1974 = vpop.xlane.xlu0 %1973
      %1975 = vmax.xlane.f32.xlu0 %v1936
      %v1976 = vpop.xlane.xlu0 %1975
      %1977 = vmax.xlane.f32.xlu0 %v1941
      %v1978 = vpop.xlane.xlu0 %1977
      %1979 = vmax.xlane.f32.xlu0 %v1946
      %v1980 = vpop.xlane.xlu0 %1979
      %v1981 = vsub.f32 %v1871, %v1950
      %v1982 = vsub.f32 %v1876, %v1952
      %v1983 = vsub.f32 %v1881, %v1954
      %v1984 = vsub.f32 %v1886, %v1956
      %v1985 = vsub.f32 %v1891, %v1958
      %v1986 = vsub.f32 %v1896, %v1960
      %v1987 = vsub.f32 %v1901, %v1962
      %v1988 = vsub.f32 %v1906, %v1964
      %v1989 = vsub.f32 %v1911, %v1966
      %v1990 = vsub.f32 %v1916, %v1968
      %v1991 = vsub.f32 %v1921, %v1970
      %v1992 = vsub.f32 %v1926, %v1972
      %v1993 = vsub.f32 %v1931, %v1974
      %v1994 = vsub.f32 %v1936, %v1976
      %v1995 = vsub.f32 %v1941, %v1978
      %v1996 = vsub.f32 %v1946, %v1980
      %v1997 = vmul.f32 %v1981, 1.442695
      %v1998 = vpow.pop %v1997
      %v1999 = vmul.f32 %v1982, 1.442695
      %v2000 = vpow.pop %v1999
      %v2001 = vmul.f32 %v1983, 1.442695
      %v2002 = vpow.pop %v2001
      %v2003 = vmul.f32 %v1984, 1.442695
      %v2004 = vpow.pop %v2003
      %v2005 = vmul.f32 %v1985, 1.442695
      %v2006 = vpow.pop %v2005
      %v2007 = vmul.f32 %v1986, 1.442695
      %v2008 = vpow.pop %v2007
      %v2009 = vmul.f32 %v1987, 1.442695
      %v2010 = vpow.pop %v2009
      %v2011 = vmul.f32 %v1988, 1.442695
      %v2012 = vpow.pop %v2011
      %v2013 = vmul.f32 %v1989, 1.442695
      %v2014 = vpow.pop %v2013
      %v2015 = vmul.f32 %v1990, 1.442695
      %v2016 = vpow.pop %v2015
      %v2017 = vmul.f32 %v1991, 1.442695
      %v2018 = vpow.pop %v2017
      %v2019 = vmul.f32 %v1992, 1.442695
      %v2020 = vpow.pop %v2019
      %v2021 = vmul.f32 %v1993, 1.442695
      %v2022 = vpow.pop %v2021
      %v2023 = vmul.f32 %v1994, 1.442695
      %v2024 = vpow.pop %v2023
      %v2025 = vmul.f32 %v1995, 1.442695
      %v2026 = vpow.pop %v2025
      %v2027 = vmul.f32 %v1996, 1.442695
      %v2028 = vpow.pop %v2027
      %2029 = vadd.xlane.f32.xlu0 %v1998
      %v2030 = vpop.xlane.xlu0 %2029
      %2031 = vadd.xlane.f32.xlu0 %v2000
      %v2032 = vpop.xlane.xlu0 %2031
      %2033 = vadd.xlane.f32.xlu0 %v2002
      %v2034 = vpop.xlane.xlu0 %2033
      %2035 = vadd.xlane.f32.xlu0 %v2004
      %v2036 = vpop.xlane.xlu0 %2035
      %2037 = vadd.xlane.f32.xlu0 %v2006
      %v2038 = vpop.xlane.xlu0 %2037
      %2039 = vadd.xlane.f32.xlu0 %v2008
      %v2040 = vpop.xlane.xlu0 %2039
      %2041 = vadd.xlane.f32.xlu0 %v2010
      %v2042 = vpop.xlane.xlu0 %2041
      %2043 = vadd.xlane.f32.xlu0 %v2012
      %v2044 = vpop.xlane.xlu0 %2043
      %2045 = vadd.xlane.f32.xlu0 %v2014
      %v2046 = vpop.xlane.xlu0 %2045
      %2047 = vadd.xlane.f32.xlu0 %v2016
      %v2048 = vpop.xlane.xlu0 %2047
      %2049 = vadd.xlane.f32.xlu0 %v2018
      %v2050 = vpop.xlane.xlu0 %2049
      %2051 = vadd.xlane.f32.xlu0 %v2020
      %v2052 = vpop.xlane.xlu0 %2051
      %2053 = vadd.xlane.f32.xlu0 %v2022
      %v2054 = vpop.xlane.xlu0 %2053
      %2055 = vadd.xlane.f32.xlu0 %v2024
      %v2056 = vpop.xlane.xlu0 %2055
      %2057 = vadd.xlane.f32.xlu0 %v2026
      %v2058 = vpop.xlane.xlu0 %2057
      %2059 = vadd.xlane.f32.xlu0 %v2028
      %v2060 = vpop.xlane.xlu0 %2059
      %2077 = vrot.lane.b32.xlu0 %v1163, 96
      %v2078 = vpop.permute.xlu0 %2077
      %2079 = vrot.lane.b32.xlu0 %v1168, 96
      %v2080 = vpop.permute.xlu0 %2079
      %2081 = vrot.lane.b32.xlu0 %v1173, 96
      %v2082 = vpop.permute.xlu0 %2081
      %2083 = vrot.lane.b32.xlu0 %v1178, 96
      %v2084 = vpop.permute.xlu0 %2083
      %2085 = vrot.lane.b32.xlu0 %v1183, 96
      %v2086 = vpop.permute.xlu0 %2085
      %2087 = vrot.lane.b32.xlu0 %v1188, 96
      %v2088 = vpop.permute.xlu0 %2087
      %2089 = vrot.lane.b32.xlu0 %v1193, 96
      %v2090 = vpop.permute.xlu0 %2089
      %2091 = vrot.lane.b32.xlu0 %v1198, 96
      %v2092 = vpop.permute.xlu0 %2091
      %2093 = vrot.lane.b32.xlu0 %v1203, 96
      %v2094 = vpop.permute.xlu0 %2093
      %2095 = vrot.lane.b32.xlu0 %v1208, 96
      %v2096 = vpop.permute.xlu0 %2095
      %2097 = vrot.lane.b32.xlu0 %v1213, 96
      %v2098 = vpop.permute.xlu0 %2097
      %2099 = vrot.lane.b32.xlu0 %v1218, 96
      %v2100 = vpop.permute.xlu0 %2099
      %2101 = vrot.lane.b32.xlu0 %v1223, 96
      %v2102 = vpop.permute.xlu0 %2101
      %2103 = vrot.lane.b32.xlu0 %v1228, 96
      %v2104 = vpop.permute.xlu0 %2103
      %2105 = vrot.lane.b32.xlu0 %v1233, 96
      %v2106 = vpop.permute.xlu0 %2105
      %2107 = vrot.lane.b32.xlu0 %v1238, 96
      %v2108 = vpop.permute.xlu0 %2107
      %2125 = vmatprep.subr.mxu0 0.0
      %2126 = vmatpush1.msra.mxu0 %v2108
      %2127 = vmatprep.subr.mxu0 0.0
      %2128 = vmatpush1.msra.mxu0 %v2106
      %2129 = vmatprep.subr.mxu0 0.0
      %2130 = vmatpush1.msra.mxu0 %v2104
      %2131 = vmatprep.subr.mxu0 0.0
      %2132 = vmatpush1.msra.mxu0 %v2102
      %2133 = vmatprep.subr.mxu0 0.0
      %2134 = vmatpush1.msra.mxu0 %v2100
      %2135 = vmatprep.subr.mxu0 0.0
      %2136 = vmatpush1.msra.mxu0 %v2098
      %2137 = vmatprep.subr.mxu0 0.0
      %2138 = vmatpush1.msra.mxu0 %v2096
      %2139 = vmatprep.subr.mxu0 0.0
      %2140 = vmatpush1.msra.mxu0 %v2094
      %2141 = vmatprep.subr.mxu0 0.0
      %2142 = vmatpush1.msra.mxu0 %v2092
      %2143 = vmatprep.subr.mxu0 0.0
      %2144 = vmatpush1.msra.mxu0 %v2090
      %2145 = vmatprep.subr.mxu0 0.0
      %2146 = vmatpush1.msra.mxu0 %v2088
      %2147 = vmatprep.subr.mxu0 0.0
      %2148 = vmatpush1.msra.mxu0 %v2086
      %2149 = vmatprep.subr.mxu0 0.0
      %2150 = vmatpush1.msra.mxu0 %v2084
      %2151 = vmatprep.subr.mxu0 0.0
      %2152 = vmatpush1.msra.mxu0 %v2082
      %2153 = vmatprep.subr.mxu0 0.0
      %2154 = vmatpush1.msra.mxu0 %v2080
      %2155 = vmatprep.subr.mxu0 0.0
      %2156 = vmatpush1.msra.mxu0 %v2078
      %2157 = vmatprep.subr.mxu0 0.0
      %2158 = vmatpush2.msra.mxu0 0.0
      %2159 = vmatprep.subr.mxu0 0.0
      %2160 = vmatpush2.msra.mxu0 0.0
      %2161 = vmatprep.subr.mxu0 0.0
      %2162 = vmatpush2.msra.mxu0 0.0
      %2163 = vmatprep.subr.mxu0 0.0
      %2164 = vmatpush2.msra.mxu0 0.0
      %2165 = vmatprep.subr.mxu0 0.0
      %2166 = vmatpush2.msra.mxu0 0.0
      %2167 = vmatprep.subr.mxu0 0.0
      %2168 = vmatpush2.msra.mxu0 0.0
      %2169 = vmatprep.subr.mxu0 0.0
      %2170 = vmatpush2.msra.mxu0 0.0
      %2171 = vmatprep.subr.mxu0 0.0
      %2172 = vmatpush2.msra.mxu0 0.0
      %2173 = vmatprep.subr.mxu0 0.0
      %2174 = vmatpush2.msra.mxu0 0.0
      %2175 = vmatprep.subr.mxu0 0.0
      %2176 = vmatpush2.msra.mxu0 0.0
      %2177 = vmatprep.subr.mxu0 0.0
      %2178 = vmatpush2.msra.mxu0 0.0
      %2179 = vmatprep.subr.mxu0 0.0
      %2180 = vmatpush2.msra.mxu0 0.0
      %2181 = vmatprep.subr.mxu0 0.0
      %2182 = vmatpush2.msra.mxu0 0.0
      %2183 = vmatprep.subr.mxu0 0.0
      %2184 = vmatpush2.msra.mxu0 0.0
      %2185 = vmatprep.subr.mxu0 0.0
      %2186 = vmatpush2.msra.mxu0 0.0
      %2187 = vmatprep.subr.mxu0 0.0
      %2188 = vmatpush2.msra.mxu0 0.0
      %2189 = vmatprep.mubr.f32.mxu0 0.0
      %2190 = vmatmul.mubr.f32.gmra.mxu0 %v1998
      %v2191 = vpop.f32.mrf.mxu0
      %v2192 = vadd.f32 0.0, %v2191
      %v2193 = vpop.f32.mrf.mxu0
      %2194 = vmatprep.mubr.f32.mxu0 0.0
      %2195 = vmatmul.mubr.f32.gmra.mxu0 %v2000
      %v2196 = vpop.f32.mrf.mxu0
      %v2197 = vadd.f32 0.0, %v2196
      %v2198 = vpop.f32.mrf.mxu0
      %2199 = vmatprep.mubr.f32.mxu0 0.0
      %2200 = vmatmul.mubr.f32.gmra.mxu0 %v2002
      %v2201 = vpop.f32.mrf.mxu0
      %v2202 = vadd.f32 0.0, %v2201
      %v2203 = vpop.f32.mrf.mxu0
      %2204 = vmatprep.mubr.f32.mxu0 0.0
      %2205 = vmatmul.mubr.f32.gmra.mxu0 %v2004
      %v2206 = vpop.f32.mrf.mxu0
      %v2207 = vadd.f32 0.0, %v2206
      %v2208 = vpop.f32.mrf.mxu0
      %2209 = vmatprep.mubr.f32.mxu0 0.0
      %2210 = vmatmul.mubr.f32.gmra.mxu0 %v2006
      %v2211 = vpop.f32.mrf.mxu0
      %v2212 = vadd.f32 0.0, %v2211
      %v2213 = vpop.f32.mrf.mxu0
      %2214 = vmatprep.mubr.f32.mxu0 0.0
      %2215 = vmatmul.mubr.f32.gmra.mxu0 %v2008
      %v2216 = vpop.f32.mrf.mxu0
      %v2217 = vadd.f32 0.0, %v2216
      %v2218 = vpop.f32.mrf.mxu0
      %2219 = vmatprep.mubr.f32.mxu0 0.0
      %2220 = vmatmul.mubr.f32.gmra.mxu0 %v2010
      %v2221 = vpop.f32.mrf.mxu0
      %v2222 = vadd.f32 0.0, %v2221
      %v2223 = vpop.f32.mrf.mxu0
      %2224 = vmatprep.mubr.f32.mxu0 0.0
      %2225 = vmatmul.mubr.f32.gmra.mxu0 %v2012
      %v2226 = vpop.f32.mrf.mxu0
      %v2227 = vadd.f32 0.0, %v2226
      %v2228 = vpop.f32.mrf.mxu0
      %2229 = vmatprep.mubr.f32.mxu0 0.0
      %2230 = vmatmul.mubr.f32.gmra.mxu0 %v2014
      %v2231 = vpop.f32.mrf.mxu0
      %v2232 = vadd.f32 0.0, %v2231
      %v2233 = vpop.f32.mrf.mxu0
      %2234 = vmatprep.mubr.f32.mxu0 0.0
      %2235 = vmatmul.mubr.f32.gmra.mxu0 %v2016
      %v2236 = vpop.f32.mrf.mxu0
      %v2237 = vadd.f32 0.0, %v2236
      %v2238 = vpop.f32.mrf.mxu0
      %2239 = vmatprep.mubr.f32.mxu0 0.0
      %2240 = vmatmul.mubr.f32.gmra.mxu0 %v2018
      %v2241 = vpop.f32.mrf.mxu0
      %v2242 = vadd.f32 0.0, %v2241
      %v2243 = vpop.f32.mrf.mxu0
      %2244 = vmatprep.mubr.f32.mxu0 0.0
      %2245 = vmatmul.mubr.f32.gmra.mxu0 %v2020
      %v2246 = vpop.f32.mrf.mxu0
      %v2247 = vadd.f32 0.0, %v2246
      %v2248 = vpop.f32.mrf.mxu0
      %2249 = vmatprep.mubr.f32.mxu0 0.0
      %2250 = vmatmul.mubr.f32.gmra.mxu0 %v2022
      %v2251 = vpop.f32.mrf.mxu0
      %v2252 = vadd.f32 0.0, %v2251
      %v2253 = vpop.f32.mrf.mxu0
      %2254 = vmatprep.mubr.f32.mxu0 0.0
      %2255 = vmatmul.mubr.f32.gmra.mxu0 %v2024
      %v2256 = vpop.f32.mrf.mxu0
      %v2257 = vadd.f32 0.0, %v2256
      %v2258 = vpop.f32.mrf.mxu0
      %2259 = vmatprep.mubr.f32.mxu0 0.0
      %2260 = vmatmul.mubr.f32.gmra.mxu0 %v2026
      %v2261 = vpop.f32.mrf.mxu0
      %v2262 = vadd.f32 0.0, %v2261
      %v2263 = vpop.f32.mrf.mxu0
      %2264 = vmatprep.mubr.f32.mxu0 0.0
      %2265 = vmatmul.mubr.f32.gmra.mxu0 %v2028
      %v2266 = vpop.f32.mrf.mxu0
      %v2267 = vadd.f32 0.0, %v2266
      %v2268 = vpop.f32.mrf.mxu0
      %2269 = vdwg.mxu0
      %v2270 = vrcp.pop %v2030
      %v2271 = vrcp.pop %v2032
      %v2272 = vrcp.pop %v2034
      %v2273 = vrcp.pop %v2036
      %v2274 = vrcp.pop %v2038
      %v2275 = vrcp.pop %v2040
      %v2276 = vrcp.pop %v2042
      %v2277 = vrcp.pop %v2044
      %v2278 = vrcp.pop %v2046
      %v2279 = vrcp.pop %v2048
      %v2280 = vrcp.pop %v2050
      %v2281 = vrcp.pop %v2052
      %v2282 = vrcp.pop %v2054
      %v2283 = vrcp.pop %v2056
      %v2284 = vrcp.pop %v2058
      %v2285 = vrcp.pop %v2060
      %v2286 = vmul.f32 %v2192, %v2270
      %v2287 = vmul.f32 %v2197, %v2271
      %v2288 = vmul.f32 %v2202, %v2272
      %v2289 = vmul.f32 %v2207, %v2273
      %v2290 = vmul.f32 %v2212, %v2274
      %v2291 = vmul.f32 %v2217, %v2275
      %v2292 = vmul.f32 %v2222, %v2276
      %v2293 = vmul.f32 %v2227, %v2277
      %v2294 = vmul.f32 %v2232, %v2278
      %v2295 = vmul.f32 %v2237, %v2279
      %v2296 = vmul.f32 %v2242, %v2280
      %v2297 = vmul.f32 %v2247, %v2281
      %v2298 = vmul.f32 %v2252, %v2282
      %v2299 = vmul.f32 %v2257, %v2283
      %v2300 = vmul.f32 %v2262, %v2284
      %v2301 = vmul.f32 %v2267, %v2285
      %v2303 = vsel %vm1257, %v2286, 0
      %v2306 = vsel %vm1257, %v2287, 0
      %v2309 = vsel %vm1257, %v2288, 0
      %v2312 = vsel %vm1257, %v2289, 0
      %v2315 = vsel %vm1257, %v2290, 0
      %v2318 = vsel %vm1257, %v2291, 0
      %v2321 = vsel %vm1257, %v2292, 0
      %v2324 = vsel %vm1257, %v2293, 0
      %v2327 = vsel %vm1257, %v2294, 0
      %v2330 = vsel %vm1257, %v2295, 0
      %v2333 = vsel %vm1257, %v2296, 0
      %v2336 = vsel %vm1257, %v2297, 0
      %v2339 = vsel %vm1257, %v2298, 0
      %v2342 = vsel %vm1257, %v2299, 0
      %v2345 = vsel %vm1257, %v2300, 0
      %v2348 = vsel %vm1257, %v2301, 0
      %2350 = vmatprep.subr.mxu0 0.0
      %2351 = vmatpush1.msra.mxu0 0.0
      %2352 = vmatprep.subr.mxu0 0.0
      %2353 = vmatpush1.msra.mxu0 0.0
      %2354 = vmatprep.subr.mxu0 0.0
      %2355 = vmatpush1.msra.mxu0 0.0
      %2356 = vmatprep.subr.mxu0 0.0
      %2357 = vmatpush1.msra.mxu0 0.0
      %2358 = vmatprep.subr.mxu0 0.0
      %2359 = vmatpush1.msra.mxu0 0.0
      %2360 = vmatprep.subr.mxu0 0.0
      %2361 = vmatpush1.msra.mxu0 0.0
      %2362 = vmatprep.subr.mxu0 0.0
      %2363 = vmatpush1.msra.mxu0 0.0
      %2364 = vmatprep.subr.mxu0 0.0
      %2365 = vmatpush1.msra.mxu0 0.0
      %2366 = vmatprep.subr.mxu0 0.0
      %2367 = vmatpush1.msra.mxu0 0.0
      %2368 = vmatprep.subr.mxu0 0.0
      %2369 = vmatpush1.msra.mxu0 0.0
      %2370 = vmatprep.subr.mxu0 0.0
      %2371 = vmatpush1.msra.mxu0 0.0
      %2372 = vmatprep.subr.mxu0 0.0
      %2373 = vmatpush1.msra.mxu0 0.0
      %2374 = vmatprep.subr.mxu0 0.0
      %2375 = vmatpush1.msra.mxu0 %v1248
      %2376 = vmatprep.subr.mxu0 0.0
      %2377 = vmatpush1.msra.mxu0 %v1247
      %2378 = vmatprep.subr.mxu0 0.0
      %2379 = vmatpush1.msra.mxu0 %v1246
      %2380 = vmatprep.subr.mxu0 0.0
      %2381 = vmatpush1.msra.mxu0 %v1245
      %2382 = vmatprep.subr.mxu0 0.0
      %2383 = vmatpush2.msra.mxu0 0.0
      %2384 = vmatprep.subr.mxu0 0.0
      %2385 = vmatpush2.msra.mxu0 0.0
      %2386 = vmatprep.subr.mxu0 0.0
      %2387 = vmatpush2.msra.mxu0 0.0
      %2388 = vmatprep.subr.mxu0 0.0
      %2389 = vmatpush2.msra.mxu0 0.0
      %2390 = vmatprep.subr.mxu0 0.0
      %2391 = vmatpush2.msra.mxu0 0.0
      %2392 = vmatprep.subr.mxu0 0.0
      %2393 = vmatpush2.msra.mxu0 0.0
      %2394 = vmatprep.subr.mxu0 0.0
      %2395 = vmatpush2.msra.mxu0 0.0
      %2396 = vmatprep.subr.mxu0 0.0
      %2397 = vmatpush2.msra.mxu0 0.0
      %2398 = vmatprep.subr.mxu0 0.0
      %2399 = vmatpush2.msra.mxu0 0.0
      %2400 = vmatprep.subr.mxu0 0.0
      %2401 = vmatpush2.msra.mxu0 0.0
      %2402 = vmatprep.subr.mxu0 0.0
      %2403 = vmatpush2.msra.mxu0 0.0
      %2404 = vmatprep.subr.mxu0 0.0
      %2405 = vmatpush2.msra.mxu0 0.0
      %2406 = vmatprep.subr.mxu0 0.0
      %2407 = vmatpush2.msra.mxu0 0.0
      %2408 = vmatprep.subr.mxu0 0.0
      %2409 = vmatpush2.msra.mxu0 0.0
      %2410 = vmatprep.subr.mxu0 0.0
      %2411 = vmatpush2.msra.mxu0 0.0
      %2412 = vmatprep.subr.mxu0 0.0
      %2413 = vmatpush2.msra.mxu0 0.0
      %2414 = vmatprep.mubr.f32.mxu0 0.0
      %2415 = vmatmul.mubr.f32.gmra.mxu0 %v2303
      %v2416 = vpop.f32.mrf.mxu0
      %v2417 = vadd.f32 0.0, %v2416
      %v2418 = vpop.f32.mrf.mxu0
      %2419 = vmatprep.mubr.f32.mxu0 0.0
      %2420 = vmatmul.mubr.f32.gmra.mxu0 %v2306
      %v2421 = vpop.f32.mrf.mxu0
      %v2422 = vadd.f32 0.0, %v2421
      %v2423 = vpop.f32.mrf.mxu0
      %2424 = vmatprep.mubr.f32.mxu0 0.0
      %2425 = vmatmul.mubr.f32.gmra.mxu0 %v2309
      %v2426 = vpop.f32.mrf.mxu0
      %v2427 = vadd.f32 0.0, %v2426
      %v2428 = vpop.f32.mrf.mxu0
      %2429 = vmatprep.mubr.f32.mxu0 0.0
      %2430 = vmatmul.mubr.f32.gmra.mxu0 %v2312
      %v2431 = vpop.f32.mrf.mxu0
      %v2432 = vadd.f32 0.0, %v2431
      %v2433 = vpop.f32.mrf.mxu0
      %2434 = vmatprep.mubr.f32.mxu0 0.0
      %2435 = vmatmul.mubr.f32.gmra.mxu0 %v2315
      %v2436 = vpop.f32.mrf.mxu0
      %v2437 = vadd.f32 0.0, %v2436
      %v2438 = vpop.f32.mrf.mxu0
      %2439 = vmatprep.mubr.f32.mxu0 0.0
      %2440 = vmatmul.mubr.f32.gmra.mxu0 %v2318
      %v2441 = vpop.f32.mrf.mxu0
      %v2442 = vadd.f32 0.0, %v2441
      %v2443 = vpop.f32.mrf.mxu0
      %2444 = vmatprep.mubr.f32.mxu0 0.0
      %2445 = vmatmul.mubr.f32.gmra.mxu0 %v2321
      %v2446 = vpop.f32.mrf.mxu0
      %v2447 = vadd.f32 0.0, %v2446
      %v2448 = vpop.f32.mrf.mxu0
      %2449 = vmatprep.mubr.f32.mxu0 0.0
      %2450 = vmatmul.mubr.f32.gmra.mxu0 %v2324
      %v2451 = vpop.f32.mrf.mxu0
      %v2452 = vadd.f32 0.0, %v2451
      %v2453 = vpop.f32.mrf.mxu0
      %2454 = vmatprep.mubr.f32.mxu0 0.0
      %2455 = vmatmul.mubr.f32.gmra.mxu0 %v2327
      %v2456 = vpop.f32.mrf.mxu0
      %v2457 = vadd.f32 0.0, %v2456
      %v2458 = vpop.f32.mrf.mxu0
      %2459 = vmatprep.mubr.f32.mxu0 0.0
      %2460 = vmatmul.mubr.f32.gmra.mxu0 %v2330
      %v2461 = vpop.f32.mrf.mxu0
      %v2462 = vadd.f32 0.0, %v2461
      %v2463 = vpop.f32.mrf.mxu0
      %2464 = vmatprep.mubr.f32.mxu0 0.0
      %2465 = vmatmul.mubr.f32.gmra.mxu0 %v2333
      %v2466 = vpop.f32.mrf.mxu0
      %v2467 = vadd.f32 0.0, %v2466
      %v2468 = vpop.f32.mrf.mxu0
      %2469 = vmatprep.mubr.f32.mxu0 0.0
      %2470 = vmatmul.mubr.f32.gmra.mxu0 %v2336
      %v2471 = vpop.f32.mrf.mxu0
      %v2472 = vadd.f32 0.0, %v2471
      %v2473 = vpop.f32.mrf.mxu0
      %2474 = vmatprep.mubr.f32.mxu0 0.0
      %2475 = vmatmul.mubr.f32.gmra.mxu0 %v2339
      %v2476 = vpop.f32.mrf.mxu0
      %v2477 = vadd.f32 0.0, %v2476
      %v2478 = vpop.f32.mrf.mxu0
      %2479 = vmatprep.mubr.f32.mxu0 0.0
      %2480 = vmatmul.mubr.f32.gmra.mxu0 %v2342
      %v2481 = vpop.f32.mrf.mxu0
      %v2482 = vadd.f32 0.0, %v2481
      %v2483 = vpop.f32.mrf.mxu0
      %2484 = vmatprep.mubr.f32.mxu0 0.0
      %2485 = vmatmul.mubr.f32.gmra.mxu0 %v2345
      %v2486 = vpop.f32.mrf.mxu0
      %v2487 = vadd.f32 0.0, %v2486
      %v2488 = vpop.f32.mrf.mxu0
      %2489 = vmatprep.mubr.f32.mxu0 0.0
      %2490 = vmatmul.mubr.f32.gmra.mxu0 %v2348
      %v2491 = vpop.f32.mrf.mxu0
      %v2492 = vadd.f32 0.0, %v2491
      %v2493 = vpop.f32.mrf.mxu0
      %2494 = vdwg.mxu0
      %v2496 = vsel %vm1257, %v1724, 0
      %v2499 = vsel %vm1257, %v1725, 0
      %v2502 = vsel %vm1257, %v1726, 0
      %v2505 = vsel %vm1257, %v1727, 0
      %v2508 = vsel %vm1257, %v1728, 0
      %v2511 = vsel %vm1257, %v1729, 0
      %v2514 = vsel %vm1257, %v1730, 0
      %v2517 = vsel %vm1257, %v1731, 0
      %v2520 = vsel %vm1257, %v1732, 0
      %v2523 = vsel %vm1257, %v1733, 0
      %v2526 = vsel %vm1257, %v1734, 0
      %v2529 = vsel %vm1257, %v1735, 0
      %v2532 = vsel %vm1257, %v1736, 0
      %v2535 = vsel %vm1257, %v1737, 0
      %v2538 = vsel %vm1257, %v1738, 0
      %v2541 = vsel %vm1257, %v1739, 0
      %2543 = vmatprep.subr.mxu0 0.0
      %2544 = vmatpush1.msra.mxu0 0.0
      %2545 = vmatprep.subr.mxu0 0.0
      %2546 = vmatpush1.msra.mxu0 0.0
      %2547 = vmatprep.subr.mxu0 0.0
      %2548 = vmatpush1.msra.mxu0 0.0
      %2549 = vmatprep.subr.mxu0 0.0
      %2550 = vmatpush1.msra.mxu0 0.0
      %2551 = vmatprep.subr.mxu0 0.0
      %2552 = vmatpush1.msra.mxu0 0.0
      %2553 = vmatprep.subr.mxu0 0.0
      %2554 = vmatpush1.msra.mxu0 0.0
      %2555 = vmatprep.subr.mxu0 0.0
      %2556 = vmatpush1.msra.mxu0 0.0
      %2557 = vmatprep.subr.mxu0 0.0
      %2558 = vmatpush1.msra.mxu0 0.0
      %2559 = vmatprep.subr.mxu0 0.0
      %2560 = vmatpush1.msra.mxu0 0.0
      %2561 = vmatprep.subr.mxu0 0.0
      %2562 = vmatpush1.msra.mxu0 0.0
      %2563 = vmatprep.subr.mxu0 0.0
      %2564 = vmatpush1.msra.mxu0 0.0
      %2565 = vmatprep.subr.mxu0 0.0
      %2566 = vmatpush1.msra.mxu0 0.0
      %2567 = vmatprep.subr.mxu0 0.0
      %2568 = vmatpush1.msra.mxu0 %v1244
      %2569 = vmatprep.subr.mxu0 0.0
      %2570 = vmatpush1.msra.mxu0 %v1243
      %2571 = vmatprep.subr.mxu0 0.0
      %2572 = vmatpush1.msra.mxu0 %v1242
      %2573 = vmatprep.subr.mxu0 0.0
      %2574 = vmatpush1.msra.mxu0 %v1241
      %2575 = vmatprep.subr.mxu0 0.0
      %2576 = vmatpush2.msra.mxu0 0.0
      %2577 = vmatprep.subr.mxu0 0.0
      %2578 = vmatpush2.msra.mxu0 0.0
      %2579 = vmatprep.subr.mxu0 0.0
      %2580 = vmatpush2.msra.mxu0 0.0
      %2581 = vmatprep.subr.mxu0 0.0
      %2582 = vmatpush2.msra.mxu0 0.0
      %2583 = vmatprep.subr.mxu0 0.0
      %2584 = vmatpush2.msra.mxu0 0.0
      %2585 = vmatprep.subr.mxu0 0.0
      %2586 = vmatpush2.msra.mxu0 0.0
      %2587 = vmatprep.subr.mxu0 0.0
      %2588 = vmatpush2.msra.mxu0 0.0
      %2589 = vmatprep.subr.mxu0 0.0
      %2590 = vmatpush2.msra.mxu0 0.0
      %2591 = vmatprep.subr.mxu0 0.0
      %2592 = vmatpush2.msra.mxu0 0.0
      %2593 = vmatprep.subr.mxu0 0.0
      %2594 = vmatpush2.msra.mxu0 0.0
      %2595 = vmatprep.subr.mxu0 0.0
      %2596 = vmatpush2.msra.mxu0 0.0
      %2597 = vmatprep.subr.mxu0 0.0
      %2598 = vmatpush2.msra.mxu0 0.0
      %2599 = vmatprep.subr.mxu0 0.0
      %2600 = vmatpush2.msra.mxu0 0.0
      %2601 = vmatprep.subr.mxu0 0.0
      %2602 = vmatpush2.msra.mxu0 0.0
      %2603 = vmatprep.subr.mxu0 0.0
      %2604 = vmatpush2.msra.mxu0 0.0
      %2605 = vmatprep.subr.mxu0 0.0
      %2606 = vmatpush2.msra.mxu0 0.0
      %2607 = vmatprep.mubr.f32.mxu0 0.0
      %2608 = vmatmul.mubr.f32.gmra.mxu0 %v2496
      %v2609 = vpop.f32.mrf.mxu0
      %v2610 = vadd.f32 %v2417, %v2609
      %v2611 = vpop.f32.mrf.mxu0
      %2612 = vmatprep.mubr.f32.mxu0 0.0
      %2613 = vmatmul.mubr.f32.gmra.mxu0 %v2499
      %v2614 = vpop.f32.mrf.mxu0
      %v2615 = vadd.f32 %v2422, %v2614
      %v2616 = vpop.f32.mrf.mxu0
      %2617 = vmatprep.mubr.f32.mxu0 0.0
      %2618 = vmatmul.mubr.f32.gmra.mxu0 %v2502
      %v2619 = vpop.f32.mrf.mxu0
      %v2620 = vadd.f32 %v2427, %v2619
      %v2621 = vpop.f32.mrf.mxu0
      %2622 = vmatprep.mubr.f32.mxu0 0.0
      %2623 = vmatmul.mubr.f32.gmra.mxu0 %v2505
      %v2624 = vpop.f32.mrf.mxu0
      %v2625 = vadd.f32 %v2432, %v2624
      %v2626 = vpop.f32.mrf.mxu0
      %2627 = vmatprep.mubr.f32.mxu0 0.0
      %2628 = vmatmul.mubr.f32.gmra.mxu0 %v2508
      %v2629 = vpop.f32.mrf.mxu0
      %v2630 = vadd.f32 %v2437, %v2629
      %v2631 = vpop.f32.mrf.mxu0
      %2632 = vmatprep.mubr.f32.mxu0 0.0
      %2633 = vmatmul.mubr.f32.gmra.mxu0 %v2511
      %v2634 = vpop.f32.mrf.mxu0
      %v2635 = vadd.f32 %v2442, %v2634
      %v2636 = vpop.f32.mrf.mxu0
      %2637 = vmatprep.mubr.f32.mxu0 0.0
      %2638 = vmatmul.mubr.f32.gmra.mxu0 %v2514
      %v2639 = vpop.f32.mrf.mxu0
      %v2640 = vadd.f32 %v2447, %v2639
      %v2641 = vpop.f32.mrf.mxu0
      %2642 = vmatprep.mubr.f32.mxu0 0.0
      %2643 = vmatmul.mubr.f32.gmra.mxu0 %v2517
      %v2644 = vpop.f32.mrf.mxu0
      %v2645 = vadd.f32 %v2452, %v2644
      %v2646 = vpop.f32.mrf.mxu0
      %2647 = vmatprep.mubr.f32.mxu0 0.0
      %2648 = vmatmul.mubr.f32.gmra.mxu0 %v2520
      %v2649 = vpop.f32.mrf.mxu0
      %v2650 = vadd.f32 %v2457, %v2649
      %v2651 = vpop.f32.mrf.mxu0
      %2652 = vmatprep.mubr.f32.mxu0 0.0
      %2653 = vmatmul.mubr.f32.gmra.mxu0 %v2523
      %v2654 = vpop.f32.mrf.mxu0
      %v2655 = vadd.f32 %v2462, %v2654
      %v2656 = vpop.f32.mrf.mxu0
      %2657 = vmatprep.mubr.f32.mxu0 0.0
      %2658 = vmatmul.mubr.f32.gmra.mxu0 %v2526
      %v2659 = vpop.f32.mrf.mxu0
      %v2660 = vadd.f32 %v2467, %v2659
      %v2661 = vpop.f32.mrf.mxu0
      %2662 = vmatprep.mubr.f32.mxu0 0.0
      %2663 = vmatmul.mubr.f32.gmra.mxu0 %v2529
      %v2664 = vpop.f32.mrf.mxu0
      %v2665 = vadd.f32 %v2472, %v2664
      %v2666 = vpop.f32.mrf.mxu0
      %2667 = vmatprep.mubr.f32.mxu0 0.0
      %2668 = vmatmul.mubr.f32.gmra.mxu0 %v2532
      %v2669 = vpop.f32.mrf.mxu0
      %v2670 = vadd.f32 %v2477, %v2669
      %v2671 = vpop.f32.mrf.mxu0
      %2672 = vmatprep.mubr.f32.mxu0 0.0
      %2673 = vmatmul.mubr.f32.gmra.mxu0 %v2535
      %v2674 = vpop.f32.mrf.mxu0
      %v2675 = vadd.f32 %v2482, %v2674
      %v2676 = vpop.f32.mrf.mxu0
      %2677 = vmatprep.mubr.f32.mxu0 0.0
      %2678 = vmatmul.mubr.f32.gmra.mxu0 %v2538
      %v2679 = vpop.f32.mrf.mxu0
      %v2680 = vadd.f32 %v2487, %v2679
      %v2681 = vpop.f32.mrf.mxu0
      %2682 = vmatprep.mubr.f32.mxu0 0.0
      %2683 = vmatmul.mubr.f32.gmra.mxu0 %v2541
      %v2684 = vpop.f32.mrf.mxu0
      %v2685 = vadd.f32 %v2492, %v2684
      %v2686 = vpop.f32.mrf.mxu0
      %2687 = vdwg.mxu0
      %2688 = vrot.lane.b32.xlu0 %v800, 64
      %v2689 = vpop.permute.xlu0 %2688
      %2690 = vrot.lane.b32.xlu0 %v801, 64
      %v2691 = vpop.permute.xlu0 %2690
      %2692 = vrot.lane.b32.xlu0 %v802, 64
      %v2693 = vpop.permute.xlu0 %2692
      %2694 = vrot.lane.b32.xlu0 %v803, 64
      %v2695 = vpop.permute.xlu0 %2694
      %2696 = vrot.lane.b32.xlu0 %v804, 64
      %v2697 = vpop.permute.xlu0 %2696
      %2698 = vrot.lane.b32.xlu0 %v805, 64
      %v2699 = vpop.permute.xlu0 %2698
      %2700 = vrot.lane.b32.xlu0 %v806, 64
      %v2701 = vpop.permute.xlu0 %2700
      %2702 = vrot.lane.b32.xlu0 %v807, 64
      %v2703 = vpop.permute.xlu0 %2702
      %2704 = vrot.lane.b32.xlu0 %v808, 64
      %v2705 = vpop.permute.xlu0 %2704
      %2706 = vrot.lane.b32.xlu0 %v809, 64
      %v2707 = vpop.permute.xlu0 %2706
      %2708 = vrot.lane.b32.xlu0 %v810, 64
      %v2709 = vpop.permute.xlu0 %2708
      %2710 = vrot.lane.b32.xlu0 %v811, 64
      %v2711 = vpop.permute.xlu0 %2710
      %2712 = vrot.lane.b32.xlu0 %v812, 64
      %v2713 = vpop.permute.xlu0 %2712
      %2714 = vrot.lane.b32.xlu0 %v813, 64
      %v2715 = vpop.permute.xlu0 %2714
      %2716 = vrot.lane.b32.xlu0 %v814, 64
      %v2717 = vpop.permute.xlu0 %2716
      %2718 = vrot.lane.b32.xlu0 %v815, 64
      %v2719 = vpop.permute.xlu0 %2718
      %v2720 = vsel %vm1257, %v2689, 0
      %v2722 = vsel %vm1257, %v2691, 0
      %v2724 = vsel %vm1257, %v2693, 0
      %v2726 = vsel %vm1257, %v2695, 0
      %v2728 = vsel %vm1257, %v2697, 0
      %v2730 = vsel %vm1257, %v2699, 0
      %v2732 = vsel %vm1257, %v2701, 0
      %v2734 = vsel %vm1257, %v2703, 0
      %v2736 = vsel %vm1257, %v2705, 0
      %v2738 = vsel %vm1257, %v2707, 0
      %v2740 = vsel %vm1257, %v2709, 0
      %v2742 = vsel %vm1257, %v2711, 0
      %v2744 = vsel %vm1257, %v2713, 0
      %v2746 = vsel %vm1257, %v2715, 0
      %v2748 = vsel %vm1257, %v2717, 0
      %v2750 = vsel %vm1257, %v2719, 0
      %2752 = vmatprep.subr.mxu0 0.0
      %2753 = vmatpush1.msra.mxu0 0.0
      %2754 = vmatprep.subr.mxu0 0.0
      %2755 = vmatpush1.msra.mxu0 0.0
      %2756 = vmatprep.subr.mxu0 0.0
      %2757 = vmatpush1.msra.mxu0 0.0
      %2758 = vmatprep.subr.mxu0 0.0
      %2759 = vmatpush1.msra.mxu0 0.0
      %2760 = vmatprep.subr.mxu0 0.0
      %2761 = vmatpush1.msra.mxu0 0.0
      %2762 = vmatprep.subr.mxu0 0.0
      %2763 = vmatpush1.msra.mxu0 0.0
      %2764 = vmatprep.subr.mxu0 0.0
      %2765 = vmatpush1.msra.mxu0 0.0
      %2766 = vmatprep.subr.mxu0 0.0
      %2767 = vmatpush1.msra.mxu0 0.0
      %2768 = vmatprep.subr.mxu0 0.0
      %2769 = vmatpush1.msra.mxu0 0.0
      %2770 = vmatprep.subr.mxu0 0.0
      %2771 = vmatpush1.msra.mxu0 0.0
      %2772 = vmatprep.subr.mxu0 0.0
      %2773 = vmatpush1.msra.mxu0 0.0
      %2774 = vmatprep.subr.mxu0 0.0
      %2775 = vmatpush1.msra.mxu0 0.0
      %2776 = vmatprep.subr.mxu0 0.0
      %2777 = vmatpush1.msra.mxu0 %v1050
      %2778 = vmatprep.subr.mxu0 0.0
      %2779 = vmatpush1.msra.mxu0 %v1045
      %2780 = vmatprep.subr.mxu0 0.0
      %2781 = vmatpush1.msra.mxu0 %v1040
      %2782 = vmatprep.subr.mxu0 0.0
      %2783 = vmatpush1.msra.mxu0 %v1035
      %2784 = vmatprep.subr.mxu0 0.0
      %2785 = vmatpush2.msra.mxu0 0.0
      %2786 = vmatprep.subr.mxu0 0.0
      %2787 = vmatpush2.msra.mxu0 0.0
      %2788 = vmatprep.subr.mxu0 0.0
      %2789 = vmatpush2.msra.mxu0 0.0
      %2790 = vmatprep.subr.mxu0 0.0
      %2791 = vmatpush2.msra.mxu0 0.0
      %2792 = vmatprep.subr.mxu0 0.0
      %2793 = vmatpush2.msra.mxu0 0.0
      %2794 = vmatprep.subr.mxu0 0.0
      %2795 = vmatpush2.msra.mxu0 0.0
      %2796 = vmatprep.subr.mxu0 0.0
      %2797 = vmatpush2.msra.mxu0 0.0
      %2798 = vmatprep.subr.mxu0 0.0
      %2799 = vmatpush2.msra.mxu0 0.0
      %2800 = vmatprep.subr.mxu0 0.0
      %2801 = vmatpush2.msra.mxu0 0.0
      %2802 = vmatprep.subr.mxu0 0.0
      %2803 = vmatpush2.msra.mxu0 0.0
      %2804 = vmatprep.subr.mxu0 0.0
      %2805 = vmatpush2.msra.mxu0 0.0
      %2806 = vmatprep.subr.mxu0 0.0
      %2807 = vmatpush2.msra.mxu0 0.0
      %2808 = vmatprep.subr.mxu0 0.0
      %2809 = vmatpush2.msra.mxu0 0.0
      %2810 = vmatprep.subr.mxu0 0.0
      %2811 = vmatpush2.msra.mxu0 0.0
      %2812 = vmatprep.subr.mxu0 0.0
      %2813 = vmatpush2.msra.mxu0 0.0
      %2814 = vmatprep.subr.mxu0 0.0
      %2815 = vmatpush2.msra.mxu0 0.0
      %2816 = vmatprep.mubr.f32.mxu0 0.0
      %2817 = vmatmul.mubr.f32.gmra.mxu0 %v2720
      %v2818 = vpop.f32.mrf.mxu0
      %v2819 = vadd.f32 0.0, %v2818
      %v2820 = vpop.f32.mrf.mxu0
      %2821 = vmatprep.mubr.f32.mxu0 0.0
      %2822 = vmatmul.mubr.f32.gmra.mxu0 %v2722
      %v2823 = vpop.f32.mrf.mxu0
      %v2824 = vadd.f32 0.0, %v2823
      %v2825 = vpop.f32.mrf.mxu0
      %2826 = vmatprep.mubr.f32.mxu0 0.0
      %2827 = vmatmul.mubr.f32.gmra.mxu0 %v2724
      %v2828 = vpop.f32.mrf.mxu0
      %v2829 = vadd.f32 0.0, %v2828
      %v2830 = vpop.f32.mrf.mxu0
      %2831 = vmatprep.mubr.f32.mxu0 0.0
      %2832 = vmatmul.mubr.f32.gmra.mxu0 %v2726
      %v2833 = vpop.f32.mrf.mxu0
      %v2834 = vadd.f32 0.0, %v2833
      %v2835 = vpop.f32.mrf.mxu0
      %2836 = vmatprep.mubr.f32.mxu0 0.0
      %2837 = vmatmul.mubr.f32.gmra.mxu0 %v2728
      %v2838 = vpop.f32.mrf.mxu0
      %v2839 = vadd.f32 0.0, %v2838
      %v2840 = vpop.f32.mrf.mxu0
      %2841 = vmatprep.mubr.f32.mxu0 0.0
      %2842 = vmatmul.mubr.f32.gmra.mxu0 %v2730
      %v2843 = vpop.f32.mrf.mxu0
      %v2844 = vadd.f32 0.0, %v2843
      %v2845 = vpop.f32.mrf.mxu0
      %2846 = vmatprep.mubr.f32.mxu0 0.0
      %2847 = vmatmul.mubr.f32.gmra.mxu0 %v2732
      %v2848 = vpop.f32.mrf.mxu0
      %v2849 = vadd.f32 0.0, %v2848
      %v2850 = vpop.f32.mrf.mxu0
      %2851 = vmatprep.mubr.f32.mxu0 0.0
      %2852 = vmatmul.mubr.f32.gmra.mxu0 %v2734
      %v2853 = vpop.f32.mrf.mxu0
      %v2854 = vadd.f32 0.0, %v2853
      %v2855 = vpop.f32.mrf.mxu0
      %2856 = vmatprep.mubr.f32.mxu0 0.0
      %2857 = vmatmul.mubr.f32.gmra.mxu0 %v2736
      %v2858 = vpop.f32.mrf.mxu0
      %v2859 = vadd.f32 0.0, %v2858
      %v2860 = vpop.f32.mrf.mxu0
      %2861 = vmatprep.mubr.f32.mxu0 0.0
      %2862 = vmatmul.mubr.f32.gmra.mxu0 %v2738
      %v2863 = vpop.f32.mrf.mxu0
      %v2864 = vadd.f32 0.0, %v2863
      %v2865 = vpop.f32.mrf.mxu0
      %2866 = vmatprep.mubr.f32.mxu0 0.0
      %2867 = vmatmul.mubr.f32.gmra.mxu0 %v2740
      %v2868 = vpop.f32.mrf.mxu0
      %v2869 = vadd.f32 0.0, %v2868
      %v2870 = vpop.f32.mrf.mxu0
      %2871 = vmatprep.mubr.f32.mxu0 0.0
      %2872 = vmatmul.mubr.f32.gmra.mxu0 %v2742
      %v2873 = vpop.f32.mrf.mxu0
      %v2874 = vadd.f32 0.0, %v2873
      %v2875 = vpop.f32.mrf.mxu0
      %2876 = vmatprep.mubr.f32.mxu0 0.0
      %2877 = vmatmul.mubr.f32.gmra.mxu0 %v2744
      %v2878 = vpop.f32.mrf.mxu0
      %v2879 = vadd.f32 0.0, %v2878
      %v2880 = vpop.f32.mrf.mxu0
      %2881 = vmatprep.mubr.f32.mxu0 0.0
      %2882 = vmatmul.mubr.f32.gmra.mxu0 %v2746
      %v2883 = vpop.f32.mrf.mxu0
      %v2884 = vadd.f32 0.0, %v2883
      %v2885 = vpop.f32.mrf.mxu0
      %2886 = vmatprep.mubr.f32.mxu0 0.0
      %2887 = vmatmul.mubr.f32.gmra.mxu0 %v2748
      %v2888 = vpop.f32.mrf.mxu0
      %v2889 = vadd.f32 0.0, %v2888
      %v2890 = vpop.f32.mrf.mxu0
      %2891 = vmatprep.mubr.f32.mxu0 0.0
      %2892 = vmatmul.mubr.f32.gmra.mxu0 %v2750
      %v2893 = vpop.f32.mrf.mxu0
      %v2894 = vadd.f32 0.0, %v2893
      %v2895 = vpop.f32.mrf.mxu0
      %2896 = vdwg.mxu0
      %2897 = vmax.xlane.f32.xlu0 %v2819
      %v2898 = vpop.xlane.xlu0 %2897
      %2899 = vmax.xlane.f32.xlu0 %v2824
      %v2900 = vpop.xlane.xlu0 %2899
      %2901 = vmax.xlane.f32.xlu0 %v2829
      %v2902 = vpop.xlane.xlu0 %2901
      %2903 = vmax.xlane.f32.xlu0 %v2834
      %v2904 = vpop.xlane.xlu0 %2903
      %2905 = vmax.xlane.f32.xlu0 %v2839
      %v2906 = vpop.xlane.xlu0 %2905
      %2907 = vmax.xlane.f32.xlu0 %v2844
      %v2908 = vpop.xlane.xlu0 %2907
      %2909 = vmax.xlane.f32.xlu0 %v2849
      %v2910 = vpop.xlane.xlu0 %2909
      %2911 = vmax.xlane.f32.xlu0 %v2854
      %v2912 = vpop.xlane.xlu0 %2911
      %2913 = vmax.xlane.f32.xlu0 %v2859
      %v2914 = vpop.xlane.xlu0 %2913
      %2915 = vmax.xlane.f32.xlu0 %v2864
      %v2916 = vpop.xlane.xlu0 %2915
      %2917 = vmax.xlane.f32.xlu0 %v2869
      %v2918 = vpop.xlane.xlu0 %2917
      %2919 = vmax.xlane.f32.xlu0 %v2874
      %v2920 = vpop.xlane.xlu0 %2919
      %2921 = vmax.xlane.f32.xlu0 %v2879
      %v2922 = vpop.xlane.xlu0 %2921
      %2923 = vmax.xlane.f32.xlu0 %v2884
      %v2924 = vpop.xlane.xlu0 %2923
      %2925 = vmax.xlane.f32.xlu0 %v2889
      %v2926 = vpop.xlane.xlu0 %2925
      %2927 = vmax.xlane.f32.xlu0 %v2894
      %v2928 = vpop.xlane.xlu0 %2927
      %v2929 = vsub.f32 %v2819, %v2898
      %v2930 = vsub.f32 %v2824, %v2900
      %v2931 = vsub.f32 %v2829, %v2902
      %v2932 = vsub.f32 %v2834, %v2904
      %v2933 = vsub.f32 %v2839, %v2906
      %v2934 = vsub.f32 %v2844, %v2908
      %v2935 = vsub.f32 %v2849, %v2910
      %v2936 = vsub.f32 %v2854, %v2912
      %v2937 = vsub.f32 %v2859, %v2914
      %v2938 = vsub.f32 %v2864, %v2916
      %v2939 = vsub.f32 %v2869, %v2918
      %v2940 = vsub.f32 %v2874, %v2920
      %v2941 = vsub.f32 %v2879, %v2922
      %v2942 = vsub.f32 %v2884, %v2924
      %v2943 = vsub.f32 %v2889, %v2926
      %v2944 = vsub.f32 %v2894, %v2928
      %v2945 = vmul.f32 %v2929, 1.442695
      %v2946 = vpow.pop %v2945
      %v2947 = vmul.f32 %v2930, 1.442695
      %v2948 = vpow.pop %v2947
      %v2949 = vmul.f32 %v2931, 1.442695
      %v2950 = vpow.pop %v2949
      %v2951 = vmul.f32 %v2932, 1.442695
      %v2952 = vpow.pop %v2951
      %v2953 = vmul.f32 %v2933, 1.442695
      %v2954 = vpow.pop %v2953
      %v2955 = vmul.f32 %v2934, 1.442695
      %v2956 = vpow.pop %v2955
      %v2957 = vmul.f32 %v2935, 1.442695
      %v2958 = vpow.pop %v2957
      %v2959 = vmul.f32 %v2936, 1.442695
      %v2960 = vpow.pop %v2959
      %v2961 = vmul.f32 %v2937, 1.442695
      %v2962 = vpow.pop %v2961
      %v2963 = vmul.f32 %v2938, 1.442695
      %v2964 = vpow.pop %v2963
      %v2965 = vmul.f32 %v2939, 1.442695
      %v2966 = vpow.pop %v2965
      %v2967 = vmul.f32 %v2940, 1.442695
      %v2968 = vpow.pop %v2967
      %v2969 = vmul.f32 %v2941, 1.442695
      %v2970 = vpow.pop %v2969
      %v2971 = vmul.f32 %v2942, 1.442695
      %v2972 = vpow.pop %v2971
      %v2973 = vmul.f32 %v2943, 1.442695
      %v2974 = vpow.pop %v2973
      %v2975 = vmul.f32 %v2944, 1.442695
      %v2976 = vpow.pop %v2975
      %2977 = vadd.xlane.f32.xlu0 %v2946
      %v2978 = vpop.xlane.xlu0 %2977
      %2979 = vadd.xlane.f32.xlu0 %v2948
      %v2980 = vpop.xlane.xlu0 %2979
      %2981 = vadd.xlane.f32.xlu0 %v2950
      %v2982 = vpop.xlane.xlu0 %2981
      %2983 = vadd.xlane.f32.xlu0 %v2952
      %v2984 = vpop.xlane.xlu0 %2983
      %2985 = vadd.xlane.f32.xlu0 %v2954
      %v2986 = vpop.xlane.xlu0 %2985
      %2987 = vadd.xlane.f32.xlu0 %v2956
      %v2988 = vpop.xlane.xlu0 %2987
      %2989 = vadd.xlane.f32.xlu0 %v2958
      %v2990 = vpop.xlane.xlu0 %2989
      %2991 = vadd.xlane.f32.xlu0 %v2960
      %v2992 = vpop.xlane.xlu0 %2991
      %2993 = vadd.xlane.f32.xlu0 %v2962
      %v2994 = vpop.xlane.xlu0 %2993
      %2995 = vadd.xlane.f32.xlu0 %v2964
      %v2996 = vpop.xlane.xlu0 %2995
      %2997 = vadd.xlane.f32.xlu0 %v2966
      %v2998 = vpop.xlane.xlu0 %2997
      %2999 = vadd.xlane.f32.xlu0 %v2968
      %v3000 = vpop.xlane.xlu0 %2999
      %3001 = vadd.xlane.f32.xlu0 %v2970
      %v3002 = vpop.xlane.xlu0 %3001
      %3003 = vadd.xlane.f32.xlu0 %v2972
      %v3004 = vpop.xlane.xlu0 %3003
      %3005 = vadd.xlane.f32.xlu0 %v2974
      %v3006 = vpop.xlane.xlu0 %3005
      %3007 = vadd.xlane.f32.xlu0 %v2976
      %v3008 = vpop.xlane.xlu0 %3007
      %3009 = vrot.lane.b32.xlu0 %v1163, 64
      %v3010 = vpop.permute.xlu0 %3009
      %3011 = vrot.lane.b32.xlu0 %v1168, 64
      %v3012 = vpop.permute.xlu0 %3011
      %3013 = vrot.lane.b32.xlu0 %v1173, 64
      %v3014 = vpop.permute.xlu0 %3013
      %3015 = vrot.lane.b32.xlu0 %v1178, 64
      %v3016 = vpop.permute.xlu0 %3015
      %3017 = vrot.lane.b32.xlu0 %v1183, 64
      %v3018 = vpop.permute.xlu0 %3017
      %3019 = vrot.lane.b32.xlu0 %v1188, 64
      %v3020 = vpop.permute.xlu0 %3019
      %3021 = vrot.lane.b32.xlu0 %v1193, 64
      %v3022 = vpop.permute.xlu0 %3021
      %3023 = vrot.lane.b32.xlu0 %v1198, 64
      %v3024 = vpop.permute.xlu0 %3023
      %3025 = vrot.lane.b32.xlu0 %v1203, 64
      %v3026 = vpop.permute.xlu0 %3025
      %3027 = vrot.lane.b32.xlu0 %v1208, 64
      %v3028 = vpop.permute.xlu0 %3027
      %3029 = vrot.lane.b32.xlu0 %v1213, 64
      %v3030 = vpop.permute.xlu0 %3029
      %3031 = vrot.lane.b32.xlu0 %v1218, 64
      %v3032 = vpop.permute.xlu0 %3031
      %3033 = vrot.lane.b32.xlu0 %v1223, 64
      %v3034 = vpop.permute.xlu0 %3033
      %3035 = vrot.lane.b32.xlu0 %v1228, 64
      %v3036 = vpop.permute.xlu0 %3035
      %3037 = vrot.lane.b32.xlu0 %v1233, 64
      %v3038 = vpop.permute.xlu0 %3037
      %3039 = vrot.lane.b32.xlu0 %v1238, 64
      %v3040 = vpop.permute.xlu0 %3039
      %3057 = vmatprep.subr.mxu0 0.0
      %3058 = vmatpush1.msra.mxu0 %v3040
      %3059 = vmatprep.subr.mxu0 0.0
      %3060 = vmatpush1.msra.mxu0 %v3038
      %3061 = vmatprep.subr.mxu0 0.0
      %3062 = vmatpush1.msra.mxu0 %v3036
      %3063 = vmatprep.subr.mxu0 0.0
      %3064 = vmatpush1.msra.mxu0 %v3034
      %3065 = vmatprep.subr.mxu0 0.0
      %3066 = vmatpush1.msra.mxu0 %v3032
      %3067 = vmatprep.subr.mxu0 0.0
      %3068 = vmatpush1.msra.mxu0 %v3030
      %3069 = vmatprep.subr.mxu0 0.0
      %3070 = vmatpush1.msra.mxu0 %v3028
      %3071 = vmatprep.subr.mxu0 0.0
      %3072 = vmatpush1.msra.mxu0 %v3026
      %3073 = vmatprep.subr.mxu0 0.0
      %3074 = vmatpush1.msra.mxu0 %v3024
      %3075 = vmatprep.subr.mxu0 0.0
      %3076 = vmatpush1.msra.mxu0 %v3022
      %3077 = vmatprep.subr.mxu0 0.0
      %3078 = vmatpush1.msra.mxu0 %v3020
      %3079 = vmatprep.subr.mxu0 0.0
      %3080 = vmatpush1.msra.mxu0 %v3018
      %3081 = vmatprep.subr.mxu0 0.0
      %3082 = vmatpush1.msra.mxu0 %v3016
      %3083 = vmatprep.subr.mxu0 0.0
      %3084 = vmatpush1.msra.mxu0 %v3014
      %3085 = vmatprep.subr.mxu0 0.0
      %3086 = vmatpush1.msra.mxu0 %v3012
      %3087 = vmatprep.subr.mxu0 0.0
      %3088 = vmatpush1.msra.mxu0 %v3010
      %3089 = vmatprep.subr.mxu0 0.0
      %3090 = vmatpush2.msra.mxu0 0.0
      %3091 = vmatprep.subr.mxu0 0.0
      %3092 = vmatpush2.msra.mxu0 0.0
      %3093 = vmatprep.subr.mxu0 0.0
      %3094 = vmatpush2.msra.mxu0 0.0
      %3095 = vmatprep.subr.mxu0 0.0
      %3096 = vmatpush2.msra.mxu0 0.0
      %3097 = vmatprep.subr.mxu0 0.0
      %3098 = vmatpush2.msra.mxu0 0.0
      %3099 = vmatprep.subr.mxu0 0.0
      %3100 = vmatpush2.msra.mxu0 0.0
      %3101 = vmatprep.subr.mxu0 0.0
      %3102 = vmatpush2.msra.mxu0 0.0
      %3103 = vmatprep.subr.mxu0 0.0
      %3104 = vmatpush2.msra.mxu0 0.0
      %3105 = vmatprep.subr.mxu0 0.0
      %3106 = vmatpush2.msra.mxu0 0.0
      %3107 = vmatprep.subr.mxu0 0.0
      %3108 = vmatpush2.msra.mxu0 0.0
      %3109 = vmatprep.subr.mxu0 0.0
      %3110 = vmatpush2.msra.mxu0 0.0
      %3111 = vmatprep.subr.mxu0 0.0
      %3112 = vmatpush2.msra.mxu0 0.0
      %3113 = vmatprep.subr.mxu0 0.0
      %3114 = vmatpush2.msra.mxu0 0.0
      %3115 = vmatprep.subr.mxu0 0.0
      %3116 = vmatpush2.msra.mxu0 0.0
      %3117 = vmatprep.subr.mxu0 0.0
      %3118 = vmatpush2.msra.mxu0 0.0
      %3119 = vmatprep.subr.mxu0 0.0
      %3120 = vmatpush2.msra.mxu0 0.0
      %3121 = vmatprep.mubr.f32.mxu0 0.0
      %3122 = vmatmul.mubr.f32.gmra.mxu0 %v2946
      %v3123 = vpop.f32.mrf.mxu0
      %v3124 = vadd.f32 0.0, %v3123
      %v3125 = vpop.f32.mrf.mxu0
      %3126 = vmatprep.mubr.f32.mxu0 0.0
      %3127 = vmatmul.mubr.f32.gmra.mxu0 %v2948
      %v3128 = vpop.f32.mrf.mxu0
      %v3129 = vadd.f32 0.0, %v3128
      %v3130 = vpop.f32.mrf.mxu0
      %3131 = vmatprep.mubr.f32.mxu0 0.0
      %3132 = vmatmul.mubr.f32.gmra.mxu0 %v2950
      %v3133 = vpop.f32.mrf.mxu0
      %v3134 = vadd.f32 0.0, %v3133
      %v3135 = vpop.f32.mrf.mxu0
      %3136 = vmatprep.mubr.f32.mxu0 0.0
      %3137 = vmatmul.mubr.f32.gmra.mxu0 %v2952
      %v3138 = vpop.f32.mrf.mxu0
      %v3139 = vadd.f32 0.0, %v3138
      %v3140 = vpop.f32.mrf.mxu0
      %3141 = vmatprep.mubr.f32.mxu0 0.0
      %3142 = vmatmul.mubr.f32.gmra.mxu0 %v2954
      %v3143 = vpop.f32.mrf.mxu0
      %v3144 = vadd.f32 0.0, %v3143
      %v3145 = vpop.f32.mrf.mxu0
      %3146 = vmatprep.mubr.f32.mxu0 0.0
      %3147 = vmatmul.mubr.f32.gmra.mxu0 %v2956
      %v3148 = vpop.f32.mrf.mxu0
      %v3149 = vadd.f32 0.0, %v3148
      %v3150 = vpop.f32.mrf.mxu0
      %3151 = vmatprep.mubr.f32.mxu0 0.0
      %3152 = vmatmul.mubr.f32.gmra.mxu0 %v2958
      %v3153 = vpop.f32.mrf.mxu0
      %v3154 = vadd.f32 0.0, %v3153
      %v3155 = vpop.f32.mrf.mxu0
      %3156 = vmatprep.mubr.f32.mxu0 0.0
      %3157 = vmatmul.mubr.f32.gmra.mxu0 %v2960
      %v3158 = vpop.f32.mrf.mxu0
      %v3159 = vadd.f32 0.0, %v3158
      %v3160 = vpop.f32.mrf.mxu0
      %3161 = vmatprep.mubr.f32.mxu0 0.0
      %3162 = vmatmul.mubr.f32.gmra.mxu0 %v2962
      %v3163 = vpop.f32.mrf.mxu0
      %v3164 = vadd.f32 0.0, %v3163
      %v3165 = vpop.f32.mrf.mxu0
      %3166 = vmatprep.mubr.f32.mxu0 0.0
      %3167 = vmatmul.mubr.f32.gmra.mxu0 %v2964
      %v3168 = vpop.f32.mrf.mxu0
      %v3169 = vadd.f32 0.0, %v3168
      %v3170 = vpop.f32.mrf.mxu0
      %3171 = vmatprep.mubr.f32.mxu0 0.0
      %3172 = vmatmul.mubr.f32.gmra.mxu0 %v2966
      %v3173 = vpop.f32.mrf.mxu0
      %v3174 = vadd.f32 0.0, %v3173
      %v3175 = vpop.f32.mrf.mxu0
      %3176 = vmatprep.mubr.f32.mxu0 0.0
      %3177 = vmatmul.mubr.f32.gmra.mxu0 %v2968
      %v3178 = vpop.f32.mrf.mxu0
      %v3179 = vadd.f32 0.0, %v3178
      %v3180 = vpop.f32.mrf.mxu0
      %3181 = vmatprep.mubr.f32.mxu0 0.0
      %3182 = vmatmul.mubr.f32.gmra.mxu0 %v2970
      %v3183 = vpop.f32.mrf.mxu0
      %v3184 = vadd.f32 0.0, %v3183
      %v3185 = vpop.f32.mrf.mxu0
      %3186 = vmatprep.mubr.f32.mxu0 0.0
      %3187 = vmatmul.mubr.f32.gmra.mxu0 %v2972
      %v3188 = vpop.f32.mrf.mxu0
      %v3189 = vadd.f32 0.0, %v3188
      %v3190 = vpop.f32.mrf.mxu0
      %3191 = vmatprep.mubr.f32.mxu0 0.0
      %3192 = vmatmul.mubr.f32.gmra.mxu0 %v2974
      %v3193 = vpop.f32.mrf.mxu0
      %v3194 = vadd.f32 0.0, %v3193
      %v3195 = vpop.f32.mrf.mxu0
      %3196 = vmatprep.mubr.f32.mxu0 0.0
      %3197 = vmatmul.mubr.f32.gmra.mxu0 %v2976
      %v3198 = vpop.f32.mrf.mxu0
      %v3199 = vadd.f32 0.0, %v3198
      %v3200 = vpop.f32.mrf.mxu0
      %3201 = vdwg.mxu0
      %v3202 = vrcp.pop %v2978
      %v3203 = vrcp.pop %v2980
      %v3204 = vrcp.pop %v2982
      %v3205 = vrcp.pop %v2984
      %v3206 = vrcp.pop %v2986
      %v3207 = vrcp.pop %v2988
      %v3208 = vrcp.pop %v2990
      %v3209 = vrcp.pop %v2992
      %v3210 = vrcp.pop %v2994
      %v3211 = vrcp.pop %v2996
      %v3212 = vrcp.pop %v2998
      %v3213 = vrcp.pop %v3000
      %v3214 = vrcp.pop %v3002
      %v3215 = vrcp.pop %v3004
      %v3216 = vrcp.pop %v3006
      %v3217 = vrcp.pop %v3008
      %v3218 = vmul.f32 %v3124, %v3202
      %v3219 = vmul.f32 %v3129, %v3203
      %v3220 = vmul.f32 %v3134, %v3204
      %v3221 = vmul.f32 %v3139, %v3205
      %v3222 = vmul.f32 %v3144, %v3206
      %v3223 = vmul.f32 %v3149, %v3207
      %v3224 = vmul.f32 %v3154, %v3208
      %v3225 = vmul.f32 %v3159, %v3209
      %v3226 = vmul.f32 %v3164, %v3210
      %v3227 = vmul.f32 %v3169, %v3211
      %v3228 = vmul.f32 %v3174, %v3212
      %v3229 = vmul.f32 %v3179, %v3213
      %v3230 = vmul.f32 %v3184, %v3214
      %v3231 = vmul.f32 %v3189, %v3215
      %v3232 = vmul.f32 %v3194, %v3216
      %v3233 = vmul.f32 %v3199, %v3217
      %v3235 = vsel %vm1257, %v3218, 0
      %v3238 = vsel %vm1257, %v3219, 0
      %v3241 = vsel %vm1257, %v3220, 0
      %v3244 = vsel %vm1257, %v3221, 0
      %v3247 = vsel %vm1257, %v3222, 0
      %v3250 = vsel %vm1257, %v3223, 0
      %v3253 = vsel %vm1257, %v3224, 0
      %v3256 = vsel %vm1257, %v3225, 0
      %v3259 = vsel %vm1257, %v3226, 0
      %v3262 = vsel %vm1257, %v3227, 0
      %v3265 = vsel %vm1257, %v3228, 0
      %v3268 = vsel %vm1257, %v3229, 0
      %v3271 = vsel %vm1257, %v3230, 0
      %v3274 = vsel %vm1257, %v3231, 0
      %v3277 = vsel %vm1257, %v3232, 0
      %v3280 = vsel %vm1257, %v3233, 0
      %3282 = vmatprep.subr.mxu0 0.0
      %3283 = vmatpush1.msra.mxu0 0.0
      %3284 = vmatprep.subr.mxu0 0.0
      %3285 = vmatpush1.msra.mxu0 0.0
      %3286 = vmatprep.subr.mxu0 0.0
      %3287 = vmatpush1.msra.mxu0 0.0
      %3288 = vmatprep.subr.mxu0 0.0
      %3289 = vmatpush1.msra.mxu0 0.0
      %3290 = vmatprep.subr.mxu0 0.0
      %3291 = vmatpush1.msra.mxu0 0.0
      %3292 = vmatprep.subr.mxu0 0.0
      %3293 = vmatpush1.msra.mxu0 0.0
      %3294 = vmatprep.subr.mxu0 0.0
      %3295 = vmatpush1.msra.mxu0 0.0
      %3296 = vmatprep.subr.mxu0 0.0
      %3297 = vmatpush1.msra.mxu0 0.0
      %3298 = vmatprep.subr.mxu0 0.0
      %3299 = vmatpush1.msra.mxu0 0.0
      %3300 = vmatprep.subr.mxu0 0.0
      %3301 = vmatpush1.msra.mxu0 0.0
      %3302 = vmatprep.subr.mxu0 0.0
      %3303 = vmatpush1.msra.mxu0 0.0
      %3304 = vmatprep.subr.mxu0 0.0
      %3305 = vmatpush1.msra.mxu0 0.0
      %3306 = vmatprep.subr.mxu0 0.0
      %3307 = vmatpush1.msra.mxu0 %v1252
      %3308 = vmatprep.subr.mxu0 0.0
      %3309 = vmatpush1.msra.mxu0 %v1251
      %3310 = vmatprep.subr.mxu0 0.0
      %3311 = vmatpush1.msra.mxu0 %v1250
      %3312 = vmatprep.subr.mxu0 0.0
      %3313 = vmatpush1.msra.mxu0 %v1249
      %3314 = vmatprep.subr.mxu0 0.0
      %3315 = vmatpush2.msra.mxu0 0.0
      %3316 = vmatprep.subr.mxu0 0.0
      %3317 = vmatpush2.msra.mxu0 0.0
      %3318 = vmatprep.subr.mxu0 0.0
      %3319 = vmatpush2.msra.mxu0 0.0
      %3320 = vmatprep.subr.mxu0 0.0
      %3321 = vmatpush2.msra.mxu0 0.0
      %3322 = vmatprep.subr.mxu0 0.0
      %3323 = vmatpush2.msra.mxu0 0.0
      %3324 = vmatprep.subr.mxu0 0.0
      %3325 = vmatpush2.msra.mxu0 0.0
      %3326 = vmatprep.subr.mxu0 0.0
      %3327 = vmatpush2.msra.mxu0 0.0
      %3328 = vmatprep.subr.mxu0 0.0
      %3329 = vmatpush2.msra.mxu0 0.0
      %3330 = vmatprep.subr.mxu0 0.0
      %3331 = vmatpush2.msra.mxu0 0.0
      %3332 = vmatprep.subr.mxu0 0.0
      %3333 = vmatpush2.msra.mxu0 0.0
      %3334 = vmatprep.subr.mxu0 0.0
      %3335 = vmatpush2.msra.mxu0 0.0
      %3336 = vmatprep.subr.mxu0 0.0
      %3337 = vmatpush2.msra.mxu0 0.0
      %3338 = vmatprep.subr.mxu0 0.0
      %3339 = vmatpush2.msra.mxu0 0.0
      %3340 = vmatprep.subr.mxu0 0.0
      %3341 = vmatpush2.msra.mxu0 0.0
      %3342 = vmatprep.subr.mxu0 0.0
      %3343 = vmatpush2.msra.mxu0 0.0
      %3344 = vmatprep.subr.mxu0 0.0
      %3345 = vmatpush2.msra.mxu0 0.0
      %3346 = vmatprep.mubr.f32.mxu0 0.0
      %3347 = vmatmul.mubr.f32.gmra.mxu0 %v3235
      %v3348 = vpop.f32.mrf.mxu0
      %v3349 = vadd.f32 0.0, %v3348
      %v3350 = vpop.f32.mrf.mxu0
      %3351 = vmatprep.mubr.f32.mxu0 0.0
      %3352 = vmatmul.mubr.f32.gmra.mxu0 %v3238
      %v3353 = vpop.f32.mrf.mxu0
      %v3354 = vadd.f32 0.0, %v3353
      %v3355 = vpop.f32.mrf.mxu0
      %3356 = vmatprep.mubr.f32.mxu0 0.0
      %3357 = vmatmul.mubr.f32.gmra.mxu0 %v3241
      %v3358 = vpop.f32.mrf.mxu0
      %v3359 = vadd.f32 0.0, %v3358
      %v3360 = vpop.f32.mrf.mxu0
      %3361 = vmatprep.mubr.f32.mxu0 0.0
      %3362 = vmatmul.mubr.f32.gmra.mxu0 %v3244
      %v3363 = vpop.f32.mrf.mxu0
      %v3364 = vadd.f32 0.0, %v3363
      %v3365 = vpop.f32.mrf.mxu0
      %3366 = vmatprep.mubr.f32.mxu0 0.0
      %3367 = vmatmul.mubr.f32.gmra.mxu0 %v3247
      %v3368 = vpop.f32.mrf.mxu0
      %v3369 = vadd.f32 0.0, %v3368
      %v3370 = vpop.f32.mrf.mxu0
      %3371 = vmatprep.mubr.f32.mxu0 0.0
      %3372 = vmatmul.mubr.f32.gmra.mxu0 %v3250
      %v3373 = vpop.f32.mrf.mxu0
      %v3374 = vadd.f32 0.0, %v3373
      %v3375 = vpop.f32.mrf.mxu0
      %3376 = vmatprep.mubr.f32.mxu0 0.0
      %3377 = vmatmul.mubr.f32.gmra.mxu0 %v3253
      %v3378 = vpop.f32.mrf.mxu0
      %v3379 = vadd.f32 0.0, %v3378
      %v3380 = vpop.f32.mrf.mxu0
      %3381 = vmatprep.mubr.f32.mxu0 0.0
      %3382 = vmatmul.mubr.f32.gmra.mxu0 %v3256
      %v3383 = vpop.f32.mrf.mxu0
      %v3384 = vadd.f32 0.0, %v3383
      %v3385 = vpop.f32.mrf.mxu0
      %3386 = vmatprep.mubr.f32.mxu0 0.0
      %3387 = vmatmul.mubr.f32.gmra.mxu0 %v3259
      %v3388 = vpop.f32.mrf.mxu0
      %v3389 = vadd.f32 0.0, %v3388
      %v3390 = vpop.f32.mrf.mxu0
      %3391 = vmatprep.mubr.f32.mxu0 0.0
      %3392 = vmatmul.mubr.f32.gmra.mxu0 %v3262
      %v3393 = vpop.f32.mrf.mxu0
      %v3394 = vadd.f32 0.0, %v3393
      %v3395 = vpop.f32.mrf.mxu0
      %3396 = vmatprep.mubr.f32.mxu0 0.0
      %3397 = vmatmul.mubr.f32.gmra.mxu0 %v3265
      %v3398 = vpop.f32.mrf.mxu0
      %v3399 = vadd.f32 0.0, %v3398
      %v3400 = vpop.f32.mrf.mxu0
      %3401 = vmatprep.mubr.f32.mxu0 0.0
      %3402 = vmatmul.mubr.f32.gmra.mxu0 %v3268
      %v3403 = vpop.f32.mrf.mxu0
      %v3404 = vadd.f32 0.0, %v3403
      %v3405 = vpop.f32.mrf.mxu0
      %3406 = vmatprep.mubr.f32.mxu0 0.0
      %3407 = vmatmul.mubr.f32.gmra.mxu0 %v3271
      %v3408 = vpop.f32.mrf.mxu0
      %v3409 = vadd.f32 0.0, %v3408
      %v3410 = vpop.f32.mrf.mxu0
      %3411 = vmatprep.mubr.f32.mxu0 0.0
      %3412 = vmatmul.mubr.f32.gmra.mxu0 %v3274
      %v3413 = vpop.f32.mrf.mxu0
      %v3414 = vadd.f32 0.0, %v3413
      %v3415 = vpop.f32.mrf.mxu0
      %3416 = vmatprep.mubr.f32.mxu0 0.0
      %3417 = vmatmul.mubr.f32.gmra.mxu0 %v3277
      %v3418 = vpop.f32.mrf.mxu0
      %v3419 = vadd.f32 0.0, %v3418
      %v3420 = vpop.f32.mrf.mxu0
      %3421 = vmatprep.mubr.f32.mxu0 0.0
      %3422 = vmatmul.mubr.f32.gmra.mxu0 %v3280
      %v3423 = vpop.f32.mrf.mxu0
      %v3424 = vadd.f32 0.0, %v3423
      %v3425 = vpop.f32.mrf.mxu0
      %3426 = vdwg.mxu0
      %v3427 = vadd.f32 %v2610, %v3349
      %v3428 = vadd.f32 %v2615, %v3354
      %v3429 = vadd.f32 %v2620, %v3359
      %v3430 = vadd.f32 %v2625, %v3364
      %v3431 = vadd.f32 %v2630, %v3369
      %v3432 = vadd.f32 %v2635, %v3374
      %v3433 = vadd.f32 %v2640, %v3379
      %v3434 = vadd.f32 %v2645, %v3384
      %v3435 = vadd.f32 %v2650, %v3389
      %v3436 = vadd.f32 %v2655, %v3394
      %v3437 = vadd.f32 %v2660, %v3399
      %v3438 = vadd.f32 %v2665, %v3404
      %v3439 = vadd.f32 %v2670, %v3409
      %v3440 = vadd.f32 %v2675, %v3414
      %v3441 = vadd.f32 %v2680, %v3419
      %v3442 = vadd.f32 %v2685, %v3424
      %3443 = vrot.lane.b32.xlu0 %v800, 32
      %v3444 = vpop.permute.xlu0 %3443
      %3445 = vrot.lane.b32.xlu0 %v801, 32
      %v3446 = vpop.permute.xlu0 %3445
      %3447 = vrot.lane.b32.xlu0 %v802, 32
      %v3448 = vpop.permute.xlu0 %3447
      %3449 = vrot.lane.b32.xlu0 %v803, 32
      %v3450 = vpop.permute.xlu0 %3449
      %3451 = vrot.lane.b32.xlu0 %v804, 32
      %v3452 = vpop.permute.xlu0 %3451
      %3453 = vrot.lane.b32.xlu0 %v805, 32
      %v3454 = vpop.permute.xlu0 %3453
      %3455 = vrot.lane.b32.xlu0 %v806, 32
      %v3456 = vpop.permute.xlu0 %3455
      %3457 = vrot.lane.b32.xlu0 %v807, 32
      %v3458 = vpop.permute.xlu0 %3457
      %3459 = vrot.lane.b32.xlu0 %v808, 32
      %v3460 = vpop.permute.xlu0 %3459
      %3461 = vrot.lane.b32.xlu0 %v809, 32
      %v3462 = vpop.permute.xlu0 %3461
      %3463 = vrot.lane.b32.xlu0 %v810, 32
      %v3464 = vpop.permute.xlu0 %3463
      %3465 = vrot.lane.b32.xlu0 %v811, 32
      %v3466 = vpop.permute.xlu0 %3465
      %3467 = vrot.lane.b32.xlu0 %v812, 32
      %v3468 = vpop.permute.xlu0 %3467
      %3469 = vrot.lane.b32.xlu0 %v813, 32
      %v3470 = vpop.permute.xlu0 %3469
      %3471 = vrot.lane.b32.xlu0 %v814, 32
      %v3472 = vpop.permute.xlu0 %3471
      %3473 = vrot.lane.b32.xlu0 %v815, 32
      %v3474 = vpop.permute.xlu0 %3473
      %v3475 = vsel %vm1257, %v3444, 0
      %v3477 = vsel %vm1257, %v3446, 0
      %v3479 = vsel %vm1257, %v3448, 0
      %v3481 = vsel %vm1257, %v3450, 0
      %v3483 = vsel %vm1257, %v3452, 0
      %v3485 = vsel %vm1257, %v3454, 0
      %v3487 = vsel %vm1257, %v3456, 0
      %v3489 = vsel %vm1257, %v3458, 0
      %v3491 = vsel %vm1257, %v3460, 0
      %v3493 = vsel %vm1257, %v3462, 0
      %v3495 = vsel %vm1257, %v3464, 0
      %v3497 = vsel %vm1257, %v3466, 0
      %v3499 = vsel %vm1257, %v3468, 0
      %v3501 = vsel %vm1257, %v3470, 0
      %v3503 = vsel %vm1257, %v3472, 0
      %v3505 = vsel %vm1257, %v3474, 0
      %3507 = vmatprep.subr.mxu0 0.0
      %3508 = vmatpush1.msra.mxu0 0.0
      %3509 = vmatprep.subr.mxu0 0.0
      %3510 = vmatpush1.msra.mxu0 0.0
      %3511 = vmatprep.subr.mxu0 0.0
      %3512 = vmatpush1.msra.mxu0 0.0
      %3513 = vmatprep.subr.mxu0 0.0
      %3514 = vmatpush1.msra.mxu0 0.0
      %3515 = vmatprep.subr.mxu0 0.0
      %3516 = vmatpush1.msra.mxu0 0.0
      %3517 = vmatprep.subr.mxu0 0.0
      %3518 = vmatpush1.msra.mxu0 0.0
      %3519 = vmatprep.subr.mxu0 0.0
      %3520 = vmatpush1.msra.mxu0 0.0
      %3521 = vmatprep.subr.mxu0 0.0
      %3522 = vmatpush1.msra.mxu0 0.0
      %3523 = vmatprep.subr.mxu0 0.0
      %3524 = vmatpush1.msra.mxu0 0.0
      %3525 = vmatprep.subr.mxu0 0.0
      %3526 = vmatpush1.msra.mxu0 0.0
      %3527 = vmatprep.subr.mxu0 0.0
      %3528 = vmatpush1.msra.mxu0 0.0
      %3529 = vmatprep.subr.mxu0 0.0
      %3530 = vmatpush1.msra.mxu0 0.0
      %3531 = vmatprep.subr.mxu0 0.0
      %3532 = vmatpush1.msra.mxu0 %v1070
      %3533 = vmatprep.subr.mxu0 0.0
      %3534 = vmatpush1.msra.mxu0 %v1065
      %3535 = vmatprep.subr.mxu0 0.0
      %3536 = vmatpush1.msra.mxu0 %v1060
      %3537 = vmatprep.subr.mxu0 0.0
      %3538 = vmatpush1.msra.mxu0 %v1055
      %3539 = vmatprep.subr.mxu0 0.0
      %3540 = vmatpush2.msra.mxu0 0.0
      %3541 = vmatprep.subr.mxu0 0.0
      %3542 = vmatpush2.msra.mxu0 0.0
      %3543 = vmatprep.subr.mxu0 0.0
      %3544 = vmatpush2.msra.mxu0 0.0
      %3545 = vmatprep.subr.mxu0 0.0
      %3546 = vmatpush2.msra.mxu0 0.0
      %3547 = vmatprep.subr.mxu0 0.0
      %3548 = vmatpush2.msra.mxu0 0.0
      %3549 = vmatprep.subr.mxu0 0.0
      %3550 = vmatpush2.msra.mxu0 0.0
      %3551 = vmatprep.subr.mxu0 0.0
      %3552 = vmatpush2.msra.mxu0 0.0
      %3553 = vmatprep.subr.mxu0 0.0
      %3554 = vmatpush2.msra.mxu0 0.0
      %3555 = vmatprep.subr.mxu0 0.0
      %3556 = vmatpush2.msra.mxu0 0.0
      %3557 = vmatprep.subr.mxu0 0.0
      %3558 = vmatpush2.msra.mxu0 0.0
      %3559 = vmatprep.subr.mxu0 0.0
      %3560 = vmatpush2.msra.mxu0 0.0
      %3561 = vmatprep.subr.mxu0 0.0
      %3562 = vmatpush2.msra.mxu0 0.0
      %3563 = vmatprep.subr.mxu0 0.0
      %3564 = vmatpush2.msra.mxu0 0.0
      %3565 = vmatprep.subr.mxu0 0.0
      %3566 = vmatpush2.msra.mxu0 0.0
      %3567 = vmatprep.subr.mxu0 0.0
      %3568 = vmatpush2.msra.mxu0 0.0
      %3569 = vmatprep.subr.mxu0 0.0
      %3570 = vmatpush2.msra.mxu0 0.0
      %3571 = vmatprep.mubr.f32.mxu0 0.0
      %3572 = vmatmul.mubr.f32.gmra.mxu0 %v3475
      %v3573 = vpop.f32.mrf.mxu0
      %v3574 = vadd.f32 0.0, %v3573
      %v3575 = vpop.f32.mrf.mxu0
      %3576 = vmatprep.mubr.f32.mxu0 0.0
      %3577 = vmatmul.mubr.f32.gmra.mxu0 %v3477
      %v3578 = vpop.f32.mrf.mxu0
      %v3579 = vadd.f32 0.0, %v3578
      %v3580 = vpop.f32.mrf.mxu0
      %3581 = vmatprep.mubr.f32.mxu0 0.0
      %3582 = vmatmul.mubr.f32.gmra.mxu0 %v3479
      %v3583 = vpop.f32.mrf.mxu0
      %v3584 = vadd.f32 0.0, %v3583
      %v3585 = vpop.f32.mrf.mxu0
      %3586 = vmatprep.mubr.f32.mxu0 0.0
      %3587 = vmatmul.mubr.f32.gmra.mxu0 %v3481
      %v3588 = vpop.f32.mrf.mxu0
      %v3589 = vadd.f32 0.0, %v3588
      %v3590 = vpop.f32.mrf.mxu0
      %3591 = vmatprep.mubr.f32.mxu0 0.0
      %3592 = vmatmul.mubr.f32.gmra.mxu0 %v3483
      %v3593 = vpop.f32.mrf.mxu0
      %v3594 = vadd.f32 0.0, %v3593
      %v3595 = vpop.f32.mrf.mxu0
      %3596 = vmatprep.mubr.f32.mxu0 0.0
      %3597 = vmatmul.mubr.f32.gmra.mxu0 %v3485
      %v3598 = vpop.f32.mrf.mxu0
      %v3599 = vadd.f32 0.0, %v3598
      %v3600 = vpop.f32.mrf.mxu0
      %3601 = vmatprep.mubr.f32.mxu0 0.0
      %3602 = vmatmul.mubr.f32.gmra.mxu0 %v3487
      %v3603 = vpop.f32.mrf.mxu0
      %v3604 = vadd.f32 0.0, %v3603
      %v3605 = vpop.f32.mrf.mxu0
      %3606 = vmatprep.mubr.f32.mxu0 0.0
      %3607 = vmatmul.mubr.f32.gmra.mxu0 %v3489
      %v3608 = vpop.f32.mrf.mxu0
      %v3609 = vadd.f32 0.0, %v3608
      %v3610 = vpop.f32.mrf.mxu0
      %3611 = vmatprep.mubr.f32.mxu0 0.0
      %3612 = vmatmul.mubr.f32.gmra.mxu0 %v3491
      %v3613 = vpop.f32.mrf.mxu0
      %v3614 = vadd.f32 0.0, %v3613
      %v3615 = vpop.f32.mrf.mxu0
      %3616 = vmatprep.mubr.f32.mxu0 0.0
      %3617 = vmatmul.mubr.f32.gmra.mxu0 %v3493
      %v3618 = vpop.f32.mrf.mxu0
      %v3619 = vadd.f32 0.0, %v3618
      %v3620 = vpop.f32.mrf.mxu0
      %3621 = vmatprep.mubr.f32.mxu0 0.0
      %3622 = vmatmul.mubr.f32.gmra.mxu0 %v3495
      %v3623 = vpop.f32.mrf.mxu0
      %v3624 = vadd.f32 0.0, %v3623
      %v3625 = vpop.f32.mrf.mxu0
      %3626 = vmatprep.mubr.f32.mxu0 0.0
      %3627 = vmatmul.mubr.f32.gmra.mxu0 %v3497
      %v3628 = vpop.f32.mrf.mxu0
      %v3629 = vadd.f32 0.0, %v3628
      %v3630 = vpop.f32.mrf.mxu0
      %3631 = vmatprep.mubr.f32.mxu0 0.0
      %3632 = vmatmul.mubr.f32.gmra.mxu0 %v3499
      %v3633 = vpop.f32.mrf.mxu0
      %v3634 = vadd.f32 0.0, %v3633
      %v3635 = vpop.f32.mrf.mxu0
      %3636 = vmatprep.mubr.f32.mxu0 0.0
      %3637 = vmatmul.mubr.f32.gmra.mxu0 %v3501
      %v3638 = vpop.f32.mrf.mxu0
      %v3639 = vadd.f32 0.0, %v3638
      %v3640 = vpop.f32.mrf.mxu0
      %3641 = vmatprep.mubr.f32.mxu0 0.0
      %3642 = vmatmul.mubr.f32.gmra.mxu0 %v3503
      %v3643 = vpop.f32.mrf.mxu0
      %v3644 = vadd.f32 0.0, %v3643
      %v3645 = vpop.f32.mrf.mxu0
      %3646 = vmatprep.mubr.f32.mxu0 0.0
      %3647 = vmatmul.mubr.f32.gmra.mxu0 %v3505
      %v3648 = vpop.f32.mrf.mxu0
      %v3649 = vadd.f32 0.0, %v3648
      %v3650 = vpop.f32.mrf.mxu0
      %3651 = vdwg.mxu0
      %3652 = vmax.xlane.f32.xlu0 %v3574
      %v3653 = vpop.xlane.xlu0 %3652
      %3654 = vmax.xlane.f32.xlu0 %v3579
      %v3655 = vpop.xlane.xlu0 %3654
      %3656 = vmax.xlane.f32.xlu0 %v3584
      %v3657 = vpop.xlane.xlu0 %3656
      %3658 = vmax.xlane.f32.xlu0 %v3589
      %v3659 = vpop.xlane.xlu0 %3658
      %3660 = vmax.xlane.f32.xlu0 %v3594
      %v3661 = vpop.xlane.xlu0 %3660
      %3662 = vmax.xlane.f32.xlu0 %v3599
      %v3663 = vpop.xlane.xlu0 %3662
      %3664 = vmax.xlane.f32.xlu0 %v3604
      %v3665 = vpop.xlane.xlu0 %3664
      %3666 = vmax.xlane.f32.xlu0 %v3609
      %v3667 = vpop.xlane.xlu0 %3666
      %3668 = vmax.xlane.f32.xlu0 %v3614
      %v3669 = vpop.xlane.xlu0 %3668
      %3670 = vmax.xlane.f32.xlu0 %v3619
      %v3671 = vpop.xlane.xlu0 %3670
      %3672 = vmax.xlane.f32.xlu0 %v3624
      %v3673 = vpop.xlane.xlu0 %3672
      %3674 = vmax.xlane.f32.xlu0 %v3629
      %v3675 = vpop.xlane.xlu0 %3674
      %3676 = vmax.xlane.f32.xlu0 %v3634
      %v3677 = vpop.xlane.xlu0 %3676
      %3678 = vmax.xlane.f32.xlu0 %v3639
      %v3679 = vpop.xlane.xlu0 %3678
      %3680 = vmax.xlane.f32.xlu0 %v3644
      %v3681 = vpop.xlane.xlu0 %3680
      %3682 = vmax.xlane.f32.xlu0 %v3649
      %v3683 = vpop.xlane.xlu0 %3682
      %v3684 = vsub.f32 %v3574, %v3653
      %v3685 = vsub.f32 %v3579, %v3655
      %v3686 = vsub.f32 %v3584, %v3657
      %v3687 = vsub.f32 %v3589, %v3659
      %v3688 = vsub.f32 %v3594, %v3661
      %v3689 = vsub.f32 %v3599, %v3663
      %v3690 = vsub.f32 %v3604, %v3665
      %v3691 = vsub.f32 %v3609, %v3667
      %v3692 = vsub.f32 %v3614, %v3669
      %v3693 = vsub.f32 %v3619, %v3671
      %v3694 = vsub.f32 %v3624, %v3673
      %v3695 = vsub.f32 %v3629, %v3675
      %v3696 = vsub.f32 %v3634, %v3677
      %v3697 = vsub.f32 %v3639, %v3679
      %v3698 = vsub.f32 %v3644, %v3681
      %v3699 = vsub.f32 %v3649, %v3683
      %v3700 = vmul.f32 %v3684, 1.442695
      %v3701 = vpow.pop %v3700
      %v3702 = vmul.f32 %v3685, 1.442695
      %v3703 = vpow.pop %v3702
      %v3704 = vmul.f32 %v3686, 1.442695
      %v3705 = vpow.pop %v3704
      %v3706 = vmul.f32 %v3687, 1.442695
      %v3707 = vpow.pop %v3706
      %v3708 = vmul.f32 %v3688, 1.442695
      %v3709 = vpow.pop %v3708
      %v3710 = vmul.f32 %v3689, 1.442695
      %v3711 = vpow.pop %v3710
      %v3712 = vmul.f32 %v3690, 1.442695
      %v3713 = vpow.pop %v3712
      %v3714 = vmul.f32 %v3691, 1.442695
      %v3715 = vpow.pop %v3714
      %v3716 = vmul.f32 %v3692, 1.442695
      %v3717 = vpow.pop %v3716
      %v3718 = vmul.f32 %v3693, 1.442695
      %v3719 = vpow.pop %v3718
      %v3720 = vmul.f32 %v3694, 1.442695
      %v3721 = vpow.pop %v3720
      %v3722 = vmul.f32 %v3695, 1.442695
      %v3723 = vpow.pop %v3722
      %v3724 = vmul.f32 %v3696, 1.442695
      %v3725 = vpow.pop %v3724
      %v3726 = vmul.f32 %v3697, 1.442695
      %v3727 = vpow.pop %v3726
      %v3728 = vmul.f32 %v3698, 1.442695
      %v3729 = vpow.pop %v3728
      %v3730 = vmul.f32 %v3699, 1.442695
      %v3731 = vpow.pop %v3730
      %3732 = vadd.xlane.f32.xlu0 %v3701
      %v3733 = vpop.xlane.xlu0 %3732
      %3734 = vadd.xlane.f32.xlu0 %v3703
      %v3735 = vpop.xlane.xlu0 %3734
      %3736 = vadd.xlane.f32.xlu0 %v3705
      %v3737 = vpop.xlane.xlu0 %3736
      %3738 = vadd.xlane.f32.xlu0 %v3707
      %v3739 = vpop.xlane.xlu0 %3738
      %3740 = vadd.xlane.f32.xlu0 %v3709
      %v3741 = vpop.xlane.xlu0 %3740
      %3742 = vadd.xlane.f32.xlu0 %v3711
      %v3743 = vpop.xlane.xlu0 %3742
      %3744 = vadd.xlane.f32.xlu0 %v3713
      %v3745 = vpop.xlane.xlu0 %3744
      %3746 = vadd.xlane.f32.xlu0 %v3715
      %v3747 = vpop.xlane.xlu0 %3746
      %3748 = vadd.xlane.f32.xlu0 %v3717
      %v3749 = vpop.xlane.xlu0 %3748
      %3750 = vadd.xlane.f32.xlu0 %v3719
      %v3751 = vpop.xlane.xlu0 %3750
      %3752 = vadd.xlane.f32.xlu0 %v3721
      %v3753 = vpop.xlane.xlu0 %3752
      %3754 = vadd.xlane.f32.xlu0 %v3723
      %v3755 = vpop.xlane.xlu0 %3754
      %3756 = vadd.xlane.f32.xlu0 %v3725
      %v3757 = vpop.xlane.xlu0 %3756
      %3758 = vadd.xlane.f32.xlu0 %v3727
      %v3759 = vpop.xlane.xlu0 %3758
      %3760 = vadd.xlane.f32.xlu0 %v3729
      %v3761 = vpop.xlane.xlu0 %3760
      %3762 = vadd.xlane.f32.xlu0 %v3731
      %v3763 = vpop.xlane.xlu0 %3762
      %3764 = vrot.lane.b32.xlu0 %v1163, 32
      %v3765 = vpop.permute.xlu0 %3764
      %3766 = vrot.lane.b32.xlu0 %v1168, 32
      %v3767 = vpop.permute.xlu0 %3766
      %3768 = vrot.lane.b32.xlu0 %v1173, 32
      %v3769 = vpop.permute.xlu0 %3768
      %3770 = vrot.lane.b32.xlu0 %v1178, 32
      %v3771 = vpop.permute.xlu0 %3770
      %3772 = vrot.lane.b32.xlu0 %v1183, 32
      %v3773 = vpop.permute.xlu0 %3772
      %3774 = vrot.lane.b32.xlu0 %v1188, 32
      %v3775 = vpop.permute.xlu0 %3774
      %3776 = vrot.lane.b32.xlu0 %v1193, 32
      %v3777 = vpop.permute.xlu0 %3776
      %3778 = vrot.lane.b32.xlu0 %v1198, 32
      %v3779 = vpop.permute.xlu0 %3778
      %3780 = vrot.lane.b32.xlu0 %v1203, 32
      %v3781 = vpop.permute.xlu0 %3780
      %3782 = vrot.lane.b32.xlu0 %v1208, 32
      %v3783 = vpop.permute.xlu0 %3782
      %3784 = vrot.lane.b32.xlu0 %v1213, 32
      %v3785 = vpop.permute.xlu0 %3784
      %3786 = vrot.lane.b32.xlu0 %v1218, 32
      %v3787 = vpop.permute.xlu0 %3786
      %3788 = vrot.lane.b32.xlu0 %v1223, 32
      %v3789 = vpop.permute.xlu0 %3788
      %3790 = vrot.lane.b32.xlu0 %v1228, 32
      %v3791 = vpop.permute.xlu0 %3790
      %3792 = vrot.lane.b32.xlu0 %v1233, 32
      %v3793 = vpop.permute.xlu0 %3792
      %3794 = vrot.lane.b32.xlu0 %v1238, 32
      %v3795 = vpop.permute.xlu0 %3794
      %3812 = vmatprep.subr.mxu0 0.0
      %3813 = vmatpush1.msra.mxu0 %v3795
      %3814 = vmatprep.subr.mxu0 0.0
      %3815 = vmatpush1.msra.mxu0 %v3793
      %3816 = vmatprep.subr.mxu0 0.0
      %3817 = vmatpush1.msra.mxu0 %v3791
      %3818 = vmatprep.subr.mxu0 0.0
      %3819 = vmatpush1.msra.mxu0 %v3789
      %3820 = vmatprep.subr.mxu0 0.0
      %3821 = vmatpush1.msra.mxu0 %v3787
      %3822 = vmatprep.subr.mxu0 0.0
      %3823 = vmatpush1.msra.mxu0 %v3785
      %3824 = vmatprep.subr.mxu0 0.0
      %3825 = vmatpush1.msra.mxu0 %v3783
      %3826 = vmatprep.subr.mxu0 0.0
      %3827 = vmatpush1.msra.mxu0 %v3781
      %3828 = vmatprep.subr.mxu0 0.0
      %3829 = vmatpush1.msra.mxu0 %v3779
      %3830 = vmatprep.subr.mxu0 0.0
      %3831 = vmatpush1.msra.mxu0 %v3777
      %3832 = vmatprep.subr.mxu0 0.0
      %3833 = vmatpush1.msra.mxu0 %v3775
      %3834 = vmatprep.subr.mxu0 0.0
      %3835 = vmatpush1.msra.mxu0 %v3773
      %3836 = vmatprep.subr.mxu0 0.0
      %3837 = vmatpush1.msra.mxu0 %v3771
      %3838 = vmatprep.subr.mxu0 0.0
      %3839 = vmatpush1.msra.mxu0 %v3769
      %3840 = vmatprep.subr.mxu0 0.0
      %3841 = vmatpush1.msra.mxu0 %v3767
      %3842 = vmatprep.subr.mxu0 0.0
      %3843 = vmatpush1.msra.mxu0 %v3765
      %3844 = vmatprep.subr.mxu0 0.0
      %3845 = vmatpush2.msra.mxu0 0.0
      %3846 = vmatprep.subr.mxu0 0.0
      %3847 = vmatpush2.msra.mxu0 0.0
      %3848 = vmatprep.subr.mxu0 0.0
      %3849 = vmatpush2.msra.mxu0 0.0
      %3850 = vmatprep.subr.mxu0 0.0
      %3851 = vmatpush2.msra.mxu0 0.0
      %3852 = vmatprep.subr.mxu0 0.0
      %3853 = vmatpush2.msra.mxu0 0.0
      %3854 = vmatprep.subr.mxu0 0.0
      %3855 = vmatpush2.msra.mxu0 0.0
      %3856 = vmatprep.subr.mxu0 0.0
      %3857 = vmatpush2.msra.mxu0 0.0
      %3858 = vmatprep.subr.mxu0 0.0
      %3859 = vmatpush2.msra.mxu0 0.0
      %3860 = vmatprep.subr.mxu0 0.0
      %3861 = vmatpush2.msra.mxu0 0.0
      %3862 = vmatprep.subr.mxu0 0.0
      %3863 = vmatpush2.msra.mxu0 0.0
      %3864 = vmatprep.subr.mxu0 0.0
      %3865 = vmatpush2.msra.mxu0 0.0
      %3866 = vmatprep.subr.mxu0 0.0
      %3867 = vmatpush2.msra.mxu0 0.0
      %3868 = vmatprep.subr.mxu0 0.0
      %3869 = vmatpush2.msra.mxu0 0.0
      %3870 = vmatprep.subr.mxu0 0.0
      %3871 = vmatpush2.msra.mxu0 0.0
      %3872 = vmatprep.subr.mxu0 0.0
      %3873 = vmatpush2.msra.mxu0 0.0
      %3874 = vmatprep.subr.mxu0 0.0
      %3875 = vmatpush2.msra.mxu0 0.0
      %3876 = vmatprep.mubr.f32.mxu0 0.0
      %3877 = vmatmul.mubr.f32.gmra.mxu0 %v3701
      %v3878 = vpop.f32.mrf.mxu0
      %v3879 = vadd.f32 0.0, %v3878
      %v3880 = vpop.f32.mrf.mxu0
      %3881 = vmatprep.mubr.f32.mxu0 0.0
      %3882 = vmatmul.mubr.f32.gmra.mxu0 %v3703
      %v3883 = vpop.f32.mrf.mxu0
      %v3884 = vadd.f32 0.0, %v3883
      %v3885 = vpop.f32.mrf.mxu0
      %3886 = vmatprep.mubr.f32.mxu0 0.0
      %3887 = vmatmul.mubr.f32.gmra.mxu0 %v3705
      %v3888 = vpop.f32.mrf.mxu0
      %v3889 = vadd.f32 0.0, %v3888
      %v3890 = vpop.f32.mrf.mxu0
      %3891 = vmatprep.mubr.f32.mxu0 0.0
      %3892 = vmatmul.mubr.f32.gmra.mxu0 %v3707
      %v3893 = vpop.f32.mrf.mxu0
      %v3894 = vadd.f32 0.0, %v3893
      %v3895 = vpop.f32.mrf.mxu0
      %3896 = vmatprep.mubr.f32.mxu0 0.0
      %3897 = vmatmul.mubr.f32.gmra.mxu0 %v3709
      %v3898 = vpop.f32.mrf.mxu0
      %v3899 = vadd.f32 0.0, %v3898
      %v3900 = vpop.f32.mrf.mxu0
      %3901 = vmatprep.mubr.f32.mxu0 0.0
      %3902 = vmatmul.mubr.f32.gmra.mxu0 %v3711
      %v3903 = vpop.f32.mrf.mxu0
      %v3904 = vadd.f32 0.0, %v3903
      %v3905 = vpop.f32.mrf.mxu0
      %3906 = vmatprep.mubr.f32.mxu0 0.0
      %3907 = vmatmul.mubr.f32.gmra.mxu0 %v3713
      %v3908 = vpop.f32.mrf.mxu0
      %v3909 = vadd.f32 0.0, %v3908
      %v3910 = vpop.f32.mrf.mxu0
      %3911 = vmatprep.mubr.f32.mxu0 0.0
      %3912 = vmatmul.mubr.f32.gmra.mxu0 %v3715
      %v3913 = vpop.f32.mrf.mxu0
      %v3914 = vadd.f32 0.0, %v3913
      %v3915 = vpop.f32.mrf.mxu0
      %3916 = vmatprep.mubr.f32.mxu0 0.0
      %3917 = vmatmul.mubr.f32.gmra.mxu0 %v3717
      %v3918 = vpop.f32.mrf.mxu0
      %v3919 = vadd.f32 0.0, %v3918
      %v3920 = vpop.f32.mrf.mxu0
      %3921 = vmatprep.mubr.f32.mxu0 0.0
      %3922 = vmatmul.mubr.f32.gmra.mxu0 %v3719
      %v3923 = vpop.f32.mrf.mxu0
      %v3924 = vadd.f32 0.0, %v3923
      %v3925 = vpop.f32.mrf.mxu0
      %3926 = vmatprep.mubr.f32.mxu0 0.0
      %3927 = vmatmul.mubr.f32.gmra.mxu0 %v3721
      %v3928 = vpop.f32.mrf.mxu0
      %v3929 = vadd.f32 0.0, %v3928
      %v3930 = vpop.f32.mrf.mxu0
      %3931 = vmatprep.mubr.f32.mxu0 0.0
      %3932 = vmatmul.mubr.f32.gmra.mxu0 %v3723
      %v3933 = vpop.f32.mrf.mxu0
      %v3934 = vadd.f32 0.0, %v3933
      %v3935 = vpop.f32.mrf.mxu0
      %3936 = vmatprep.mubr.f32.mxu0 0.0
      %3937 = vmatmul.mubr.f32.gmra.mxu0 %v3725
      %v3938 = vpop.f32.mrf.mxu0
      %v3939 = vadd.f32 0.0, %v3938
      %v3940 = vpop.f32.mrf.mxu0
      %3941 = vmatprep.mubr.f32.mxu0 0.0
      %3942 = vmatmul.mubr.f32.gmra.mxu0 %v3727
      %v3943 = vpop.f32.mrf.mxu0
      %v3944 = vadd.f32 0.0, %v3943
      %v3945 = vpop.f32.mrf.mxu0
      %3946 = vmatprep.mubr.f32.mxu0 0.0
      %3947 = vmatmul.mubr.f32.gmra.mxu0 %v3729
      %v3948 = vpop.f32.mrf.mxu0
      %v3949 = vadd.f32 0.0, %v3948
      %v3950 = vpop.f32.mrf.mxu0
      %3951 = vmatprep.mubr.f32.mxu0 0.0
      %3952 = vmatmul.mubr.f32.gmra.mxu0 %v3731
      %v3953 = vpop.f32.mrf.mxu0
      %v3954 = vadd.f32 0.0, %v3953
      %v3955 = vpop.f32.mrf.mxu0
      %3956 = vdwg.mxu0
      %v3957 = vrcp.pop %v3733
      %v3958 = vrcp.pop %v3735
      %v3959 = vrcp.pop %v3737
      %v3960 = vrcp.pop %v3739
      %v3961 = vrcp.pop %v3741
      %v3962 = vrcp.pop %v3743
      %v3963 = vrcp.pop %v3745
      %v3964 = vrcp.pop %v3747
      %v3965 = vrcp.pop %v3749
      %v3966 = vrcp.pop %v3751
      %v3967 = vrcp.pop %v3753
      %v3968 = vrcp.pop %v3755
      %v3969 = vrcp.pop %v3757
      %v3970 = vrcp.pop %v3759
      %v3971 = vrcp.pop %v3761
      %v3972 = vrcp.pop %v3763
      %v3973 = vmul.f32 %v3879, %v3957
      %v3974 = vmul.f32 %v3884, %v3958
      %v3975 = vmul.f32 %v3889, %v3959
      %v3976 = vmul.f32 %v3894, %v3960
      %v3977 = vmul.f32 %v3899, %v3961
      %v3978 = vmul.f32 %v3904, %v3962
      %v3979 = vmul.f32 %v3909, %v3963
      %v3980 = vmul.f32 %v3914, %v3964
      %v3981 = vmul.f32 %v3919, %v3965
      %v3982 = vmul.f32 %v3924, %v3966
      %v3983 = vmul.f32 %v3929, %v3967
      %v3984 = vmul.f32 %v3934, %v3968
      %v3985 = vmul.f32 %v3939, %v3969
      %v3986 = vmul.f32 %v3944, %v3970
      %v3987 = vmul.f32 %v3949, %v3971
      %v3988 = vmul.f32 %v3954, %v3972
      %v3990 = vsel %vm1257, %v3973, 0
      %v3993 = vsel %vm1257, %v3974, 0
      %v3996 = vsel %vm1257, %v3975, 0
      %v3999 = vsel %vm1257, %v3976, 0
      %v4002 = vsel %vm1257, %v3977, 0
      %v4005 = vsel %vm1257, %v3978, 0
      %v4008 = vsel %vm1257, %v3979, 0
      %v4011 = vsel %vm1257, %v3980, 0
      %v4014 = vsel %vm1257, %v3981, 0
      %v4017 = vsel %vm1257, %v3982, 0
      %v4020 = vsel %vm1257, %v3983, 0
      %v4023 = vsel %vm1257, %v3984, 0
      %v4026 = vsel %vm1257, %v3985, 0
      %v4029 = vsel %vm1257, %v3986, 0
      %v4032 = vsel %vm1257, %v3987, 0
      %v4035 = vsel %vm1257, %v3988, 0
      %4037 = vmatprep.subr.mxu0 0.0
      %4038 = vmatpush1.msra.mxu0 0.0
      %4039 = vmatprep.subr.mxu0 0.0
      %4040 = vmatpush1.msra.mxu0 0.0
      %4041 = vmatprep.subr.mxu0 0.0
      %4042 = vmatpush1.msra.mxu0 0.0
      %4043 = vmatprep.subr.mxu0 0.0
      %4044 = vmatpush1.msra.mxu0 0.0
      %4045 = vmatprep.subr.mxu0 0.0
      %4046 = vmatpush1.msra.mxu0 0.0
      %4047 = vmatprep.subr.mxu0 0.0
      %4048 = vmatpush1.msra.mxu0 0.0
      %4049 = vmatprep.subr.mxu0 0.0
      %4050 = vmatpush1.msra.mxu0 0.0
      %4051 = vmatprep.subr.mxu0 0.0
      %4052 = vmatpush1.msra.mxu0 0.0
      %4053 = vmatprep.subr.mxu0 0.0
      %4054 = vmatpush1.msra.mxu0 0.0
      %4055 = vmatprep.subr.mxu0 0.0
      %4056 = vmatpush1.msra.mxu0 0.0
      %4057 = vmatprep.subr.mxu0 0.0
      %4058 = vmatpush1.msra.mxu0 0.0
      %4059 = vmatprep.subr.mxu0 0.0
      %4060 = vmatpush1.msra.mxu0 0.0
      %4061 = vmatprep.subr.mxu0 0.0
      %4062 = vmatpush1.msra.mxu0 %v1256
      %4063 = vmatprep.subr.mxu0 0.0
      %4064 = vmatpush1.msra.mxu0 %v1255
      %4065 = vmatprep.subr.mxu0 0.0
      %4066 = vmatpush1.msra.mxu0 %v1254
      %4067 = vmatprep.subr.mxu0 0.0
      %4068 = vmatpush1.msra.mxu0 %v1253
      %4069 = vmatprep.subr.mxu0 0.0
      %4070 = vmatpush2.msra.mxu0 0.0
      %4071 = vmatprep.subr.mxu0 0.0
      %4072 = vmatpush2.msra.mxu0 0.0
      %4073 = vmatprep.subr.mxu0 0.0
      %4074 = vmatpush2.msra.mxu0 0.0
      %4075 = vmatprep.subr.mxu0 0.0
      %4076 = vmatpush2.msra.mxu0 0.0
      %4077 = vmatprep.subr.mxu0 0.0
      %4078 = vmatpush2.msra.mxu0 0.0
      %4079 = vmatprep.subr.mxu0 0.0
      %4080 = vmatpush2.msra.mxu0 0.0
      %4081 = vmatprep.subr.mxu0 0.0
      %4082 = vmatpush2.msra.mxu0 0.0
      %4083 = vmatprep.subr.mxu0 0.0
      %4084 = vmatpush2.msra.mxu0 0.0
      %4085 = vmatprep.subr.mxu0 0.0
      %4086 = vmatpush2.msra.mxu0 0.0
      %4087 = vmatprep.subr.mxu0 0.0
      %4088 = vmatpush2.msra.mxu0 0.0
      %4089 = vmatprep.subr.mxu0 0.0
      %4090 = vmatpush2.msra.mxu0 0.0
      %4091 = vmatprep.subr.mxu0 0.0
      %4092 = vmatpush2.msra.mxu0 0.0
      %4093 = vmatprep.subr.mxu0 0.0
      %4094 = vmatpush2.msra.mxu0 0.0
      %4095 = vmatprep.subr.mxu0 0.0
      %4096 = vmatpush2.msra.mxu0 0.0
      %4097 = vmatprep.subr.mxu0 0.0
      %4098 = vmatpush2.msra.mxu0 0.0
      %4099 = vmatprep.subr.mxu0 0.0
      %4100 = vmatpush2.msra.mxu0 0.0
      %4101 = vmatprep.mubr.f32.mxu0 0.0
      %4102 = vmatmul.mubr.f32.gmra.mxu0 %v3990
      %v4103 = vpop.f32.mrf.mxu0
      %v4104 = vadd.f32 0.0, %v4103
      %v4105 = vpop.f32.mrf.mxu0
      %4106 = vmatprep.mubr.f32.mxu0 0.0
      %4107 = vmatmul.mubr.f32.gmra.mxu0 %v3993
      %v4108 = vpop.f32.mrf.mxu0
      %v4109 = vadd.f32 0.0, %v4108
      %v4110 = vpop.f32.mrf.mxu0
      %4111 = vmatprep.mubr.f32.mxu0 0.0
      %4112 = vmatmul.mubr.f32.gmra.mxu0 %v3996
      %v4113 = vpop.f32.mrf.mxu0
      %v4114 = vadd.f32 0.0, %v4113
      %v4115 = vpop.f32.mrf.mxu0
      %4116 = vmatprep.mubr.f32.mxu0 0.0
      %4117 = vmatmul.mubr.f32.gmra.mxu0 %v3999
      %v4118 = vpop.f32.mrf.mxu0
      %v4119 = vadd.f32 0.0, %v4118
      %v4120 = vpop.f32.mrf.mxu0
      %4121 = vmatprep.mubr.f32.mxu0 0.0
      %4122 = vmatmul.mubr.f32.gmra.mxu0 %v4002
      %v4123 = vpop.f32.mrf.mxu0
      %v4124 = vadd.f32 0.0, %v4123
      %v4125 = vpop.f32.mrf.mxu0
      %4126 = vmatprep.mubr.f32.mxu0 0.0
      %4127 = vmatmul.mubr.f32.gmra.mxu0 %v4005
      %v4128 = vpop.f32.mrf.mxu0
      %v4129 = vadd.f32 0.0, %v4128
      %v4130 = vpop.f32.mrf.mxu0
      %4131 = vmatprep.mubr.f32.mxu0 0.0
      %4132 = vmatmul.mubr.f32.gmra.mxu0 %v4008
      %v4133 = vpop.f32.mrf.mxu0
      %v4134 = vadd.f32 0.0, %v4133
      %v4135 = vpop.f32.mrf.mxu0
      %4136 = vmatprep.mubr.f32.mxu0 0.0
      %4137 = vmatmul.mubr.f32.gmra.mxu0 %v4011
      %v4138 = vpop.f32.mrf.mxu0
      %v4139 = vadd.f32 0.0, %v4138
      %v4140 = vpop.f32.mrf.mxu0
      %4141 = vmatprep.mubr.f32.mxu0 0.0
      %4142 = vmatmul.mubr.f32.gmra.mxu0 %v4014
      %v4143 = vpop.f32.mrf.mxu0
      %v4144 = vadd.f32 0.0, %v4143
      %v4145 = vpop.f32.mrf.mxu0
      %4146 = vmatprep.mubr.f32.mxu0 0.0
      %4147 = vmatmul.mubr.f32.gmra.mxu0 %v4017
      %v4148 = vpop.f32.mrf.mxu0
      %v4149 = vadd.f32 0.0, %v4148
      %v4150 = vpop.f32.mrf.mxu0
      %4151 = vmatprep.mubr.f32.mxu0 0.0
      %4152 = vmatmul.mubr.f32.gmra.mxu0 %v4020
      %v4153 = vpop.f32.mrf.mxu0
      %v4154 = vadd.f32 0.0, %v4153
      %v4155 = vpop.f32.mrf.mxu0
      %4156 = vmatprep.mubr.f32.mxu0 0.0
      %4157 = vmatmul.mubr.f32.gmra.mxu0 %v4023
      %v4158 = vpop.f32.mrf.mxu0
      %v4159 = vadd.f32 0.0, %v4158
      %v4160 = vpop.f32.mrf.mxu0
      %4161 = vmatprep.mubr.f32.mxu0 0.0
      %4162 = vmatmul.mubr.f32.gmra.mxu0 %v4026
      %v4163 = vpop.f32.mrf.mxu0
      %v4164 = vadd.f32 0.0, %v4163
      %v4165 = vpop.f32.mrf.mxu0
      %4166 = vmatprep.mubr.f32.mxu0 0.0
      %4167 = vmatmul.mubr.f32.gmra.mxu0 %v4029
      %v4168 = vpop.f32.mrf.mxu0
      %v4169 = vadd.f32 0.0, %v4168
      %v4170 = vpop.f32.mrf.mxu0
      %4171 = vmatprep.mubr.f32.mxu0 0.0
      %4172 = vmatmul.mubr.f32.gmra.mxu0 %v4032
      %v4173 = vpop.f32.mrf.mxu0
      %v4174 = vadd.f32 0.0, %v4173
      %v4175 = vpop.f32.mrf.mxu0
      %4176 = vmatprep.mubr.f32.mxu0 0.0
      %4177 = vmatmul.mubr.f32.gmra.mxu0 %v4035
      %v4178 = vpop.f32.mrf.mxu0
      %v4179 = vadd.f32 0.0, %v4178
      %v4180 = vpop.f32.mrf.mxu0
      %4181 = vdwg.mxu0
      %v4182 = vadd.f32 %v3427, %v4104
      %v4183 = vadd.f32 %v3428, %v4109
      %v4184 = vadd.f32 %v3429, %v4114
      %v4185 = vadd.f32 %v3430, %v4119
      %v4186 = vadd.f32 %v3431, %v4124
      %v4187 = vadd.f32 %v3432, %v4129
      %v4188 = vadd.f32 %v3433, %v4134
      %v4189 = vadd.f32 %v3434, %v4139
      %v4190 = vadd.f32 %v3435, %v4144
      %v4191 = vadd.f32 %v3436, %v4149
      %v4192 = vadd.f32 %v3437, %v4154
      %v4193 = vadd.f32 %v3438, %v4159
      %v4194 = vadd.f32 %v3439, %v4164
      %v4195 = vadd.f32 %v3440, %v4169
      %v4196 = vadd.f32 %v3441, %v4174
      %v4197 = vadd.f32 %v3442, %v4179
      %v4198 = vld [vmem:[%s9] sm:$0x1]
      %v4200 = vlaneseq
      %v4201 = vshrl.u32 %v4200, 7
      %v4202 = vsub.s32 0, %v4201
      %v4203 = vrot.slane %v4198, %v4202
      %v4205 = vadd.f32 %v4182, %v4203
      %v4206 = vadd.f32 %v4183, %v4203
      %v4207 = vadd.f32 %v4184, %v4203
      %v4208 = vadd.f32 %v4185, %v4203
      %v4209 = vadd.f32 %v4186, %v4203
      %v4210 = vadd.f32 %v4187, %v4203
      %v4211 = vadd.f32 %v4188, %v4203
      %v4212 = vadd.f32 %v4189, %v4203
      %v4213 = vadd.f32 %v4190, %v4203
      %v4214 = vadd.f32 %v4191, %v4203
      %v4215 = vadd.f32 %v4192, %v4203
      %v4216 = vadd.f32 %v4193, %v4203
      %v4217 = vadd.f32 %v4194, %v4203
      %v4218 = vadd.f32 %v4195, %v4203
      %v4219 = vadd.f32 %v4196, %v4203
      %v4220 = vadd.f32 %v4197, %v4203
      %v4221 = vld [vmem:[%s10] sm:$0xff]
      %v4222 = vld [vmem:[%s10 + $0x8] sm:$0xff]
      %v4223 = vld [vmem:[%s10 + $0x10] sm:$0xff]
      %v4224 = vld [vmem:[%s10 + $0x18] sm:$0xff]
      %v4225 = vld [vmem:[%s10 + $0x20] sm:$0xff]
      %v4226 = vld [vmem:[%s10 + $0x28] sm:$0xff]
      %v4227 = vld [vmem:[%s10 + $0x30] sm:$0xff]
      %v4228 = vld [vmem:[%s10 + $0x38] sm:$0xff]
      %v4229 = vld [vmem:[%s10 + $0x40] sm:$0xff]
      %v4230 = vld [vmem:[%s10 + $0x48] sm:$0xff]
      %v4231 = vld [vmem:[%s10 + $0x50] sm:$0xff]
      %v4232 = vld [vmem:[%s10 + $0x58] sm:$0xff]
      %v4233 = vld [vmem:[%s10 + $0x60] sm:$0xff]
      %v4234 = vld [vmem:[%s10 + $0x68] sm:$0xff]
      %v4235 = vld [vmem:[%s10 + $0x70] sm:$0xff]
      %v4236 = vld [vmem:[%s10 + $0x78] sm:$0xff]
      %v4237 = vld [vmem:[%s10 + $0x80] sm:$0xff]
      %v4238 = vld [vmem:[%s10 + $0x88] sm:$0xff]
      %v4239 = vld [vmem:[%s10 + $0x90] sm:$0xff]
      %v4240 = vld [vmem:[%s10 + $0x98] sm:$0xff]
      %v4241 = vld [vmem:[%s10 + $0xa0] sm:$0xff]
      %v4242 = vld [vmem:[%s10 + $0xa8] sm:$0xff]
      %v4243 = vld [vmem:[%s10 + $0xb0] sm:$0xff]
      %v4244 = vld [vmem:[%s10 + $0xb8] sm:$0xff]
      %v4245 = vld [vmem:[%s10 + $0xc0] sm:$0xff]
      %v4246 = vld [vmem:[%s10 + $0xc8] sm:$0xff]
      %v4247 = vld [vmem:[%s10 + $0xd0] sm:$0xff]
      %v4248 = vld [vmem:[%s10 + $0xd8] sm:$0xff]
      %v4249 = vld [vmem:[%s10 + $0xe0] sm:$0xff]
      %v4250 = vld [vmem:[%s10 + $0xe8] sm:$0xff]
      %v4251 = vld [vmem:[%s10 + $0xf0] sm:$0xff]
      %v4252 = vld [vmem:[%s10 + $0xf8] sm:$0xff]
      %v4253 = vld [vmem:[%s11] sm:$0xff]
      %v4254 = vld [vmem:[%s11 + $0x8] sm:$0xff]
      %v4255 = vld [vmem:[%s11 + $0x10] sm:$0xff]
      %v4256 = vld [vmem:[%s11 + $0x18] sm:$0xff]
      %v4257 = vld [vmem:[%s11 + $0x20] sm:$0xff]
      %v4258 = vld [vmem:[%s11 + $0x28] sm:$0xff]
      %v4259 = vld [vmem:[%s11 + $0x30] sm:$0xff]
      %v4260 = vld [vmem:[%s11 + $0x38] sm:$0xff]
      %v4261 = vld [vmem:[%s11 + $0x40] sm:$0xff]
      %v4262 = vld [vmem:[%s11 + $0x48] sm:$0xff]
      %v4263 = vld [vmem:[%s11 + $0x50] sm:$0xff]
      %v4264 = vld [vmem:[%s11 + $0x58] sm:$0xff]
      %v4265 = vld [vmem:[%s11 + $0x60] sm:$0xff]
      %v4266 = vld [vmem:[%s11 + $0x68] sm:$0xff]
      %v4267 = vld [vmem:[%s11 + $0x70] sm:$0xff]
      %v4268 = vld [vmem:[%s11 + $0x78] sm:$0xff]
      %v4269 = vld [vmem:[%s11 + $0x80] sm:$0xff]
      %v4270 = vld [vmem:[%s11 + $0x88] sm:$0xff]
      %v4271 = vld [vmem:[%s11 + $0x90] sm:$0xff]
      %v4272 = vld [vmem:[%s11 + $0x98] sm:$0xff]
      %v4273 = vld [vmem:[%s11 + $0xa0] sm:$0xff]
      %v4274 = vld [vmem:[%s11 + $0xa8] sm:$0xff]
      %v4275 = vld [vmem:[%s11 + $0xb0] sm:$0xff]
      %v4276 = vld [vmem:[%s11 + $0xb8] sm:$0xff]
      %v4277 = vld [vmem:[%s11 + $0xc0] sm:$0xff]
      %v4278 = vld [vmem:[%s11 + $0xc8] sm:$0xff]
      %v4279 = vld [vmem:[%s11 + $0xd0] sm:$0xff]
      %v4280 = vld [vmem:[%s11 + $0xd8] sm:$0xff]
      %v4281 = vld [vmem:[%s11 + $0xe0] sm:$0xff]
      %v4282 = vld [vmem:[%s11 + $0xe8] sm:$0xff]
      %v4283 = vld [vmem:[%s11 + $0xf0] sm:$0xff]
      %v4284 = vld [vmem:[%s11 + $0xf8] sm:$0xff]
      %4285 = vmatprep.subr.mxu0 %v4284
      %4286 = vmatpush1.msra.mxu0 %v4283
      %4287 = vmatprep.subr.mxu0 %v4282
      %4288 = vmatpush1.msra.mxu0 %v4281
      %4289 = vmatprep.subr.mxu0 %v4280
      %4290 = vmatpush1.msra.mxu0 %v4279
      %4291 = vmatprep.subr.mxu0 %v4278
      %4292 = vmatpush1.msra.mxu0 %v4277
      %4293 = vmatprep.subr.mxu0 %v4276
      %4294 = vmatpush1.msra.mxu0 %v4275
      %4295 = vmatprep.subr.mxu0 %v4274
      %4296 = vmatpush1.msra.mxu0 %v4273
      %4297 = vmatprep.subr.mxu0 %v4272
      %4298 = vmatpush1.msra.mxu0 %v4271
      %4299 = vmatprep.subr.mxu0 %v4270
      %4300 = vmatpush1.msra.mxu0 %v4269
      %4301 = vmatprep.subr.mxu0 %v4268
      %4302 = vmatpush1.msra.mxu0 %v4267
      %4303 = vmatprep.subr.mxu0 %v4266
      %4304 = vmatpush1.msra.mxu0 %v4265
      %4305 = vmatprep.subr.mxu0 %v4264
      %4306 = vmatpush1.msra.mxu0 %v4263
      %4307 = vmatprep.subr.mxu0 %v4262
      %4308 = vmatpush1.msra.mxu0 %v4261
      %4309 = vmatprep.subr.mxu0 %v4260
      %4310 = vmatpush1.msra.mxu0 %v4259
      %4311 = vmatprep.subr.mxu0 %v4258
      %4312 = vmatpush1.msra.mxu0 %v4257
      %4313 = vmatprep.subr.mxu0 %v4256
      %4314 = vmatpush1.msra.mxu0 %v4255
      %4315 = vmatprep.subr.mxu0 %v4254
      %4316 = vmatpush1.msra.mxu0 %v4253
      %4317 = vmatprep.subr.mxu0 0.0
      %4318 = vmatpush2.msra.mxu0 0.0
      %4319 = vmatprep.subr.mxu0 0.0
      %4320 = vmatpush2.msra.mxu0 0.0
      %4321 = vmatprep.subr.mxu0 0.0
      %4322 = vmatpush2.msra.mxu0 0.0
      %4323 = vmatprep.subr.mxu0 0.0
      %4324 = vmatpush2.msra.mxu0 0.0
      %4325 = vmatprep.subr.mxu0 0.0
      %4326 = vmatpush2.msra.mxu0 0.0
      %4327 = vmatprep.subr.mxu0 0.0
      %4328 = vmatpush2.msra.mxu0 0.0
      %4329 = vmatprep.subr.mxu0 0.0
      %4330 = vmatpush2.msra.mxu0 0.0
      %4331 = vmatprep.subr.mxu0 0.0
      %4332 = vmatpush2.msra.mxu0 0.0
      %4333 = vmatprep.subr.mxu0 0.0
      %4334 = vmatpush2.msra.mxu0 0.0
      %4335 = vmatprep.subr.mxu0 0.0
      %4336 = vmatpush2.msra.mxu0 0.0
      %4337 = vmatprep.subr.mxu0 0.0
      %4338 = vmatpush2.msra.mxu0 0.0
      %4339 = vmatprep.subr.mxu0 0.0
      %4340 = vmatpush2.msra.mxu0 0.0
      %4341 = vmatprep.subr.mxu0 0.0
      %4342 = vmatpush2.msra.mxu0 0.0
      %4343 = vmatprep.subr.mxu0 0.0
      %4344 = vmatpush2.msra.mxu0 0.0
      %4345 = vmatprep.subr.mxu0 0.0
      %4346 = vmatpush2.msra.mxu0 0.0
      %4347 = vmatprep.subr.mxu0 0.0
      %4348 = vmatpush2.msra.mxu0 0.0
      %4349 = vmatprep.mubr.f32.mxu0 0.0
      %4350 = vmatmul.mubr.f32.gmra.mxu0 %v4205
      %v4351 = vpop.f32.mrf.mxu0
      %v4352 = vadd.f32 0.0, %v4351
      %v4353 = vpop.f32.mrf.mxu0
      %v4354 = vadd.f32 0.0, %v4353
      %4355 = vmatprep.mubr.f32.mxu0 0.0
      %4356 = vmatmul.mubr.f32.gmra.mxu0 %v4206
      %v4357 = vpop.f32.mrf.mxu0
      %v4358 = vadd.f32 0.0, %v4357
      %v4359 = vpop.f32.mrf.mxu0
      %v4360 = vadd.f32 0.0, %v4359
      %4361 = vmatprep.mubr.f32.mxu0 0.0
      %4362 = vmatmul.mubr.f32.gmra.mxu0 %v4207
      %v4363 = vpop.f32.mrf.mxu0
      %v4364 = vadd.f32 0.0, %v4363
      %v4365 = vpop.f32.mrf.mxu0
      %v4366 = vadd.f32 0.0, %v4365
      %4367 = vmatprep.mubr.f32.mxu0 0.0
      %4368 = vmatmul.mubr.f32.gmra.mxu0 %v4208
      %v4369 = vpop.f32.mrf.mxu0
      %v4370 = vadd.f32 0.0, %v4369
      %v4371 = vpop.f32.mrf.mxu0
      %v4372 = vadd.f32 0.0, %v4371
      %4373 = vmatprep.mubr.f32.mxu0 0.0
      %4374 = vmatmul.mubr.f32.gmra.mxu0 %v4209
      %v4375 = vpop.f32.mrf.mxu0
      %v4376 = vadd.f32 0.0, %v4375
      %v4377 = vpop.f32.mrf.mxu0
      %v4378 = vadd.f32 0.0, %v4377
      %4379 = vmatprep.mubr.f32.mxu0 0.0
      %4380 = vmatmul.mubr.f32.gmra.mxu0 %v4210
      %v4381 = vpop.f32.mrf.mxu0
      %v4382 = vadd.f32 0.0, %v4381
      %v4383 = vpop.f32.mrf.mxu0
      %v4384 = vadd.f32 0.0, %v4383
      %4385 = vmatprep.mubr.f32.mxu0 0.0
      %4386 = vmatmul.mubr.f32.gmra.mxu0 %v4211
      %v4387 = vpop.f32.mrf.mxu0
      %v4388 = vadd.f32 0.0, %v4387
      %v4389 = vpop.f32.mrf.mxu0
      %v4390 = vadd.f32 0.0, %v4389
      %4391 = vmatprep.mubr.f32.mxu0 0.0
      %4392 = vmatmul.mubr.f32.gmra.mxu0 %v4212
      %v4393 = vpop.f32.mrf.mxu0
      %v4394 = vadd.f32 0.0, %v4393
      %v4395 = vpop.f32.mrf.mxu0
      %v4396 = vadd.f32 0.0, %v4395
      %4397 = vmatprep.mubr.f32.mxu0 0.0
      %4398 = vmatmul.mubr.f32.gmra.mxu0 %v4213
      %v4399 = vpop.f32.mrf.mxu0
      %v4400 = vadd.f32 0.0, %v4399
      %v4401 = vpop.f32.mrf.mxu0
      %v4402 = vadd.f32 0.0, %v4401
      %4403 = vmatprep.mubr.f32.mxu0 0.0
      %4404 = vmatmul.mubr.f32.gmra.mxu0 %v4214
      %v4405 = vpop.f32.mrf.mxu0
      %v4406 = vadd.f32 0.0, %v4405
      %v4407 = vpop.f32.mrf.mxu0
      %v4408 = vadd.f32 0.0, %v4407
      %4409 = vmatprep.mubr.f32.mxu0 0.0
      %4410 = vmatmul.mubr.f32.gmra.mxu0 %v4215
      %v4411 = vpop.f32.mrf.mxu0
      %v4412 = vadd.f32 0.0, %v4411
      %v4413 = vpop.f32.mrf.mxu0
      %v4414 = vadd.f32 0.0, %v4413
      %4415 = vmatprep.mubr.f32.mxu0 0.0
      %4416 = vmatmul.mubr.f32.gmra.mxu0 %v4216
      %v4417 = vpop.f32.mrf.mxu0
      %v4418 = vadd.f32 0.0, %v4417
      %v4419 = vpop.f32.mrf.mxu0
      %v4420 = vadd.f32 0.0, %v4419
      %4421 = vmatprep.mubr.f32.mxu0 0.0
      %4422 = vmatmul.mubr.f32.gmra.mxu0 %v4217
      %v4423 = vpop.f32.mrf.mxu0
      %v4424 = vadd.f32 0.0, %v4423
      %v4425 = vpop.f32.mrf.mxu0
      %v4426 = vadd.f32 0.0, %v4425
      %4427 = vmatprep.mubr.f32.mxu0 0.0
      %4428 = vmatmul.mubr.f32.gmra.mxu0 %v4218
      %v4429 = vpop.f32.mrf.mxu0
      %v4430 = vadd.f32 0.0, %v4429
      %v4431 = vpop.f32.mrf.mxu0
      %v4432 = vadd.f32 0.0, %v4431
      %4433 = vmatprep.mubr.f32.mxu0 0.0
      %4434 = vmatmul.mubr.f32.gmra.mxu0 %v4219
      %v4435 = vpop.f32.mrf.mxu0
      %v4436 = vadd.f32 0.0, %v4435
      %v4437 = vpop.f32.mrf.mxu0
      %v4438 = vadd.f32 0.0, %v4437
      %4439 = vmatprep.mubr.f32.mxu0 0.0
      %4440 = vmatmul.mubr.f32.gmra.mxu0 %v4220
      %v4441 = vpop.f32.mrf.mxu0
      %v4442 = vadd.f32 0.0, %v4441
      %v4443 = vpop.f32.mrf.mxu0
      %v4444 = vadd.f32 0.0, %v4443
      %4445 = vdwg.mxu0
      %4446 = vmatprep.subr.mxu0 %v4252
      %4447 = vmatpush1.msra.mxu0 %v4251
      %4448 = vmatprep.subr.mxu0 %v4250
      %4449 = vmatpush1.msra.mxu0 %v4249
      %4450 = vmatprep.subr.mxu0 %v4248
      %4451 = vmatpush1.msra.mxu0 %v4247
      %4452 = vmatprep.subr.mxu0 %v4246
      %4453 = vmatpush1.msra.mxu0 %v4245
      %4454 = vmatprep.subr.mxu0 %v4244
      %4455 = vmatpush1.msra.mxu0 %v4243
      %4456 = vmatprep.subr.mxu0 %v4242
      %4457 = vmatpush1.msra.mxu0 %v4241
      %4458 = vmatprep.subr.mxu0 %v4240
      %4459 = vmatpush1.msra.mxu0 %v4239
      %4460 = vmatprep.subr.mxu0 %v4238
      %4461 = vmatpush1.msra.mxu0 %v4237
      %4462 = vmatprep.subr.mxu0 %v4236
      %4463 = vmatpush1.msra.mxu0 %v4235
      %4464 = vmatprep.subr.mxu0 %v4234
      %4465 = vmatpush1.msra.mxu0 %v4233
      %4466 = vmatprep.subr.mxu0 %v4232
      %4467 = vmatpush1.msra.mxu0 %v4231
      %4468 = vmatprep.subr.mxu0 %v4230
      %4469 = vmatpush1.msra.mxu0 %v4229
      %4470 = vmatprep.subr.mxu0 %v4228
      %4471 = vmatpush1.msra.mxu0 %v4227
      %4472 = vmatprep.subr.mxu0 %v4226
      %4473 = vmatpush1.msra.mxu0 %v4225
      %4474 = vmatprep.subr.mxu0 %v4224
      %4475 = vmatpush1.msra.mxu0 %v4223
      %4476 = vmatprep.subr.mxu0 %v4222
      %4477 = vmatpush1.msra.mxu0 %v4221
      %4478 = vmatprep.subr.mxu0 0.0
      %4479 = vmatpush2.msra.mxu0 0.0
      %4480 = vmatprep.subr.mxu0 0.0
      %4481 = vmatpush2.msra.mxu0 0.0
      %4482 = vmatprep.subr.mxu0 0.0
      %4483 = vmatpush2.msra.mxu0 0.0
      %4484 = vmatprep.subr.mxu0 0.0
      %4485 = vmatpush2.msra.mxu0 0.0
      %4486 = vmatprep.subr.mxu0 0.0
      %4487 = vmatpush2.msra.mxu0 0.0
      %4488 = vmatprep.subr.mxu0 0.0
      %4489 = vmatpush2.msra.mxu0 0.0
      %4490 = vmatprep.subr.mxu0 0.0
      %4491 = vmatpush2.msra.mxu0 0.0
      %4492 = vmatprep.subr.mxu0 0.0
      %4493 = vmatpush2.msra.mxu0 0.0
      %4494 = vmatprep.subr.mxu0 0.0
      %4495 = vmatpush2.msra.mxu0 0.0
      %4496 = vmatprep.subr.mxu0 0.0
      %4497 = vmatpush2.msra.mxu0 0.0
      %4498 = vmatprep.subr.mxu0 0.0
      %4499 = vmatpush2.msra.mxu0 0.0
      %4500 = vmatprep.subr.mxu0 0.0
      %4501 = vmatpush2.msra.mxu0 0.0
      %4502 = vmatprep.subr.mxu0 0.0
      %4503 = vmatpush2.msra.mxu0 0.0
      %4504 = vmatprep.subr.mxu0 0.0
      %4505 = vmatpush2.msra.mxu0 0.0
      %4506 = vmatprep.subr.mxu0 0.0
      %4507 = vmatpush2.msra.mxu0 0.0
      %4508 = vmatprep.subr.mxu0 0.0
      %4509 = vmatpush2.msra.mxu0 0.0
      %4510 = vmatprep.mubr.f32.mxu0 0.0
      %4511 = vmatmul.mubr.f32.gmra.mxu0 %v584
      %v4512 = vpop.f32.mrf.mxu0
      %v4513 = vadd.f32 %v4352, %v4512
      %v4514 = vpop.f32.mrf.mxu0
      %v4515 = vadd.f32 %v4354, %v4514
      %4516 = vmatprep.mubr.f32.mxu0 0.0
      %4517 = vmatmul.mubr.f32.gmra.mxu0 %v585
      %v4518 = vpop.f32.mrf.mxu0
      %v4519 = vadd.f32 %v4358, %v4518
      %v4520 = vpop.f32.mrf.mxu0
      %v4521 = vadd.f32 %v4360, %v4520
      %4522 = vmatprep.mubr.f32.mxu0 0.0
      %4523 = vmatmul.mubr.f32.gmra.mxu0 %v586
      %v4524 = vpop.f32.mrf.mxu0
      %v4525 = vadd.f32 %v4364, %v4524
      %v4526 = vpop.f32.mrf.mxu0
      %v4527 = vadd.f32 %v4366, %v4526
      %4528 = vmatprep.mubr.f32.mxu0 0.0
      %4529 = vmatmul.mubr.f32.gmra.mxu0 %v587
      %v4530 = vpop.f32.mrf.mxu0
      %v4531 = vadd.f32 %v4370, %v4530
      %v4532 = vpop.f32.mrf.mxu0
      %v4533 = vadd.f32 %v4372, %v4532
      %4534 = vmatprep.mubr.f32.mxu0 0.0
      %4535 = vmatmul.mubr.f32.gmra.mxu0 %v588
      %v4536 = vpop.f32.mrf.mxu0
      %v4537 = vadd.f32 %v4376, %v4536
      %v4538 = vpop.f32.mrf.mxu0
      %v4539 = vadd.f32 %v4378, %v4538
      %4540 = vmatprep.mubr.f32.mxu0 0.0
      %4541 = vmatmul.mubr.f32.gmra.mxu0 %v589
      %v4542 = vpop.f32.mrf.mxu0
      %v4543 = vadd.f32 %v4382, %v4542
      %v4544 = vpop.f32.mrf.mxu0
      %v4545 = vadd.f32 %v4384, %v4544
      %4546 = vmatprep.mubr.f32.mxu0 0.0
      %4547 = vmatmul.mubr.f32.gmra.mxu0 %v590
      %v4548 = vpop.f32.mrf.mxu0
      %v4549 = vadd.f32 %v4388, %v4548
      %v4550 = vpop.f32.mrf.mxu0
      %v4551 = vadd.f32 %v4390, %v4550
      %4552 = vmatprep.mubr.f32.mxu0 0.0
      %4553 = vmatmul.mubr.f32.gmra.mxu0 %v591
      %v4554 = vpop.f32.mrf.mxu0
      %v4555 = vadd.f32 %v4394, %v4554
      %v4556 = vpop.f32.mrf.mxu0
      %v4557 = vadd.f32 %v4396, %v4556
      %4558 = vmatprep.mubr.f32.mxu0 0.0
      %4559 = vmatmul.mubr.f32.gmra.mxu0 %v592
      %v4560 = vpop.f32.mrf.mxu0
      %v4561 = vadd.f32 %v4400, %v4560
      %v4562 = vpop.f32.mrf.mxu0
      %v4563 = vadd.f32 %v4402, %v4562
      %4564 = vmatprep.mubr.f32.mxu0 0.0
      %4565 = vmatmul.mubr.f32.gmra.mxu0 %v593
      %v4566 = vpop.f32.mrf.mxu0
      %v4567 = vadd.f32 %v4406, %v4566
      %v4568 = vpop.f32.mrf.mxu0
      %v4569 = vadd.f32 %v4408, %v4568
      %4570 = vmatprep.mubr.f32.mxu0 0.0
      %4571 = vmatmul.mubr.f32.gmra.mxu0 %v594
      %v4572 = vpop.f32.mrf.mxu0
      %v4573 = vadd.f32 %v4412, %v4572
      %v4574 = vpop.f32.mrf.mxu0
      %v4575 = vadd.f32 %v4414, %v4574
      %4576 = vmatprep.mubr.f32.mxu0 0.0
      %4577 = vmatmul.mubr.f32.gmra.mxu0 %v595
      %v4578 = vpop.f32.mrf.mxu0
      %v4579 = vadd.f32 %v4418, %v4578
      %v4580 = vpop.f32.mrf.mxu0
      %v4581 = vadd.f32 %v4420, %v4580
      %4582 = vmatprep.mubr.f32.mxu0 0.0
      %4583 = vmatmul.mubr.f32.gmra.mxu0 %v596
      %v4584 = vpop.f32.mrf.mxu0
      %v4585 = vadd.f32 %v4424, %v4584
      %v4586 = vpop.f32.mrf.mxu0
      %v4587 = vadd.f32 %v4426, %v4586
      %4588 = vmatprep.mubr.f32.mxu0 0.0
      %4589 = vmatmul.mubr.f32.gmra.mxu0 %v597
      %v4590 = vpop.f32.mrf.mxu0
      %v4591 = vadd.f32 %v4430, %v4590
      %v4592 = vpop.f32.mrf.mxu0
      %v4593 = vadd.f32 %v4432, %v4592
      %4594 = vmatprep.mubr.f32.mxu0 0.0
      %4595 = vmatmul.mubr.f32.gmra.mxu0 %v598
      %v4596 = vpop.f32.mrf.mxu0
      %v4597 = vadd.f32 %v4436, %v4596
      %v4598 = vpop.f32.mrf.mxu0
      %v4599 = vadd.f32 %v4438, %v4598
      %4600 = vmatprep.mubr.f32.mxu0 0.0
      %4601 = vmatmul.mubr.f32.gmra.mxu0 %v599
      %v4602 = vpop.f32.mrf.mxu0
      %v4603 = vadd.f32 %v4442, %v4602
      %v4604 = vpop.f32.mrf.mxu0
      %v4605 = vadd.f32 %v4444, %v4604
      %4606 = vdwg.mxu0
      %v4607 = vld [vmem:[%s12] sm:$0x3]
      %v4609 = vlaneseq
      %v4610 = vshrl.u32 %v4609, 7
      %v4611 = vsub.s32 0, %v4610
      %v4612 = vrot.slane %v4607, %v4611
      %v4613 = vlaneseq
      %v4614 = vshrl.u32 %v4613, 7
      %v4615 = vsub.s32 1, %v4614
      %v4616 = vrot.slane %v4607, %v4615
      %v4619 = vadd.f32 %v4513, %v4612
      %v4620 = vadd.f32 %v4515, %v4616
      %v4621 = vadd.f32 %v4519, %v4612
      %v4622 = vadd.f32 %v4521, %v4616
      %v4623 = vadd.f32 %v4525, %v4612
      %v4624 = vadd.f32 %v4527, %v4616
      %v4625 = vadd.f32 %v4531, %v4612
      %v4626 = vadd.f32 %v4533, %v4616
      %v4627 = vadd.f32 %v4537, %v4612
      %v4628 = vadd.f32 %v4539, %v4616
      %v4629 = vadd.f32 %v4543, %v4612
      %v4630 = vadd.f32 %v4545, %v4616
      %v4631 = vadd.f32 %v4549, %v4612
      %v4632 = vadd.f32 %v4551, %v4616
      %v4633 = vadd.f32 %v4555, %v4612
      %v4634 = vadd.f32 %v4557, %v4616
      %v4635 = vadd.f32 %v4561, %v4612
      %v4636 = vadd.f32 %v4563, %v4616
      %v4637 = vadd.f32 %v4567, %v4612
      %v4638 = vadd.f32 %v4569, %v4616
      %v4639 = vadd.f32 %v4573, %v4612
      %v4640 = vadd.f32 %v4575, %v4616
      %v4641 = vadd.f32 %v4579, %v4612
      %v4642 = vadd.f32 %v4581, %v4616
      %v4643 = vadd.f32 %v4585, %v4612
      %v4644 = vadd.f32 %v4587, %v4616
      %v4645 = vadd.f32 %v4591, %v4612
      %v4646 = vadd.f32 %v4593, %v4616
      %v4647 = vadd.f32 %v4597, %v4612
      %v4648 = vadd.f32 %v4599, %v4616
      %v4649 = vadd.f32 %v4603, %v4612
      %v4650 = vadd.f32 %v4605, %v4616
      %4651 = vst [vmem:[%s527] sm:$0xff] %v4619
      %4652 = vst [vmem:[%s527 + $0x8] sm:$0xff] %v4620
      %4653 = vst [vmem:[%s527 + $0x10] sm:$0xff] %v4621
      %4654 = vst [vmem:[%s527 + $0x18] sm:$0xff] %v4622
      %4655 = vst [vmem:[%s527 + $0x20] sm:$0xff] %v4623
      %4656 = vst [vmem:[%s527 + $0x28] sm:$0xff] %v4624
      %4657 = vst [vmem:[%s527 + $0x30] sm:$0xff] %v4625
      %4658 = vst [vmem:[%s527 + $0x38] sm:$0xff] %v4626
      %4659 = vst [vmem:[%s527 + $0x40] sm:$0xff] %v4627
      %4660 = vst [vmem:[%s527 + $0x48] sm:$0xff] %v4628
      %4661 = vst [vmem:[%s527 + $0x50] sm:$0xff] %v4629
      %4662 = vst [vmem:[%s527 + $0x58] sm:$0xff] %v4630
      %4663 = vst [vmem:[%s527 + $0x60] sm:$0xff] %v4631
      %4664 = vst [vmem:[%s527 + $0x68] sm:$0xff] %v4632
      %4665 = vst [vmem:[%s527 + $0x70] sm:$0xff] %v4633
      %4666 = vst [vmem:[%s527 + $0x78] sm:$0xff] %v4634
      %4667 = vst [vmem:[%s527 + $0x80] sm:$0xff] %v4635
      %4668 = vst [vmem:[%s527 + $0x88] sm:$0xff] %v4636
      %4669 = vst [vmem:[%s527 + $0x90] sm:$0xff] %v4637
      %4670 = vst [vmem:[%s527 + $0x98] sm:$0xff] %v4638
      %4671 = vst [vmem:[%s527 + $0xa0] sm:$0xff] %v4639
      %4672 = vst [vmem:[%s527 + $0xa8] sm:$0xff] %v4640
      %4673 = vst [vmem:[%s527 + $0xb0] sm:$0xff] %v4641
      %4674 = vst [vmem:[%s527 + $0xb8] sm:$0xff] %v4642
      %4675 = vst [vmem:[%s527 + $0xc0] sm:$0xff] %v4643
      %4676 = vst [vmem:[%s527 + $0xc8] sm:$0xff] %v4644
      %4677 = vst [vmem:[%s527 + $0xd0] sm:$0xff] %v4645
      %4678 = vst [vmem:[%s527 + $0xd8] sm:$0xff] %v4646
      %4679 = vst [vmem:[%s527 + $0xe0] sm:$0xff] %v4647
      %4680 = vst [vmem:[%s527 + $0xe8] sm:$0xff] %v4648
      %4681 = vst [vmem:[%s527 + $0xf0] sm:$0xff] %v4649
      %4682 = vst [vmem:[%s527 + $0xf8] sm:$0xff] %v4650
      %v4683 = vadd.f32 %v4619, %v4621
      %v4684 = vadd.f32 %v4683, %v4623
      %v4685 = vadd.f32 %v4684, %v4625
      %v4686 = vadd.f32 %v4685, %v4627
      %v4687 = vadd.f32 %v4686, %v4629
      %v4688 = vadd.f32 %v4687, %v4631
      %v4689 = vadd.f32 %v4688, %v4633
      %v4690 = vadd.f32 %v4689, %v4635
      %v4691 = vadd.f32 %v4690, %v4637
      %v4692 = vadd.f32 %v4691, %v4639
      %v4693 = vadd.f32 %v4692, %v4641
      %v4694 = vadd.f32 %v4693, %v4643
      %v4695 = vadd.f32 %v4694, %v4645
      %v4696 = vadd.f32 %v4695, %v4647
      %v4697 = vadd.f32 %v4696, %v4649
      %v4698 = vrot.slane %v4697, 4
      %v4699 = vadd.f32 %v4697, %v4698
      %v4700 = vrot.slane %v4699, 2
      %v4701 = vadd.f32 %v4699, %v4700
      %v4702 = vrot.slane %v4701, 1
      %v4703 = vadd.f32 %v4701, %v4702
      %v4704 = vadd.f32 %v4620, %v4622
      %v4705 = vadd.f32 %v4704, %v4624
      %v4706 = vadd.f32 %v4705, %v4626
      %v4707 = vadd.f32 %v4706, %v4628
      %v4708 = vadd.f32 %v4707, %v4630
      %v4709 = vadd.f32 %v4708, %v4632
      %v4710 = vadd.f32 %v4709, %v4634
      %v4711 = vadd.f32 %v4710, %v4636
      %v4712 = vadd.f32 %v4711, %v4638
      %v4713 = vadd.f32 %v4712, %v4640
      %v4714 = vadd.f32 %v4713, %v4642
      %v4715 = vadd.f32 %v4714, %v4644
      %v4716 = vadd.f32 %v4715, %v4646
      %v4717 = vadd.f32 %v4716, %v4648
      %v4718 = vadd.f32 %v4717, %v4650
      %v4719 = vrot.slane %v4718, 4
      %v4720 = vadd.f32 %v4718, %v4719
      %v4721 = vrot.slane %v4720, 2
      %v4722 = vadd.f32 %v4720, %v4721
      %v4723 = vrot.slane %v4722, 1
      %v4724 = vadd.f32 %v4722, %v4723
      %v4727 = vcombine.low %v4703, %v4724
      %v4729 = vunpack.c.l.s4 1966171168
      %v4730 = vunpack.c.0.s8 %v4729
      %v4731 = vlaneseq
      %v4732 = vshrl.u32 %v4731, 7
      %v4733 = vsub.s32 %v4730, %v4732
      %v4734 = vrot.slane %v4727, %v4733
      %v4736 = vunpack.c.l.s4 1966171168
      %v4737 = vunpack.c.0.s8 %v4736
      %v4738 = vlaneseq
      %v4739 = vshrl.u32 %v4738, 7
      %v4740 = vsub.s32 %v4737, %v4739
      %v4741 = vrot.slane %v4734, %v4740
      %v4743 = vlaneseq
      %vm4744 = vcmp.ge.s32.totalorder %v4743, 0
      %vm4745 = vcmp.lt.s32.totalorder %v4743, 256
      %vm4746 = vmand %vm4744, %vm4745
      %4747 = vst.msk [vmem:[%s531] sm:$0x3] %vm4746, %v4741
      %v4748 = vmul.f32 %v4619, %v4619
      %v4749 = vmul.f32 %v4620, %v4620
      %v4750 = vmul.f32 %v4621, %v4621
      %v4751 = vmul.f32 %v4622, %v4622
      %v4752 = vmul.f32 %v4623, %v4623
      %v4753 = vmul.f32 %v4624, %v4624
      %v4754 = vmul.f32 %v4625, %v4625
      %v4755 = vmul.f32 %v4626, %v4626
      %v4756 = vmul.f32 %v4627, %v4627
      %v4757 = vmul.f32 %v4628, %v4628
      %v4758 = vmul.f32 %v4629, %v4629
      %v4759 = vmul.f32 %v4630, %v4630
      %v4760 = vmul.f32 %v4631, %v4631
      %v4761 = vmul.f32 %v4632, %v4632
      %v4762 = vmul.f32 %v4633, %v4633
      %v4763 = vmul.f32 %v4634, %v4634
      %v4764 = vmul.f32 %v4635, %v4635
      %v4765 = vmul.f32 %v4636, %v4636
      %v4766 = vmul.f32 %v4637, %v4637
      %v4767 = vmul.f32 %v4638, %v4638
      %v4768 = vmul.f32 %v4639, %v4639
      %v4769 = vmul.f32 %v4640, %v4640
      %v4770 = vmul.f32 %v4641, %v4641
      %v4771 = vmul.f32 %v4642, %v4642
      %v4772 = vmul.f32 %v4643, %v4643
      %v4773 = vmul.f32 %v4644, %v4644
      %v4774 = vmul.f32 %v4645, %v4645
      %v4775 = vmul.f32 %v4646, %v4646
      %v4776 = vmul.f32 %v4647, %v4647
      %v4777 = vmul.f32 %v4648, %v4648
      %v4778 = vmul.f32 %v4649, %v4649
      %v4779 = vmul.f32 %v4650, %v4650
      %v4780 = vadd.f32 %v4748, %v4750
      %v4781 = vadd.f32 %v4780, %v4752
      %v4782 = vadd.f32 %v4781, %v4754
      %v4783 = vadd.f32 %v4782, %v4756
      %v4784 = vadd.f32 %v4783, %v4758
      %v4785 = vadd.f32 %v4784, %v4760
      %v4786 = vadd.f32 %v4785, %v4762
      %v4787 = vadd.f32 %v4786, %v4764
      %v4788 = vadd.f32 %v4787, %v4766
      %v4789 = vadd.f32 %v4788, %v4768
      %v4790 = vadd.f32 %v4789, %v4770
      %v4791 = vadd.f32 %v4790, %v4772
      %v4792 = vadd.f32 %v4791, %v4774
      %v4793 = vadd.f32 %v4792, %v4776
      %v4794 = vadd.f32 %v4793, %v4778
      %v4795 = vrot.slane %v4794, 4
      %v4796 = vadd.f32 %v4794, %v4795
      %v4797 = vrot.slane %v4796, 2
      %v4798 = vadd.f32 %v4796, %v4797
      %v4799 = vrot.slane %v4798, 1
      %v4800 = vadd.f32 %v4798, %v4799
      %v4801 = vadd.f32 %v4749, %v4751
      %v4802 = vadd.f32 %v4801, %v4753
      %v4803 = vadd.f32 %v4802, %v4755
      %v4804 = vadd.f32 %v4803, %v4757
      %v4805 = vadd.f32 %v4804, %v4759
      %v4806 = vadd.f32 %v4805, %v4761
      %v4807 = vadd.f32 %v4806, %v4763
      %v4808 = vadd.f32 %v4807, %v4765
      %v4809 = vadd.f32 %v4808, %v4767
      %v4810 = vadd.f32 %v4809, %v4769
      %v4811 = vadd.f32 %v4810, %v4771
      %v4812 = vadd.f32 %v4811, %v4773
      %v4813 = vadd.f32 %v4812, %v4775
      %v4814 = vadd.f32 %v4813, %v4777
      %v4815 = vadd.f32 %v4814, %v4779
      %v4816 = vrot.slane %v4815, 4
      %v4817 = vadd.f32 %v4815, %v4816
      %v4818 = vrot.slane %v4817, 2
      %v4819 = vadd.f32 %v4817, %v4818
      %v4820 = vrot.slane %v4819, 1
      %v4821 = vadd.f32 %v4819, %v4820
      %v4824 = vcombine.low %v4800, %v4821
      %v4826 = vunpack.c.l.s4 1966171168
      %v4827 = vunpack.c.0.s8 %v4826
      %v4828 = vlaneseq
      %v4829 = vshrl.u32 %v4828, 7
      %v4830 = vsub.s32 %v4827, %v4829
      %v4831 = vrot.slane %v4824, %v4830
      %v4833 = vunpack.c.l.s4 1966171168
      %v4834 = vunpack.c.0.s8 %v4833
      %v4835 = vlaneseq
      %v4836 = vshrl.u32 %v4835, 7
      %v4837 = vsub.s32 %v4834, %v4836
      %v4838 = vrot.slane %v4831, %v4837
      %4840 = vst.msk [vmem:[%s535] sm:$0x3] %vm4746, %v4838
      %p4841 = scmp.lt.s32.totalorder %s27, 1
      %s4842 = scalar_select %p4841, %s27, 1
      %s4843 = smul.addr %s4842, 32
      %s4844 = smul.addr %s4843, 8
      %s4845 = scalar_lea.vmem %s13, %s4844
      %p4846 = scmp.lt.s32.totalorder %s27, 1
      %s4847 = scalar_select %p4846, %s27, 1
      %s4848 = smul.addr %s4847, 2
      %s4849 = scalar_lea.vmem %s14, %s4848
      %p4850 = scmp.lt.s32.totalorder %s27, 1
      %s4851 = scalar_select %p4850, %s27, 1
      %s4852 = smul.addr %s4851, 2
      %s4853 = scalar_lea.vmem %s15, %s4852
      // Predicated region
      $region73: #{attentional_propagation_forward.2} parent=71 // pred_check
        %p4854 = pneg %p328
      $region74: #{attentional_propagation_forward.2} parent=71 // pred_check_branch
        %4856 = sbr.rel (%p4854) target = $region76
      $region75: #{attentional_propagation_forward.2} parent=71 // pred_region
        _
      $region76: #{attentional_propagation_forward.2} parent=71 // pred_fallthru
        _
      // Predicated region
      $region77: #{attentional_propagation_forward.2} parent=71 // pred_check
        %p4857 = pneg %p354
      $region78: #{attentional_propagation_forward.2} parent=71 // pred_check_branch
        %4859 = sbr.rel (%p4857) target = $region80
      $region79: #{attentional_propagation_forward.2} parent=71 // pred_region
        _
      $region80: #{attentional_propagation_forward.2} parent=71 // pred_fallthru
        _
      // Predicated region
      $region81: #{attentional_propagation_forward.2} parent=71 // pred_check
        %p4860 = pneg %p380
      $region82: #{attentional_propagation_forward.2} parent=71 // pred_check_branch
        %4862 = sbr.rel (%p4860) target = $region84
      $region83: #{attentional_propagation_forward.2} parent=71 // pred_region
        _
      $region84: #{attentional_propagation_forward.2} parent=71 // pred_fallthru
        _
    $region72: #{attentional_propagation_forward.2} parent=5 // pred_fallthru
      _
    %p4863 = scmp.le.s32.totalorder 2, %s22
    // Predicated region
    $region85: #{attentional_propagation_forward.2} parent=5 // pred_check
      %p4864 = pneg %p4863
    $region86: #{attentional_propagation_forward.2} parent=5 // pred_check_branch
      %4866 = sbr.rel (%p4864) target = $region88
    $region87: #{attentional_propagation_forward.2} parent=5 // pred_region
      %s4867 = ssub.s32 %s22, 2
      // Predicated region
      $region89: #{attentional_propagation_forward.2} parent=87 // pred_check
        %p4868 = pneg %p334
      $region90: #{attentional_propagation_forward.2} parent=87 // pred_check_branch
        %4870 = sbr.rel (%p4868) target = $region92
      $region91: #{attentional_propagation_forward.2} parent=87 // pred_region
        %p4871 = scmp.lt.s32.totalorder %s28, 1
        %s4872 = scalar_select %p4871, %s28, 1
        %s4873 = smul.addr %s4872, 32
        %s4874 = smul.addr %s4873, 8
        %s4875 = scalar_lea.vmem %s13, %s4874
      $region92: #{attentional_propagation_forward.2} parent=87 // pred_fallthru
        _
      // Predicated region
      $region93: #{attentional_propagation_forward.2} parent=87 // pred_check
        %p4876 = pneg %p360
      $region94: #{attentional_propagation_forward.2} parent=87 // pred_check_branch
        %4878 = sbr.rel (%p4876) target = $region96
      $region95: #{attentional_propagation_forward.2} parent=87 // pred_region
        %p4879 = scmp.lt.s32.totalorder %s28, 1
        %s4880 = scalar_select %p4879, %s28, 1
        %s4881 = smul.addr %s4880, 2
        %s4882 = scalar_lea.vmem %s14, %s4881
      $region96: #{attentional_propagation_forward.2} parent=87 // pred_fallthru
        _
      // Predicated region
      $region97: #{attentional_propagation_forward.2} parent=87 // pred_check
        %p4883 = pneg %p386
      $region98: #{attentional_propagation_forward.2} parent=87 // pred_check_branch
        %4885 = sbr.rel (%p4883) target = $region100
      $region99: #{attentional_propagation_forward.2} parent=87 // pred_region
        %p4886 = scmp.lt.s32.totalorder %s28, 1
        %s4887 = scalar_select %p4886, %s28, 1
        %s4888 = smul.addr %s4887, 2
        %s4889 = scalar_lea.vmem %s15, %s4888
      $region100: #{attentional_propagation_forward.2} parent=87 // pred_fallthru
        _
    $region88: #{attentional_propagation_forward.2} parent=5 // pred_fallthru
      _
  $region6: #{attentional_propagation_forward.2} parent=0 // loop_footer
    %s26 = sadd.s32 1, %s22
  $region7: #{attentional_propagation_forward.2} parent=0 // loop_footer_branch
    %21 = sbr.rel target = $region3
  $region8: #{attentional_propagation_forward.2} parent=0 // loop_exit
    _

</llo_original>
